<compile_context>
chip_gen: v7x
topology: tpu7x:2x2x1
jax: 0.10.0
libtpu: 0.0.40
codegen_flags: <defaults>
</compile_context>

<pallas_src>
import functools
import jax
import jax.numpy as jnp
from jax.experimental import pallas as pl
from jax.experimental.pallas import tpu as pltpu


# ----------------------------------------------------------------------------
# VMEM budget (generation-aware; v7x only has 64 MiB per TensorCore)
# ----------------------------------------------------------------------------

def _default_vmem_limit():
    cap = 64 * 1024 * 1024
    try:
        cap = int(pltpu.get_tpu_info().vmem_capacity_bytes)
    except Exception:
        pass
    return min((cap * 3) // 4, 96 * 1024 * 1024)


_VMEM_LIMIT = _default_vmem_limit()           # scoped limit handed to Mosaic
_VMEM_BUDGET = (2 * _VMEM_LIMIT) // 3         # soft budget for tile decisions


# ----------------------------------------------------------------------------
# K-tiled matmul + fused affine (1x1 convs, im2col convs, fc layers)
# ----------------------------------------------------------------------------

def _mm_affine_kernel(a_ref, b_ref, scale_ref, shift_ref, *rest, relu, has_res):
    """grid = (Mi, Nj, Kk); K is the trailing 'arbitrary' reduction axis."""
    if has_res:
        res_ref, o_ref, acc_ref = rest
    else:
        res_ref = None
        o_ref, acc_ref = rest

    @pl.when(pl.program_id(2) == 0)
    def _():
        acc_ref[...] = jnp.zeros_like(acc_ref)

    acc_ref[...] += jnp.dot(a_ref[...], b_ref[...],
                            preferred_element_type=jnp.float32)

    @pl.when(pl.program_id(2) == pl.num_programs(2) - 1)
    def _():
        out = acc_ref[...] * scale_ref[...] + shift_ref[...]
        if has_res:
            out = out + res_ref[...].astype(jnp.float32)
        if relu:
            out = jnp.maximum(out, 0.0)
        o_ref[...] = out.astype(o_ref.dtype)


def _mm_tiles(M, K, N, out_bytes, has_res):
    """Pick (tm, tn, tk) under the VMEM budget.

    - tm widened for narrow-N layers (amortizes the ~0.35us per-grid-step cost).
    - tn split in two when there is only one M tile so a 'parallel' axis has
      >=2 blocks (keeps both v7x TensorCores busy; harmless on 1-TC chips).
    - K untiled whenever it fits (no accumulator revisits); otherwise the
      largest 128-multiple divisor of K that fits; otherwise untiled anyway
      (always correct, possibly over the soft budget).
    """
    if N <= 128:
        tm = 1024
    elif N <= 256:
        tm = 512
    else:
        tm = 256
    tm = min(tm, M)
    tn = N
    if pl.cdiv(M, tm) < 2 and N >= 256 and (N // 2) % 128 == 0:
        tn = N // 2

    def fits(tm_, tk_):
        b = 2 * (tm_ * tk_ + tk_ * tn) * 2        # double-buffered bf16 A/B
        b += tm_ * tn * 4                         # f32 accumulator scratch
        b += 2 * tm_ * tn * out_bytes             # double-buffered output
        if has_res:
            b += 2 * tm_ * tn * 2                 # double-buffered residual
        return b <= _VMEM_BUDGET

    k_cands = [K] + [t for t in (2048, 1536, 1024, 768, 512, 384, 256, 128)
                     if t < K and K % t == 0]
    while True:
        tk = next((c for c in k_cands if fits(tm, c)), None)
        if tk is not None:
            return tm, tn, tk
        if tm > 128 and tm % 2 == 0:
            tm //= 2
        else:
            return tm, tn, K


def matmul_affine(a, b, scale, shift, relu=False, residual=None,
                  out_dtype=jnp.bfloat16):
    """out = relu_opt((a @ b) * scale + shift [+ residual]).

    a:(M,K), b:(K,N) are fed to the MXU as bf16 (weights are pre-cast at init,
    so the astype below is a no-op for them); accumulation in f32; per-channel
    affine (folded BN / bias) and optional residual+ReLU fused in the epilogue.
    """
    M, K = a.shape
    K2, N = b.shape
    assert K == K2
    a = a.astype(jnp.bfloat16)
    b = b.astype(jnp.bfloat16)
    scale = scale.reshape(1, N).astype(jnp.float32)
    shift = shift.reshape(1, N).astype(jnp.float32)

    has_res = residual is not None
    tm, tn, tk = _mm_tiles(M, K, N, jnp.dtype(out_dtype).itemsize, has_res)
    grid = (pl.cdiv(M, tm), pl.cdiv(N, tn), pl.cdiv(K, tk))

    in_specs = [
        pl.BlockSpec((tm, tk), lambda i, j, k: (i, k)),
        pl.BlockSpec((tk, tn), lambda i, j, k: (k, j)),
        pl.BlockSpec((1, tn), lambda i, j, k: (0, j)),
        pl.BlockSpec((1, tn), lambda i, j, k: (0, j)),
    ]
    args = [a, b, scale, shift]
    if has_res:
        assert residual.shape == (M, N)
        in_specs.append(pl.BlockSpec((tm, tn), lambda i, j, k: (i, j)))
        args.append(residual.astype(jnp.bfloat16))

    bytes_accessed = (M * K + K * N) * 2 + M * N * jnp.dtype(out_dtype).itemsize
    if has_res:
        bytes_accessed += M * N * 2

    return pl.pallas_call(
        functools.partial(_mm_affine_kernel, relu=relu, has_res=has_res),
        out_shape=jax.ShapeDtypeStruct((M, N), out_dtype),
        grid=grid,
        in_specs=in_specs,
        out_specs=pl.BlockSpec((tm, tn), lambda i, j, k: (i, j)),
        scratch_shapes=[pltpu.VMEM((tm, tn), jnp.float32)],
        compiler_params=pltpu.CompilerParams(
            dimension_semantics=("parallel", "parallel", "arbitrary"),
            vmem_limit_bytes=_VMEM_LIMIT,
        ),
        cost_estimate=pl.CostEstimate(
            flops=2 * M * K * N,
            transcendentals=0,
            bytes_accessed=int(bytes_accessed),
        ),
    )(*args)


# ----------------------------------------------------------------------------
# Direct 3x3 / stride-1 / pad-1 conv (no im2col HBM expansion)
# ----------------------------------------------------------------------------

def _conv3x3_kernel(x_ref, w_ref, scale_ref, shift_ref, *rest,
                    relu, has_res, wp, cin):
    if has_res:
        res_ref, o_ref = rest
    else:
        res_ref = None
        (o_ref,) = rest

    xf = x_ref[0]                         # ((Ho+3)*Wp, Cin), row-major padded
    R = o_ref.shape[1]                    # Ho * Wp accumulator rows
    cout = o_ref.shape[2]

    acc = jnp.zeros((R, cout), jnp.float32)
    for dy in range(3):
        for dx in range(3):
            off = dy * wp + dx            # static row offset of this tap
            t = dy * 3 + dx
            acc = acc + jnp.dot(xf[off:off + R, :],
                                w_ref[t * cin:(t + 1) * cin, :],
                                preferred_element_type=jnp.float32)

    out = acc * scale_ref[...] + shift_ref[...]
    if has_res:
        out = out + res_ref[0].astype(jnp.float32)
    if relu:
        out = jnp.maximum(out, 0.0)
    o_ref[0] = out.astype(o_ref.dtype)


def _direct_conv_fits(H, W, Cin, Cout, has_res):
    Wp = W + 2
    rows_in = (H + 3) * Wp
    R = H * Wp
    buf = 2 * rows_in * Cin * 2           # double-buffered input plane
    buf += 2 * R * Cout * 2               # double-buffered output block
    buf += 2 * 9 * Cin * Cout * 2         # double-buffered weight
    buf += R * Cout * 4                   # f32 accumulator value
    buf += 2 * R * Cin * 2                # live tap-slice temporaries
    if has_res:
        buf += 2 * R * Cout * 2
    return buf <= _VMEM_BUDGET


def conv3x3_s1_direct(x, w9, scale, shift, relu=False, residual=None):
    """Direct 3x3/stride-1/pad-1 conv with fused BN affine, residual, ReLU.

    The padded activation is read once per image; the 9 taps are static
    row-slices of the flattened padded plane (accumulator rows kept at the
    padded width Wp = W+2; the 2 junk columns per row are trimmed afterwards).
    """
    N, H, W, Cin = x.shape
    K9, Cout = w9.shape
    assert K9 == 9 * Cin
    Ho, Wo = H, W
    Wp = W + 2
    R = Ho * Wp
    # H padded by (1, 2): the extra bottom row keeps the largest tap slice
    # (offset 2*Wp+2, length R) in range.
    xp = jnp.pad(x.astype(jnp.bfloat16), ((0, 0), (1, 2), (1, 1), (0, 0)))
    xf = xp.reshape(N, (Ho + 3) * Wp, Cin)          # free row-major reshape
    scale = scale.reshape(1, Cout).astype(jnp.float32)
    shift = shift.reshape(1, Cout).astype(jnp.float32)

    in_specs = [
        pl.BlockSpec((1, (Ho + 3) * Wp, Cin), lambda n: (n, 0, 0)),
        pl.BlockSpec((K9, Cout), lambda n: (0, 0)),
        pl.BlockSpec((1, Cout), lambda n: (0, 0)),
        pl.BlockSpec((1, Cout), lambda n: (0, 0)),
    ]
    args = [xf, w9, scale, shift]
    has_res = residual is not None
    if has_res:
        assert residual.shape == (N, Ho, Wo, Cout)
        resw = jnp.pad(residual.astype(jnp.bfloat16),
                       ((0, 0), (0, 0), (0, Wp - Wo), (0, 0)))
        in_specs.append(pl.BlockSpec((1, R, Cout), lambda n: (n, 0, 0)))
        args.append(resw.reshape(N, R, Cout))

    flops = 2 * N * R * 9 * Cin * Cout
    bytes_accessed = xf.size * 2 + w9.size * 2 + N * R * Cout * 2
    if has_res:
        bytes_accessed += N * R * Cout * 2

    out_wide = pl.pallas_call(
        functools.partial(_conv3x3_kernel, relu=relu, has_res=has_res,
                          wp=Wp, cin=Cin),
        out_shape=jax.ShapeDtypeStruct((N, R, Cout), jnp.bfloat16),
        grid=(N,),
        in_specs=in_specs,
        out_specs=pl.BlockSpec((1, R, Cout), lambda n: (n, 0, 0)),
        compiler_params=pltpu.CompilerParams(
            dimension_semantics=("parallel",),
            vmem_limit_bytes=_VMEM_LIMIT,
        ),
        cost_estimate=pl.CostEstimate(flops=flops, transcendentals=0,
                                      bytes_accessed=int(bytes_accessed)),
    )(*args)
    # Trim the 2 junk (right-padding) columns per output row.
    return out_wide.reshape(N, Ho, Wp, Cout)[:, :, :Wo, :]


# ----------------------------------------------------------------------------
# MaxPool 3x3 / stride 2 / pad 1
# ----------------------------------------------------------------------------

def _max_taps_kernel(*refs):
    """Unrolled VPU max over 9 tap inputs (lane dim stays dense)."""
    o_ref = refs[-1]
    m = refs[0][...]
    for r in refs[1:-1]:
        m = jnp.maximum(m, r[...])
    o_ref[...] = m


def maxpool_3x3_s2(x):
    """MaxPool2d(kernel=3, stride=2, padding=1) on an NHWC tensor."""
    N, H, W, C = x.shape
    k, s, pad = 3, 2, 1
    Ho = (H + 2 * pad - k) // s + 1
    Wo = (W + 2 * pad - k) // s + 1
    xp = jnp.pad(x, ((0, 0), (pad, pad), (pad, pad), (0, 0)),
                 constant_values=-jnp.inf)
    taps = []
    for dy in range(k):
        for dx in range(k):
            v = xp[:, dy:dy + s * (Ho - 1) + 1:s,
                   dx:dx + s * (Wo - 1) + 1:s, :]
            taps.append(v.reshape(N * Ho, Wo * C))
    rows, lanes = N * Ho, Wo * C
    tr = 32
    while tr > 8 and 10 * tr * lanes * 2 * 2 > _VMEM_BUDGET:
        tr //= 2
    tr = min(tr, rows)
    spec = pl.BlockSpec((tr, lanes), lambda i: (i, 0))
    out = pl.pallas_call(
        _max_taps_kernel,
        out_shape=jax.ShapeDtypeStruct((rows, lanes), x.dtype),
        grid=(pl.cdiv(rows, tr),),
        in_specs=[spec] * 9,
        out_specs=spec,
        compiler_params=pltpu.CompilerParams(
            dimension_semantics=("parallel",),
            vmem_limit_bytes=_VMEM_LIMIT,
        ),
    )(*taps)
    return out.reshape(N, Ho, Wo, C)


# ----------------------------------------------------------------------------
# Conv / block wrappers
# ----------------------------------------------------------------------------

def im2col(x, kh, kw, stride, pad):
    N, H, W, C = x.shape
    Ho = (H + 2 * pad - kh) // stride + 1
    Wo = (W + 2 * pad - kw) // stride + 1
    xp = jnp.pad(x, ((0, 0), (pad, pad), (pad, pad), (0, 0))) if pad else x
    cols = []
    for dy in range(kh):
        for dx in range(kw):
            cols.append(xp[:, dy:dy + stride * (Ho - 1) + 1:stride,
                           dx:dx + stride * (Wo - 1) + 1:stride, :])
    patches = jnp.stack(cols, axis=3)              # (N, Ho, Wo, kh*kw, C)
    cols2d = patches.reshape(N * Ho * Wo, kh * kw * C).astype(jnp.bfloat16)
    return cols2d, (N, Ho, Wo)


def conv_affine(x, p, stride, pad, relu=False, residual=None):
    """x: NHWC bf16; p: {'w': (kh*kw*Cin, Cout) bf16, 'kh','kw','scale','shift'}."""
    kh, kw = p['kh'], p['kw']
    w, scale, shift = p['w'], p['scale'], p['shift']
    Cout = w.shape[1]
    N, H, W, Cin = x.shape

    if kh == 1 and kw == 1:
        xs = x[:, ::stride, ::stride, :] if stride > 1 else x
        _, Ho, Wo, _ = xs.shape
        res2 = None if residual is None else residual.reshape(N * Ho * Wo, Cout)
        out = matmul_affine(xs.reshape(N * Ho * Wo, Cin), w, scale, shift,
                            relu=relu, residual=res2)
        return out.reshape(N, Ho, Wo, Cout)

    if (kh == 3 and kw == 3 and stride == 1 and pad == 1
            and _direct_conv_fits(H, W, Cin, Cout, residual is not None)):
        return conv3x3_s1_direct(x, w, scale, shift, relu=relu,
                                 residual=residual)

    # TODO(synk): stride-2 3x3 convs and the 7x7 stem still go through an
    # im2col patch expansion in HBM; a phase-split (space-to-depth) direct
    # path would remove that too.
    cols, (N2, Ho, Wo) = im2col(x, kh, kw, stride, pad)
    res2 = None if residual is None else residual.reshape(N2 * Ho * Wo, Cout)
    out = matmul_affine(cols, w, scale, shift, relu=relu, residual=res2)
    return out.reshape(N2, Ho, Wo, Cout)


def basic_block(x, p):
    stride = p['stride']
    out = conv_affine(x, p['conv1'], stride=stride, pad=1, relu=True)
    if 'down' in p:
        identity = conv_affine(x, p['down'], stride=stride, pad=0, relu=False)
    else:
        identity = x
    # conv2 + BN + residual add + ReLU fused into the conv epilogue.
    out = conv_affine(out, p['conv2'], stride=1, pad=1, relu=True,
                      residual=identity)
    return out


# ----------------------------------------------------------------------------
# Parameter init + one-time prepacking (bf16 weights, folded BN, fc layouts)
# ----------------------------------------------------------------------------

def kaiming(key, shape):
    cout, cin, kh, kw = shape
    fan_out = cout * kh * kw
    std = (2.0 / fan_out) ** 0.5
    return std * jax.random.normal(key, shape, jnp.float32)


def bn_params(c):
    return (jnp.ones((c,), jnp.float32), jnp.zeros((c,), jnp.float32),
            jnp.zeros((c,), jnp.float32), jnp.ones((c,), jnp.float32))


def _fold_bn(bn, eps=1e-5):
    gamma, beta, mean, var = bn
    scale = gamma / jnp.sqrt(var + eps)
    shift = beta - mean * scale
    return scale.astype(jnp.float32), shift.astype(jnp.float32)


def prep_conv(w_torch, bn):
    """PyTorch (Cout, Cin, kh, kw) f32 -> prepacked bf16 (kh*kw*Cin, Cout)."""
    Cout, Cin, kh, kw = w_torch.shape
    w = jnp.transpose(w_torch, (2, 3, 1, 0)).reshape(kh * kw * Cin, Cout)
    scale, shift = _fold_bn(bn)
    return {'w': w.astype(jnp.bfloat16), 'kh': kh, 'kw': kw,
            'scale': scale, 'shift': shift}


def linear_params(key, in_f, out_f):
    k1, k2 = jax.random.split(key)
    bound = 1.0 / (in_f ** 0.5)
    w = jax.random.uniform(k1, (out_f, in_f), jnp.float32, -bound, bound)
    b = jax.random.uniform(k2, (out_f,), jnp.float32, -bound, bound)
    return w, b


def make_basic_block_params(key, inplanes, planes, stride, downsample):
    k = jax.random.split(key, 3)
    p = {'stride': stride,
         'conv1': prep_conv(kaiming(k[0], (planes, inplanes, 3, 3)),
                            bn_params(planes)),
         'conv2': prep_conv(kaiming(k[1], (planes, planes, 3, 3)),
                            bn_params(planes))}
    if downsample:
        p['down'] = prep_conv(kaiming(k[2], (planes, inplanes, 1, 1)),
                              bn_params(planes))
    return p


def init_posenet(key, layers=(2, 2, 2, 2), feat_hw=(6, 20)):
    # TODO(synk): original fc1 expects 512*6*20 features (input 192x640); here
    # fc1 in-features are sized from the test spatial resolution (feat_hw).
    Hf, Wf = feat_hw
    ks = jax.random.split(key, 32)
    params = {'conv1': prep_conv(kaiming(ks[0], (64, 12, 7, 7)), bn_params(64))}
    inplanes, ki = 64, 1
    for li, (planes, nblocks, stride) in enumerate(
            zip((64, 128, 256, 512), layers, (1, 2, 2, 2)), start=1):
        blocks = []
        for b in range(nblocks):
            s = stride if b == 0 else 1
            ds = (s != 1) or (inplanes != planes)
            blocks.append(make_basic_block_params(ks[ki], inplanes, planes, s, ds))
            ki += 1
            inplanes = planes
        params[f'layer{li}'] = blocks

    C = 512
    fc1_in = C * Hf * Wf
    w1, b1 = linear_params(ks[ki], fc1_in, 512); ki += 1
    # Permute fc1 in-features from PyTorch's CHW flatten order to the HWC order
    # our NHWC feature map flattens to (removes a runtime transpose), and
    # pre-transpose / pre-cast once.
    w1_hwc = jnp.transpose(w1.reshape(512, C, Hf, Wf),
                           (0, 2, 3, 1)).reshape(512, fc1_in)
    params['fc1'] = {'w': w1_hwc.T.astype(jnp.bfloat16), 'b': b1}
    w2, b2 = linear_params(ks[ki], 512, 512); ki += 1
    params['fc2'] = {'w': w2.T.astype(jnp.bfloat16), 'b': b2}
    params['fc3_t'] = linear_params(ks[ki], 512, 3); ki += 1
    params['fc3_r'] = linear_params(ks[ki], 512, 3); ki += 1
    return params


# ----------------------------------------------------------------------------
# Forward pass (matches PyTorch PoseNet.forward semantics)
# ----------------------------------------------------------------------------

def posenet_forward(x_list, params):
    x = jnp.concatenate(x_list, axis=1)                        # torch.cat, NCHW
    x = jnp.transpose(x, (0, 2, 3, 1)).astype(jnp.bfloat16)    # NHWC, bf16
    x = conv_affine(x, params['conv1'], stride=2, pad=3, relu=True)
    x = maxpool_3x3_s2(x)
    for li in range(1, 5):
        for blk in params[f'layer{li}']:
            x = basic_block(x, blk)

    N, Hf, Wf, C = x.shape
    # fc1 weights were permuted at init to HWC flatten order -> no transpose.
    feat = x.reshape(N, Hf * Wf * C)

    ones512 = jnp.ones((512,), jnp.float32)
    h = matmul_affine(feat, params['fc1']['w'], ones512, params['fc1']['b'],
                      relu=True)
    h = matmul_affine(h, params['fc2']['w'], ones512, params['fc2']['b'],
                      relu=True)

    # Tiny 6-wide head: not worth a lane-sparse MXU pass, run in plain jnp.
    wr, br = params['fc3_r']
    wt, bt = params['fc3_t']
    w_rt = jnp.concatenate([wr, wt], axis=0)       # columns: [x_r(3), x_t(3)]
    b_rt = jnp.concatenate([br, bt], axis=0)
    out6 = h.astype(jnp.float32) @ w_rt.T + b_rt

    axisangle = (0.001 * out6[:, 0:3]).astype(jnp.float32)
    translation = (0.001 * out6[:, 3:6]).astype(jnp.float32)
    return axisangle, translation


# ----------------------------------------------------------------------------

if __name__ == "__main__":
    key = jax.random.PRNGKey(0)
    pkey, xkey = jax.random.split(key)

    B, H, W = 2, 64, 96                            # small test resolution
    params = init_posenet(pkey, layers=(2, 2, 2, 2),
                          feat_hw=(H // 32, W // 32))

    # forward(x) expects a list of frames concatenated to 12 channels (4 x RGB)
    xkeys = jax.random.split(xkey, 4)
    x_list = [jax.random.normal(k, (B, 3, H, W), jnp.float32) for k in xkeys]

    axisangle, translation = posenet_forward(x_list, params)
    jax.block_until_ready((axisangle, translation))
    assert axisangle.shape == (B, 3) and translation.shape == (B, 3)
    assert axisangle.dtype == jnp.float32 and translation.dtype == jnp.float32
    print("KERNEL_OK")
</pallas_src>

<mosaic_0001>
module attributes {stable_mosaic.version = 11 : i64} {
  func.func @_mm_affine_kernel(%arg0: i32, %arg1: i32, %arg2: i32, %arg3: memref<1024x588xbf16, #tpu.memory_space<vmem>>, %arg4: memref<588x64xbf16, #tpu.memory_space<vmem>>, %arg5: memref<1x64xf32, #tpu.memory_space<vmem>>, %arg6: memref<1x64xf32, #tpu.memory_space<vmem>>, %arg7: memref<1024x64xbf16, #tpu.memory_space<vmem>>, %arg8: memref<1024x64xf32, #tpu.memory_space<vmem>>) attributes {dimension_semantics = [#tpu.dimension_semantics<parallel>, #tpu.dimension_semantics<parallel>, #tpu.dimension_semantics<arbitrary>], iteration_bounds = array<i64: 3, 1, 1>, scalar_prefetch = 0 : i64, scratch_operands = 1 : i64, tpu.core_type = #tpu.core_type<tc>, window_params = [{transform_indices = @transform_0, window_bounds = array<i64: 1024, 588>}, {transform_indices = @transform_1, window_bounds = array<i64: 588, 64>}, {transform_indices = @transform_2, window_bounds = array<i64: 1, 64>}, {transform_indices = @transform_3, window_bounds = array<i64: 1, 64>}, {transform_indices = @transform_4, window_bounds = array<i64: 1024, 64>}]} {
    %c0_i32 = arith.constant 0 : i32
    %0 = arith.cmpi eq, %arg2, %c0_i32 : i32
    %1 = arith.extui %0 : i1 to i32
    %c0_i32_0 = arith.constant 0 : i32
    %2 = arith.cmpi ne, %1, %c0_i32_0 : i32
    scf.if %2 {
      %cst_10 = arith.constant 0.000000e+00 : f32
      %12 = vector.broadcast %cst_10 : f32 to vector<1024x64xf32>
      %c0_11 = arith.constant 0 : index
      %c0_12 = arith.constant 0 : index
      %13 = vector.load %arg8[%c0_11, %c0_12] : memref<1024x64xf32, #tpu.memory_space<vmem>>, vector<1024x64xf32>
      tpu.vector_store %arg8[%c0_11, %c0_12], %12 {strides = array<i32>} : memref<1024x64xf32, #tpu.memory_space<vmem>>, vector<1024x64xf32>,
    } else {
    }
    %c0 = arith.constant 0 : index
    %c0_1 = arith.constant 0 : index
    %3 = vector.load %arg8[%c0, %c0_1] : memref<1024x64xf32, #tpu.memory_space<vmem>>, vector<1024x64xf32>
    %c0_2 = arith.constant 0 : index
    %c0_3 = arith.constant 0 : index
    %4 = vector.load %arg3[%c0_2, %c0_3] : memref<1024x588xbf16, #tpu.memory_space<vmem>>, vector<1024x588xbf16>
    %c0_4 = arith.constant 0 : index
    %c0_5 = arith.constant 0 : index
    %5 = vector.load %arg4[%c0_4, %c0_5] : memref<588x64xbf16, #tpu.memory_space<vmem>>, vector<588x64xbf16>
    %cst = arith.constant dense<0.000000e+00> : vector<1024x64xf32>
    %6 = tpu.matmul %4, %5, %cst {dimension_numbers = #tpu.dot_dimension_numbers<[1], [0], [0], [1], [0, 0, 1, 1], [], []>} : vector<1024x588xbf16>, vector<588x64xbf16>, vector<1024x64xf32> -> vector<1024x64xf32>
    %7 = arith.addf %3, %6 : vector<1024x64xf32>
    %c0_6 = arith.constant 0 : index
    %c0_7 = arith.constant 0 : index
    %8 = vector.load %arg8[%c0_6, %c0_7] : memref<1024x64xf32, #tpu.memory_space<vmem>>, vector<1024x64xf32>
    tpu.vector_store %arg8[%c0_6, %c0_7], %7 {strides = array<i32>} : memref<1024x64xf32, #tpu.memory_space<vmem>>, vector<1024x64xf32>,
    %c0_i32_8 = arith.constant 0 : i32
    %9 = arith.cmpi eq, %arg2, %c0_i32_8 : i32
    %10 = arith.extui %9 : i1 to i32
    %c0_i32_9 = arith.constant 0 : i32
    %11 = arith.cmpi ne, %10, %c0_i32_9 : i32
    scf.if %11 {
      %c0_10 = arith.constant 0 : index
      %c0_11 = arith.constant 0 : index
      %12 = vector.load %arg8[%c0_10, %c0_11] : memref<1024x64xf32, #tpu.memory_space<vmem>>, vector<1024x64xf32>
      %c0_12 = arith.constant 0 : index
      %c0_13 = arith.constant 0 : index
      %13 = vector.load %arg5[%c0_12, %c0_13] : memref<1x64xf32, #tpu.memory_space<vmem>>, vector<1x64xf32>
      %14 = vector.broadcast %13 : vector<1x64xf32> to vector<1024x64xf32>
      %15 = arith.mulf %12, %14 : vector<1024x64xf32>
      %c0_14 = arith.constant 0 : index
      %c0_15 = arith.constant 0 : index
      %16 = vector.load %arg6[%c0_14, %c0_15] : memref<1x64xf32, #tpu.memory_space<vmem>>, vector<1x64xf32>
      %17 = vector.broadcast %16 : vector<1x64xf32> to vector<1024x64xf32>
      %18 = arith.addf %15, %17 : vector<1024x64xf32>
      %cst_16 = arith.constant 0.000000e+00 : f32
      %19 = vector.broadcast %cst_16 : f32 to vector<1024x64xf32>
      %20 = arith.maximumf %18, %19 : vector<1024x64xf32>
      %21 = arith.truncf %20 : vector<1024x64xf32> to vector<1024x64xbf16>
      %c0_17 = arith.constant 0 : index
      %c0_18 = arith.constant 0 : index
      %22 = vector.load %arg7[%c0_17, %c0_18] : memref<1024x64xbf16, #tpu.memory_space<vmem>>, vector<1024x64xbf16>
      tpu.vector_store %arg7[%c0_17, %c0_18], %21 {strides = array<i32>} : memref<1024x64xbf16, #tpu.memory_space<vmem>>, vector<1024x64xbf16>,
    } else {
    }
    return
  }
  func.func @transform_0(%arg0: i32, %arg1: i32, %arg2: i32) -> (i32, i32) {
    %c0_i32 = arith.constant 0 : i32
    return %arg0, %arg2 : i32, i32
  }
  func.func @transform_1(%arg0: i32, %arg1: i32, %arg2: i32) -> (i32, i32) {
    %c0_i32 = arith.constant 0 : i32
    return %arg2, %arg1 : i32, i32
  }
  func.func @transform_2(%arg0: i32, %arg1: i32, %arg2: i32) -> (i32, i32) {
    %c0_i32 = arith.constant 0 : i32
    %c0_i32_0 = arith.constant 0 : i32
    return %c0_i32, %arg1 : i32, i32
  }
  func.func @transform_3(%arg0: i32, %arg1: i32, %arg2: i32) -> (i32, i32) {
    %c0_i32 = arith.constant 0 : i32
    %c0_i32_0 = arith.constant 0 : i32
    return %c0_i32, %arg1 : i32, i32
  }
  func.func @transform_4(%arg0: i32, %arg1: i32, %arg2: i32) -> (i32, i32) {
    %c0_i32 = arith.constant 0 : i32
    return %arg0, %arg1 : i32, i32
  }
}

</mosaic_0001>

<llo_original>
// kernel: tpu_custom_call.1
$region0: #{tpu_custom_call.1}
  #allocation0 [shape = 'u32[]', space=smem, size = 0x4, offset = 0x4, fixed_abs, tag = 'smem constant byte address 0x4 - core index']
  #allocation1 [shape = 'u32[144,128]{1,0:T(1,128)}', space=vmem, size = 0x12000, scoped, tag = 'internal scratch']
  #allocation2 [shape = 'f32[1024,64]{1,0:T(8,128)}', space=vmem, size = 0x80000, scoped, tag = 'scratch operand']
  %s0 = inlined_call_operand.vmem [shape: bf16[3072,588], index: 0, kind: input, shape index: {}]
  %s1 = inlined_call_operand.vmem [shape: bf16[588,64], index: 1, kind: input, shape index: {}]
  %s2 = inlined_call_operand.vmem [shape: f32[1,64], index: 2, kind: input, shape index: {}]
  %s3 = inlined_call_operand.vmem [shape: f32[1,64], index: 3, kind: input, shape index: {}]
  %s4 = inlined_call_operand.vmem [shape: bf16[3072,64], index: 4, kind: output, shape index: {}]
  %s5 = sld [smem:[#allocation0]]
  $region57: #{tpu_custom_call.1} parent=0
    _
  %s7 = ssub.s32 1, %s5
  %s8 = scalar_select 0, %s7, %s5
  loop: start=0, step=1, limit=5
  $region2: #{tpu_custom_call.1} parent=0 // loop_pre_header
    _
  $region3: #{tpu_custom_call.1} parent=0 // loop_header
    %s10 = sphi 0, %s14
    %p11 = scmp.ge.s32.totalorder %s10, 5
    %s17 = sphi 0, %s36
    %s18 = sphi 0, %s32
    %s19 = sphi 0, %s28
    %s20 = sphi 0, %s17
    %s21 = sphi 0, %s18
    %s22 = sphi 0, %s19
    %s23 = sphi 0, %s20
    %s24 = sphi 0, %s21
    %s25 = sphi 0, %s22
    %s41 = sphi 0, %s43
    %s44 = sphi 0, %s41
    %s45 = sphi 0, %s44
    %s61 = sphi 0, %s45
    %s69 = sphi 0, %s71
    %s72 = sphi 0, %s69
    %s73 = sphi 0, %s72
    %s89 = sphi 0, %s73
    %s95 = sphi 0, %s97
    %s98 = sphi 0, %s95
    %s99 = sphi 0, %s98
    %s115 = sphi 0, %s99
    %s121 = sphi 0, %s123
    %s124 = sphi 0, %s121
    %s125 = sphi 0, %s124
    %s141 = sphi 0, %s125
    %s149 = sphi 0, %s151
    %s152 = sphi 0, %s149
    %s153 = sphi 0, %s152
    %s169 = sphi 0, %s153
  $region4: #{tpu_custom_call.1} parent=0 // loop_header_branch
    %13 = sbr.rel (%p11) target = $region8
  $region5: #{tpu_custom_call.1} parent=0 // loop_body
    %s15 = ssub.s32 %s10, 1
    %s16 = ssub.s32 %s10, 2
    %s26 = sadd.s32 1, %s19
    %p27 = scmp.ge.s32.totalorder %s26, 1
    %s28 = scalar_select %p27, 0, %s26
    %s29 = sadd.s32 1, %s18
    %s30 = scalar_select %p27, %s29, %s18
    %p31 = scmp.ge.s32.totalorder %s30, 1
    %s32 = scalar_select %p31, 0, %s30
    %s33 = sadd.s32 1, %s17
    %s34 = scalar_select %p31, %s33, %s17
    %p35 = scmp.ge.s32.totalorder %s34, 3
    %s36 = scalar_select %p35, 0, %s34
    %s37 = ssub.s32 %s17, %s36
    %s38 = ssub.s32 %s19, %s28
    %s39 = sor.u32 %s37, %s38
    %p40 = scmp.eq.s32.totalorder %s39, 0
    %s42 = sadd.s32 %s41, 1
    %s43 = scalar_select %p40, %s41, %s42
    %p46 = pneg %p40
    %p47 = scmp.eq.s32.totalorder %s10, 2
    %p48 = por %p46, %p47
    %p49 = scmp.ne.s32.totalorder %s41, %s44
    %p50 = scmp.eq.s32.totalorder %s10, 0
    %p51 = por %p49, %p50
    %p52 = scmp.ne.s32.totalorder %s41, %s44
    %p53 = scmp.eq.s32.totalorder %s15, 2
    %p54 = por %p52, %p53
    %p55 = scmp.ne.s32.totalorder %s44, %s45
    %p56 = scmp.eq.s32.totalorder %s15, 0
    %p57 = por %p55, %p56
    %p58 = scmp.ne.s32.totalorder %s44, %s45
    %p59 = scmp.eq.s32.totalorder %s16, 2
    %p60 = por %p58, %p59
    %p62 = scmp.ne.s32.totalorder %s45, %s61
    %p63 = scmp.eq.s32.totalorder %s16, 0
    %p64 = por %p62, %p63
    %s65 = ssub.s32 %s19, %s28
    %s66 = ssub.s32 %s18, %s32
    %s67 = sor.u32 %s65, %s66
    %p68 = scmp.eq.s32.totalorder %s67, 0
    %s70 = sadd.s32 %s69, 1
    %s71 = scalar_select %p68, %s69, %s70
    %p74 = pneg %p68
    %p75 = scmp.eq.s32.totalorder %s10, 2
    %p76 = por %p74, %p75
    %p77 = scmp.ne.s32.totalorder %s69, %s72
    %p78 = scmp.eq.s32.totalorder %s10, 0
    %p79 = por %p77, %p78
    %p80 = scmp.ne.s32.totalorder %s69, %s72
    %p81 = scmp.eq.s32.totalorder %s15, 2
    %p82 = por %p80, %p81
    %p83 = scmp.ne.s32.totalorder %s72, %s73
    %p84 = scmp.eq.s32.totalorder %s15, 0
    %p85 = por %p83, %p84
    %p86 = scmp.ne.s32.totalorder %s72, %s73
    %p87 = scmp.eq.s32.totalorder %s16, 2
    %p88 = por %p86, %p87
    %p90 = scmp.ne.s32.totalorder %s73, %s89
    %p91 = scmp.eq.s32.totalorder %s16, 0
    %p92 = por %p90, %p91
    %s93 = ssub.s32 %s18, %s32
    %p94 = scmp.eq.s32.totalorder %s93, 0
    %s96 = sadd.s32 %s95, 1
    %s97 = scalar_select %p94, %s95, %s96
    %p100 = pneg %p94
    %p101 = scmp.eq.s32.totalorder %s10, 2
    %p102 = por %p100, %p101
    %p103 = scmp.ne.s32.totalorder %s95, %s98
    %p104 = scmp.eq.s32.totalorder %s10, 0
    %p105 = por %p103, %p104
    %p106 = scmp.ne.s32.totalorder %s95, %s98
    %p107 = scmp.eq.s32.totalorder %s15, 2
    %p108 = por %p106, %p107
    %p109 = scmp.ne.s32.totalorder %s98, %s99
    %p110 = scmp.eq.s32.totalorder %s15, 0
    %p111 = por %p109, %p110
    %p112 = scmp.ne.s32.totalorder %s98, %s99
    %p113 = scmp.eq.s32.totalorder %s16, 2
    %p114 = por %p112, %p113
    %p116 = scmp.ne.s32.totalorder %s99, %s115
    %p117 = scmp.eq.s32.totalorder %s16, 0
    %p118 = por %p116, %p117
    %s119 = ssub.s32 %s18, %s32
    %p120 = scmp.eq.s32.totalorder %s119, 0
    %s122 = sadd.s32 %s121, 1
    %s123 = scalar_select %p120, %s121, %s122
    %p126 = pneg %p120
    %p127 = scmp.eq.s32.totalorder %s10, 2
    %p128 = por %p126, %p127
    %p129 = scmp.ne.s32.totalorder %s121, %s124
    %p130 = scmp.eq.s32.totalorder %s10, 0
    %p131 = por %p129, %p130
    %p132 = scmp.ne.s32.totalorder %s121, %s124
    %p133 = scmp.eq.s32.totalorder %s15, 2
    %p134 = por %p132, %p133
    %p135 = scmp.ne.s32.totalorder %s124, %s125
    %p136 = scmp.eq.s32.totalorder %s15, 0
    %p137 = por %p135, %p136
    %p138 = scmp.ne.s32.totalorder %s124, %s125
    %p139 = scmp.eq.s32.totalorder %s16, 2
    %p140 = por %p138, %p139
    %p142 = scmp.ne.s32.totalorder %s125, %s141
    %p143 = scmp.eq.s32.totalorder %s16, 0
    %p144 = por %p142, %p143
    %s145 = ssub.s32 %s17, %s36
    %s146 = ssub.s32 %s18, %s32
    %s147 = sor.u32 %s145, %s146
    %p148 = scmp.eq.s32.totalorder %s147, 0
    %s150 = sadd.s32 %s149, 1
    %s151 = scalar_select %p148, %s149, %s150
    %p154 = pneg %p148
    %p155 = scmp.eq.s32.totalorder %s10, 2
    %p156 = por %p154, %p155
    %p157 = scmp.ne.s32.totalorder %s149, %s152
    %p158 = scmp.eq.s32.totalorder %s10, 0
    %p159 = por %p157, %p158
    %p160 = scmp.ne.s32.totalorder %s149, %s152
    %p161 = scmp.eq.s32.totalorder %s15, 2
    %p162 = por %p160, %p161
    %p163 = scmp.ne.s32.totalorder %s152, %s153
    %p164 = scmp.eq.s32.totalorder %s15, 0
    %p165 = por %p163, %p164
    %p166 = scmp.ne.s32.totalorder %s152, %s153
    %p167 = scmp.eq.s32.totalorder %s16, 2
    %p168 = por %p166, %p167
    %p170 = scmp.ne.s32.totalorder %s153, %s169
    %p171 = scmp.eq.s32.totalorder %s16, 0
    %p172 = por %p170, %p171
    %p173 = scmp.le.s32.totalorder 1, %s10
    %p174 = scmp.lt.s32.totalorder %s10, 4
    %p175 = pnand %p173, %p174
    %p176 = pneg %p175
    // Predicated region
    $region9: #{tpu_custom_call.1} parent=5 // pred_check
      _
    $region10: #{tpu_custom_call.1} parent=5 // pred_check_branch
      %178 = sbr.rel (%p175) target = $region12
    $region11: #{tpu_custom_call.1} parent=5 // pred_region
      %s179 = ssub.s32 %s10, 1
      // Predicated region
      $region13: #{tpu_custom_call.1} parent=11 // pred_check
        %p180 = pneg %p85
      $region14: #{tpu_custom_call.1} parent=11 // pred_check_branch
        %182 = sbr.rel (%p180) target = $region16
      $region15: #{tpu_custom_call.1} parent=11 // pred_region
        %s183 = smul.u32 74, %s22
        %p184 = scmp.lt.s32.totalorder %s183, 73
        %s185 = scalar_select %p184, %s183, 73
        %p186 = scmp.lt.s32.totalorder %s21, 0
        %s187 = scalar_select %p186, %s21, 0
        %s188 = sadd.s32 %s187, %s185
        %s189 = smul.addr %s188, 4
        %s190 = scalar_lea.vmem %s1, %s189
        %s191 = smul.u32 74, %s22
      $region16: #{tpu_custom_call.1} parent=11 // pred_fallthru
        _
      // Predicated region
      $region17: #{tpu_custom_call.1} parent=11 // pred_check
        %p192 = pneg %p111
      $region18: #{tpu_custom_call.1} parent=11 // pred_check_branch
        %194 = sbr.rel (%p192) target = $region20
      $region19: #{tpu_custom_call.1} parent=11 // pred_region
        %p195 = scmp.lt.s32.totalorder %s21, 0
        %s196 = scalar_select %p195, %s21, 0
        %s197 = scalar_lea.vmem %s2, %s196
      $region20: #{tpu_custom_call.1} parent=11 // pred_fallthru
        _
      // Predicated region
      $region21: #{tpu_custom_call.1} parent=11 // pred_check
        %p198 = pneg %p137
      $region22: #{tpu_custom_call.1} parent=11 // pred_check_branch
        %200 = sbr.rel (%p198) target = $region24
      $region23: #{tpu_custom_call.1} parent=11 // pred_region
        %p201 = scmp.lt.s32.totalorder %s21, 0
        %s202 = scalar_select %p201, %s21, 0
        %s203 = scalar_lea.vmem %s3, %s202
      $region24: #{tpu_custom_call.1} parent=11 // pred_fallthru
        _
    $region12: #{tpu_custom_call.1} parent=5 // pred_fallthru
      _
    %p204 = scmp.lt.s32.totalorder %s10, 3
    // Predicated region
    $region25: #{tpu_custom_call.1} parent=5 // pred_check
      %p205 = pneg %p204
    $region26: #{tpu_custom_call.1} parent=5 // pred_check_branch
      %207 = sbr.rel (%p205) target = $region28
    $region27: #{tpu_custom_call.1} parent=5 // pred_region
      // Predicated region
      $region29: #{tpu_custom_call.1} parent=27 // pred_check
        %p208 = pneg %p51
      $region30: #{tpu_custom_call.1} parent=27 // pred_check_branch
        %210 = sbr.rel (%p208) target = $region32
      $region31: #{tpu_custom_call.1} parent=27 // pred_region
        %s211 = smul.u32 128, %s17
        %s212 = smul.u32 5, %s19
        %p213 = scmp.lt.s32.totalorder %s211, 383
        %s214 = scalar_select %p213, %s211, 383
        %p215 = scmp.lt.s32.totalorder %s212, 4
        %s216 = scalar_select %p215, %s212, 4
        %s217 = smul.addr %s214, 5
        %s218 = sadd.s32 %s216, %s217
        %s219 = smul.addr %s218, 4
        %s220 = scalar_lea.vmem %s0, %s219
        %s221 = smul.u32 128, %s17
        %s222 = smul.u32 5, %s19
      $region32: #{tpu_custom_call.1} parent=27 // pred_fallthru
        _
    $region28: #{tpu_custom_call.1} parent=5 // pred_fallthru
      _
    %p223 = scmp.le.s32.totalorder 1, %s10
    %p224 = scmp.lt.s32.totalorder %s10, 4
    %p225 = pnand %p223, %p224
    %p226 = pneg %p225
    // Predicated region
    $region33: #{tpu_custom_call.1} parent=5 // pred_check
      _
    $region34: #{tpu_custom_call.1} parent=5 // pred_check_branch
      %228 = sbr.rel (%p225) target = $region36
    $region35: #{tpu_custom_call.1} parent=5 // pred_region
      %s229 = ssub.s32 %s10, 1
      %s230 = smul.u32 128, %s20
      %s231 = smul.u32 5, %s22
      %p232 = scmp.lt.s32.totalorder %s230, 383
      %s233 = scalar_select %p232, %s230, 383
      %p234 = scmp.lt.s32.totalorder %s231, 4
      %s235 = scalar_select %p234, %s231, 4
      %s236 = smul.addr %s233, 5
      %s237 = sadd.s32 %s235, %s236
      %s238 = smul.addr %s237, 4
      %s239 = scalar_lea.vmem %s0, %s238
      %p240 = pneg %p57
      %p241 = pneg %p54
      %s242 = smul.u32 74, %s22
      %p243 = scmp.lt.s32.totalorder %s242, 73
      %s244 = scalar_select %p243, %s242, 73
      %p245 = scmp.lt.s32.totalorder %s21, 0
      %s246 = scalar_select %p245, %s21, 0
      %s247 = sadd.s32 %s246, %s244
      %s248 = smul.addr %s247, 4
      %s249 = scalar_lea.vmem %s1, %s248
      %p250 = pneg %p85
      %p251 = pneg %p82
      %p252 = scmp.lt.s32.totalorder %s21, 0
      %s253 = scalar_select %p252, %s21, 0
      %s254 = scalar_lea.vmem %s2, %s253
      %p255 = pneg %p111
      %p256 = pneg %p108
      %p257 = scmp.lt.s32.totalorder %s21, 0
      %s258 = scalar_select %p257, %s21, 0
      %s259 = scalar_lea.vmem %s3, %s258
      %p260 = pneg %p137
      %p261 = pneg %p134
      %p262 = pneg %p165
      %p263 = pneg %p162
      %s264 = smul.u32 128, %s20
      %p265 = scmp.lt.s32.totalorder %s264, 383
      %s266 = scalar_select %p265, %s264, 383
      %p267 = scmp.lt.s32.totalorder %s21, 0
      %s268 = scalar_select %p267, %s21, 0
      %s269 = sadd.s32 %s268, %s266
      %s270 = smul.addr %s269, 4
      %s271 = scalar_lea.vmem %s4, %s270
      %s272 = smul.u32 128, %s20
      %s273 = smul.u32 5, %s22
      %p274 = scmp.lt.s32.totalorder %s272, 383
      %s275 = scalar_select %p274, %s272, 383
      %p276 = scmp.lt.s32.totalorder %s273, 4
      %s277 = scalar_select %p276, %s273, 4
      %s278 = smul.addr %s275, 5
      %s279 = sadd.s32 %s277, %s278
      %s280 = smul.addr %s279, 4
      %s281 = scalar_lea.vmem %s0, %s280
      %s282 = smul.u32 128, %s20
      %s283 = smul.u32 5, %s22
      %s284 = smul.u32 74, %s22
      %p285 = scmp.lt.s32.totalorder %s284, 73
      %s286 = scalar_select %p285, %s284, 73
      %p287 = scmp.lt.s32.totalorder %s21, 0
      %s288 = scalar_select %p287, %s21, 0
      %s289 = sadd.s32 %s288, %s286
      %s290 = smul.addr %s289, 4
      %s291 = scalar_lea.vmem %s1, %s290
      %s292 = smul.u32 74, %s22
      %p293 = scmp.lt.s32.totalorder %s21, 0
      %s294 = scalar_select %p293, %s21, 0
      %s295 = scalar_lea.vmem %s2, %s294
      %p296 = scmp.lt.s32.totalorder %s21, 0
      %s297 = scalar_select %p296, %s21, 0
      %s298 = scalar_lea.vmem %s3, %s297
      %s299 = smul.u32 128, %s20
      %p300 = scmp.lt.s32.totalorder %s299, 383
      %s301 = scalar_select %p300, %s299, 383
      %p302 = scmp.lt.s32.totalorder %s21, 0
      %s303 = scalar_select %p302, %s21, 0
      %s304 = sadd.s32 %s303, %s301
      %s305 = smul.addr %s304, 4
      %s306 = scalar_lea.vmem %s4, %s305
      %s307 = smul.u32 128, %s20
      %p309 = scmp.eq.s32.totalorder %s22, 0
      // Predicated region
      $region37: #{tpu_custom_call.1} parent=35 // pred_check
        %p310 = pneg %p309
      $region38: #{tpu_custom_call.1} parent=35 // pred_check_branch
        %312 = sbr.rel (%p310) target = $region40
      $region39: #{tpu_custom_call.1} parent=35 // pred_region
        %vm313 = vcmask 523264
        %314 = vst.msk [vmem:[#allocation2] sm:$0xff] %vm313, 0.0
        %315 = vst.msk [vmem:[#allocation2 + $0x8] sm:$0xff] %vm313, 0.0
        %316 = vst.msk [vmem:[#allocation2 + $0x10] sm:$0xff] %vm313, 0.0
        %317 = vst.msk [vmem:[#allocation2 + $0x18] sm:$0xff] %vm313, 0.0
        %318 = vst.msk [vmem:[#allocation2 + $0x20] sm:$0xff] %vm313, 0.0
        %319 = vst.msk [vmem:[#allocation2 + $0x28] sm:$0xff] %vm313, 0.0
        %320 = vst.msk [vmem:[#allocation2 + $0x30] sm:$0xff] %vm313, 0.0
        %321 = vst.msk [vmem:[#allocation2 + $0x38] sm:$0xff] %vm313, 0.0
        %322 = vst.msk [vmem:[#allocation2 + $0x40] sm:$0xff] %vm313, 0.0
        %323 = vst.msk [vmem:[#allocation2 + $0x48] sm:$0xff] %vm313, 0.0
        %324 = vst.msk [vmem:[#allocation2 + $0x50] sm:$0xff] %vm313, 0.0
        %325 = vst.msk [vmem:[#allocation2 + $0x58] sm:$0xff] %vm313, 0.0
        %326 = vst.msk [vmem:[#allocation2 + $0x60] sm:$0xff] %vm313, 0.0
        %327 = vst.msk [vmem:[#allocation2 + $0x68] sm:$0xff] %vm313, 0.0
        %328 = vst.msk [vmem:[#allocation2 + $0x70] sm:$0xff] %vm313, 0.0
        %329 = vst.msk [vmem:[#allocation2 + $0x78] sm:$0xff] %vm313, 0.0
        %330 = vst.msk [vmem:[#allocation2 + $0x80] sm:$0xff] %vm313, 0.0
        %331 = vst.msk [vmem:[#allocation2 + $0x88] sm:$0xff] %vm313, 0.0
        %332 = vst.msk [vmem:[#allocation2 + $0x90] sm:$0xff] %vm313, 0.0
        %333 = vst.msk [vmem:[#allocation2 + $0x98] sm:$0xff] %vm313, 0.0
        %334 = vst.msk [vmem:[#allocation2 + $0xa0] sm:$0xff] %vm313, 0.0
        %335 = vst.msk [vmem:[#allocation2 + $0xa8] sm:$0xff] %vm313, 0.0
        %336 = vst.msk [vmem:[#allocation2 + $0xb0] sm:$0xff] %vm313, 0.0
        %337 = vst.msk [vmem:[#allocation2 + $0xb8] sm:$0xff] %vm313, 0.0
        %338 = vst.msk [vmem:[#allocation2 + $0xc0] sm:$0xff] %vm313, 0.0
        %339 = vst.msk [vmem:[#allocation2 + $0xc8] sm:$0xff] %vm313, 0.0
        %340 = vst.msk [vmem:[#allocation2 + $0xd0] sm:$0xff] %vm313, 0.0
        %341 = vst.msk [vmem:[#allocation2 + $0xd8] sm:$0xff] %vm313, 0.0
        %342 = vst.msk [vmem:[#allocation2 + $0xe0] sm:$0xff] %vm313, 0.0
        %343 = vst.msk [vmem:[#allocation2 + $0xe8] sm:$0xff] %vm313, 0.0
        %344 = vst.msk [vmem:[#allocation2 + $0xf0] sm:$0xff] %vm313, 0.0
        %345 = vst.msk [vmem:[#allocation2 + $0xf8] sm:$0xff] %vm313, 0.0
        %346 = vst.msk [vmem:[#allocation2 + $0x100] sm:$0xff] %vm313, 0.0
        %347 = vst.msk [vmem:[#allocation2 + $0x108] sm:$0xff] %vm313, 0.0
        %348 = vst.msk [vmem:[#allocation2 + $0x110] sm:$0xff] %vm313, 0.0
        %349 = vst.msk [vmem:[#allocation2 + $0x118] sm:$0xff] %vm313, 0.0
        %350 = vst.msk [vmem:[#allocation2 + $0x120] sm:$0xff] %vm313, 0.0
        %351 = vst.msk [vmem:[#allocation2 + $0x128] sm:$0xff] %vm313, 0.0
        %352 = vst.msk [vmem:[#allocation2 + $0x130] sm:$0xff] %vm313, 0.0
        %353 = vst.msk [vmem:[#allocation2 + $0x138] sm:$0xff] %vm313, 0.0
        %354 = vst.msk [vmem:[#allocation2 + $0x140] sm:$0xff] %vm313, 0.0
        %355 = vst.msk [vmem:[#allocation2 + $0x148] sm:$0xff] %vm313, 0.0
        %356 = vst.msk [vmem:[#allocation2 + $0x150] sm:$0xff] %vm313, 0.0
        %357 = vst.msk [vmem:[#allocation2 + $0x158] sm:$0xff] %vm313, 0.0
        %358 = vst.msk [vmem:[#allocation2 + $0x160] sm:$0xff] %vm313, 0.0
        %359 = vst.msk [vmem:[#allocation2 + $0x168] sm:$0xff] %vm313, 0.0
        %360 = vst.msk [vmem:[#allocation2 + $0x170] sm:$0xff] %vm313, 0.0
        %361 = vst.msk [vmem:[#allocation2 + $0x178] sm:$0xff] %vm313, 0.0
        %362 = vst.msk [vmem:[#allocation2 + $0x180] sm:$0xff] %vm313, 0.0
        %363 = vst.msk [vmem:[#allocation2 + $0x188] sm:$0xff] %vm313, 0.0
        %364 = vst.msk [vmem:[#allocation2 + $0x190] sm:$0xff] %vm313, 0.0
        %365 = vst.msk [vmem:[#allocation2 + $0x198] sm:$0xff] %vm313, 0.0
        %366 = vst.msk [vmem:[#allocation2 + $0x1a0] sm:$0xff] %vm313, 0.0
        %367 = vst.msk [vmem:[#allocation2 + $0x1a8] sm:$0xff] %vm313, 0.0
        %368 = vst.msk [vmem:[#allocation2 + $0x1b0] sm:$0xff] %vm313, 0.0
        %369 = vst.msk [vmem:[#allocation2 + $0x1b8] sm:$0xff] %vm313, 0.0
        %370 = vst.msk [vmem:[#allocation2 + $0x1c0] sm:$0xff] %vm313, 0.0
        %371 = vst.msk [vmem:[#allocation2 + $0x1c8] sm:$0xff] %vm313, 0.0
        %372 = vst.msk [vmem:[#allocation2 + $0x1d0] sm:$0xff] %vm313, 0.0
        %373 = vst.msk [vmem:[#allocation2 + $0x1d8] sm:$0xff] %vm313, 0.0
        %374 = vst.msk [vmem:[#allocation2 + $0x1e0] sm:$0xff] %vm313, 0.0
        %375 = vst.msk [vmem:[#allocation2 + $0x1e8] sm:$0xff] %vm313, 0.0
        %376 = vst.msk [vmem:[#allocation2 + $0x1f0] sm:$0xff] %vm313, 0.0
        %377 = vst.msk [vmem:[#allocation2 + $0x1f8] sm:$0xff] %vm313, 0.0
        %378 = vst.msk [vmem:[#allocation2 + $0x200] sm:$0xff] %vm313, 0.0
        %379 = vst.msk [vmem:[#allocation2 + $0x208] sm:$0xff] %vm313, 0.0
        %380 = vst.msk [vmem:[#allocation2 + $0x210] sm:$0xff] %vm313, 0.0
        %381 = vst.msk [vmem:[#allocation2 + $0x218] sm:$0xff] %vm313, 0.0
        %382 = vst.msk [vmem:[#allocation2 + $0x220] sm:$0xff] %vm313, 0.0
        %383 = vst.msk [vmem:[#allocation2 + $0x228] sm:$0xff] %vm313, 0.0
        %384 = vst.msk [vmem:[#allocation2 + $0x230] sm:$0xff] %vm313, 0.0
        %385 = vst.msk [vmem:[#allocation2 + $0x238] sm:$0xff] %vm313, 0.0
        %386 = vst.msk [vmem:[#allocation2 + $0x240] sm:$0xff] %vm313, 0.0
        %387 = vst.msk [vmem:[#allocation2 + $0x248] sm:$0xff] %vm313, 0.0
        %388 = vst.msk [vmem:[#allocation2 + $0x250] sm:$0xff] %vm313, 0.0
        %389 = vst.msk [vmem:[#allocation2 + $0x258] sm:$0xff] %vm313, 0.0
        %390 = vst.msk [vmem:[#allocation2 + $0x260] sm:$0xff] %vm313, 0.0
        %391 = vst.msk [vmem:[#allocation2 + $0x268] sm:$0xff] %vm313, 0.0
        %392 = vst.msk [vmem:[#allocation2 + $0x270] sm:$0xff] %vm313, 0.0
        %393 = vst.msk [vmem:[#allocation2 + $0x278] sm:$0xff] %vm313, 0.0
        %394 = vst.msk [vmem:[#allocation2 + $0x280] sm:$0xff] %vm313, 0.0
        %395 = vst.msk [vmem:[#allocation2 + $0x288] sm:$0xff] %vm313, 0.0
        %396 = vst.msk [vmem:[#allocation2 + $0x290] sm:$0xff] %vm313, 0.0
        %397 = vst.msk [vmem:[#allocation2 + $0x298] sm:$0xff] %vm313, 0.0
        %398 = vst.msk [vmem:[#allocation2 + $0x2a0] sm:$0xff] %vm313, 0.0
        %399 = vst.msk [vmem:[#allocation2 + $0x2a8] sm:$0xff] %vm313, 0.0
        %400 = vst.msk [vmem:[#allocation2 + $0x2b0] sm:$0xff] %vm313, 0.0
        %401 = vst.msk [vmem:[#allocation2 + $0x2b8] sm:$0xff] %vm313, 0.0
        %402 = vst.msk [vmem:[#allocation2 + $0x2c0] sm:$0xff] %vm313, 0.0
        %403 = vst.msk [vmem:[#allocation2 + $0x2c8] sm:$0xff] %vm313, 0.0
        %404 = vst.msk [vmem:[#allocation2 + $0x2d0] sm:$0xff] %vm313, 0.0
        %405 = vst.msk [vmem:[#allocation2 + $0x2d8] sm:$0xff] %vm313, 0.0
        %406 = vst.msk [vmem:[#allocation2 + $0x2e0] sm:$0xff] %vm313, 0.0
        %407 = vst.msk [vmem:[#allocation2 + $0x2e8] sm:$0xff] %vm313, 0.0
        %408 = vst.msk [vmem:[#allocation2 + $0x2f0] sm:$0xff] %vm313, 0.0
        %409 = vst.msk [vmem:[#allocation2 + $0x2f8] sm:$0xff] %vm313, 0.0
        %410 = vst.msk [vmem:[#allocation2 + $0x300] sm:$0xff] %vm313, 0.0
        %411 = vst.msk [vmem:[#allocation2 + $0x308] sm:$0xff] %vm313, 0.0
        %412 = vst.msk [vmem:[#allocation2 + $0x310] sm:$0xff] %vm313, 0.0
        %413 = vst.msk [vmem:[#allocation2 + $0x318] sm:$0xff] %vm313, 0.0
        %414 = vst.msk [vmem:[#allocation2 + $0x320] sm:$0xff] %vm313, 0.0
        %415 = vst.msk [vmem:[#allocation2 + $0x328] sm:$0xff] %vm313, 0.0
        %416 = vst.msk [vmem:[#allocation2 + $0x330] sm:$0xff] %vm313, 0.0
        %417 = vst.msk [vmem:[#allocation2 + $0x338] sm:$0xff] %vm313, 0.0
        %418 = vst.msk [vmem:[#allocation2 + $0x340] sm:$0xff] %vm313, 0.0
        %419 = vst.msk [vmem:[#allocation2 + $0x348] sm:$0xff] %vm313, 0.0
        %420 = vst.msk [vmem:[#allocation2 + $0x350] sm:$0xff] %vm313, 0.0
        %421 = vst.msk [vmem:[#allocation2 + $0x358] sm:$0xff] %vm313, 0.0
        %422 = vst.msk [vmem:[#allocation2 + $0x360] sm:$0xff] %vm313, 0.0
        %423 = vst.msk [vmem:[#allocation2 + $0x368] sm:$0xff] %vm313, 0.0
        %424 = vst.msk [vmem:[#allocation2 + $0x370] sm:$0xff] %vm313, 0.0
        %425 = vst.msk [vmem:[#allocation2 + $0x378] sm:$0xff] %vm313, 0.0
        %426 = vst.msk [vmem:[#allocation2 + $0x380] sm:$0xff] %vm313, 0.0
        %427 = vst.msk [vmem:[#allocation2 + $0x388] sm:$0xff] %vm313, 0.0
        %428 = vst.msk [vmem:[#allocation2 + $0x390] sm:$0xff] %vm313, 0.0
        %429 = vst.msk [vmem:[#allocation2 + $0x398] sm:$0xff] %vm313, 0.0
        %430 = vst.msk [vmem:[#allocation2 + $0x3a0] sm:$0xff] %vm313, 0.0
        %431 = vst.msk [vmem:[#allocation2 + $0x3a8] sm:$0xff] %vm313, 0.0
        %432 = vst.msk [vmem:[#allocation2 + $0x3b0] sm:$0xff] %vm313, 0.0
        %433 = vst.msk [vmem:[#allocation2 + $0x3b8] sm:$0xff] %vm313, 0.0
        %434 = vst.msk [vmem:[#allocation2 + $0x3c0] sm:$0xff] %vm313, 0.0
        %435 = vst.msk [vmem:[#allocation2 + $0x3c8] sm:$0xff] %vm313, 0.0
        %436 = vst.msk [vmem:[#allocation2 + $0x3d0] sm:$0xff] %vm313, 0.0
        %437 = vst.msk [vmem:[#allocation2 + $0x3d8] sm:$0xff] %vm313, 0.0
        %438 = vst.msk [vmem:[#allocation2 + $0x3e0] sm:$0xff] %vm313, 0.0
        %439 = vst.msk [vmem:[#allocation2 + $0x3e8] sm:$0xff] %vm313, 0.0
        %440 = vst.msk [vmem:[#allocation2 + $0x3f0] sm:$0xff] %vm313, 0.0
        %441 = vst.msk [vmem:[#allocation2 + $0x3f8] sm:$0xff] %vm313, 0.0
      $region40: #{tpu_custom_call.1} parent=35 // pred_fallthru
        _
      %v442 = vld [vmem:[#allocation2] sm:$0xff]
      %v443 = vld [vmem:[#allocation2 + $0x8] sm:$0xff]
      %v444 = vld [vmem:[#allocation2 + $0x10] sm:$0xff]
      %v445 = vld [vmem:[#allocation2 + $0x18] sm:$0xff]
      %v446 = vld [vmem:[#allocation2 + $0x20] sm:$0xff]
      %v447 = vld [vmem:[#allocation2 + $0x28] sm:$0xff]
      %v448 = vld [vmem:[#allocation2 + $0x30] sm:$0xff]
      %v449 = vld [vmem:[#allocation2 + $0x38] sm:$0xff]
      %v450 = vld [vmem:[#allocation2 + $0x40] sm:$0xff]
      %v451 = vld [vmem:[#allocation2 + $0x48] sm:$0xff]
      %v452 = vld [vmem:[#allocation2 + $0x50] sm:$0xff]
      %v453 = vld [vmem:[#allocation2 + $0x58] sm:$0xff]
      %v454 = vld [vmem:[#allocation2 + $0x60] sm:$0xff]
      %v455 = vld [vmem:[#allocation2 + $0x68] sm:$0xff]
      %v456 = vld [vmem:[#allocation2 + $0x70] sm:$0xff]
      %v457 = vld [vmem:[#allocation2 + $0x78] sm:$0xff]
      %v458 = vld [vmem:[#allocation2 + $0x80] sm:$0xff]
      %v459 = vld [vmem:[#allocation2 + $0x88] sm:$0xff]
      %v460 = vld [vmem:[#allocation2 + $0x90] sm:$0xff]
      %v461 = vld [vmem:[#allocation2 + $0x98] sm:$0xff]
      %v462 = vld [vmem:[#allocation2 + $0xa0] sm:$0xff]
      %v463 = vld [vmem:[#allocation2 + $0xa8] sm:$0xff]
      %v464 = vld [vmem:[#allocation2 + $0xb0] sm:$0xff]
      %v465 = vld [vmem:[#allocation2 + $0xb8] sm:$0xff]
      %v466 = vld [vmem:[#allocation2 + $0xc0] sm:$0xff]
      %v467 = vld [vmem:[#allocation2 + $0xc8] sm:$0xff]
      %v468 = vld [vmem:[#allocation2 + $0xd0] sm:$0xff]
      %v469 = vld [vmem:[#allocation2 + $0xd8] sm:$0xff]
      %v470 = vld [vmem:[#allocation2 + $0xe0] sm:$0xff]
      %v471 = vld [vmem:[#allocation2 + $0xe8] sm:$0xff]
      %v472 = vld [vmem:[#allocation2 + $0xf0] sm:$0xff]
      %v473 = vld [vmem:[#allocation2 + $0xf8] sm:$0xff]
      %v474 = vld [vmem:[#allocation2 + $0x100] sm:$0xff]
      %v475 = vld [vmem:[#allocation2 + $0x108] sm:$0xff]
      %v476 = vld [vmem:[#allocation2 + $0x110] sm:$0xff]
      %v477 = vld [vmem:[#allocation2 + $0x118] sm:$0xff]
      %v478 = vld [vmem:[#allocation2 + $0x120] sm:$0xff]
      %v479 = vld [vmem:[#allocation2 + $0x128] sm:$0xff]
      %v480 = vld [vmem:[#allocation2 + $0x130] sm:$0xff]
      %v481 = vld [vmem:[#allocation2 + $0x138] sm:$0xff]
      %v482 = vld [vmem:[#allocation2 + $0x140] sm:$0xff]
      %v483 = vld [vmem:[#allocation2 + $0x148] sm:$0xff]
      %v484 = vld [vmem:[#allocation2 + $0x150] sm:$0xff]
      %v485 = vld [vmem:[#allocation2 + $0x158] sm:$0xff]
      %v486 = vld [vmem:[#allocation2 + $0x160] sm:$0xff]
      %v487 = vld [vmem:[#allocation2 + $0x168] sm:$0xff]
      %v488 = vld [vmem:[#allocation2 + $0x170] sm:$0xff]
      %v489 = vld [vmem:[#allocation2 + $0x178] sm:$0xff]
      %v490 = vld [vmem:[#allocation2 + $0x180] sm:$0xff]
      %v491 = vld [vmem:[#allocation2 + $0x188] sm:$0xff]
      %v492 = vld [vmem:[#allocation2 + $0x190] sm:$0xff]
      %v493 = vld [vmem:[#allocation2 + $0x198] sm:$0xff]
      %v494 = vld [vmem:[#allocation2 + $0x1a0] sm:$0xff]
      %v495 = vld [vmem:[#allocation2 + $0x1a8] sm:$0xff]
      %v496 = vld [vmem:[#allocation2 + $0x1b0] sm:$0xff]
      %v497 = vld [vmem:[#allocation2 + $0x1b8] sm:$0xff]
      %v498 = vld [vmem:[#allocation2 + $0x1c0] sm:$0xff]
      %v499 = vld [vmem:[#allocation2 + $0x1c8] sm:$0xff]
      %v500 = vld [vmem:[#allocation2 + $0x1d0] sm:$0xff]
      %v501 = vld [vmem:[#allocation2 + $0x1d8] sm:$0xff]
      %v502 = vld [vmem:[#allocation2 + $0x1e0] sm:$0xff]
      %v503 = vld [vmem:[#allocation2 + $0x1e8] sm:$0xff]
      %v504 = vld [vmem:[#allocation2 + $0x1f0] sm:$0xff]
      %v505 = vld [vmem:[#allocation2 + $0x1f8] sm:$0xff]
      %v506 = vld [vmem:[#allocation2 + $0x200] sm:$0xff]
      %v507 = vld [vmem:[#allocation2 + $0x208] sm:$0xff]
      %v508 = vld [vmem:[#allocation2 + $0x210] sm:$0xff]
      %v509 = vld [vmem:[#allocation2 + $0x218] sm:$0xff]
      %v510 = vld [vmem:[#allocation2 + $0x220] sm:$0xff]
      %v511 = vld [vmem:[#allocation2 + $0x228] sm:$0xff]
      %v512 = vld [vmem:[#allocation2 + $0x230] sm:$0xff]
      %v513 = vld [vmem:[#allocation2 + $0x238] sm:$0xff]
      %v514 = vld [vmem:[#allocation2 + $0x240] sm:$0xff]
      %v515 = vld [vmem:[#allocation2 + $0x248] sm:$0xff]
      %v516 = vld [vmem:[#allocation2 + $0x250] sm:$0xff]
      %v517 = vld [vmem:[#allocation2 + $0x258] sm:$0xff]
      %v518 = vld [vmem:[#allocation2 + $0x260] sm:$0xff]
      %v519 = vld [vmem:[#allocation2 + $0x268] sm:$0xff]
      %v520 = vld [vmem:[#allocation2 + $0x270] sm:$0xff]
      %v521 = vld [vmem:[#allocation2 + $0x278] sm:$0xff]
      %v522 = vld [vmem:[#allocation2 + $0x280] sm:$0xff]
      %v523 = vld [vmem:[#allocation2 + $0x288] sm:$0xff]
      %v524 = vld [vmem:[#allocation2 + $0x290] sm:$0xff]
      %v525 = vld [vmem:[#allocation2 + $0x298] sm:$0xff]
      %v526 = vld [vmem:[#allocation2 + $0x2a0] sm:$0xff]
      %v527 = vld [vmem:[#allocation2 + $0x2a8] sm:$0xff]
      %v528 = vld [vmem:[#allocation2 + $0x2b0] sm:$0xff]
      %v529 = vld [vmem:[#allocation2 + $0x2b8] sm:$0xff]
      %v530 = vld [vmem:[#allocation2 + $0x2c0] sm:$0xff]
      %v531 = vld [vmem:[#allocation2 + $0x2c8] sm:$0xff]
      %v532 = vld [vmem:[#allocation2 + $0x2d0] sm:$0xff]
      %v533 = vld [vmem:[#allocation2 + $0x2d8] sm:$0xff]
      %v534 = vld [vmem:[#allocation2 + $0x2e0] sm:$0xff]
      %v535 = vld [vmem:[#allocation2 + $0x2e8] sm:$0xff]
      %v536 = vld [vmem:[#allocation2 + $0x2f0] sm:$0xff]
      %v537 = vld [vmem:[#allocation2 + $0x2f8] sm:$0xff]
      %v538 = vld [vmem:[#allocation2 + $0x300] sm:$0xff]
      %v539 = vld [vmem:[#allocation2 + $0x308] sm:$0xff]
      %v540 = vld [vmem:[#allocation2 + $0x310] sm:$0xff]
      %v541 = vld [vmem:[#allocation2 + $0x318] sm:$0xff]
      %v542 = vld [vmem:[#allocation2 + $0x320] sm:$0xff]
      %v543 = vld [vmem:[#allocation2 + $0x328] sm:$0xff]
      %v544 = vld [vmem:[#allocation2 + $0x330] sm:$0xff]
      %v545 = vld [vmem:[#allocation2 + $0x338] sm:$0xff]
      %v546 = vld [vmem:[#allocation2 + $0x340] sm:$0xff]
      %v547 = vld [vmem:[#allocation2 + $0x348] sm:$0xff]
      %v548 = vld [vmem:[#allocation2 + $0x350] sm:$0xff]
      %v549 = vld [vmem:[#allocation2 + $0x358] sm:$0xff]
      %v550 = vld [vmem:[#allocation2 + $0x360] sm:$0xff]
      %v551 = vld [vmem:[#allocation2 + $0x368] sm:$0xff]
      %v552 = vld [vmem:[#allocation2 + $0x370] sm:$0xff]
      %v553 = vld [vmem:[#allocation2 + $0x378] sm:$0xff]
      %v554 = vld [vmem:[#allocation2 + $0x380] sm:$0xff]
      %v555 = vld [vmem:[#allocation2 + $0x388] sm:$0xff]
      %v556 = vld [vmem:[#allocation2 + $0x390] sm:$0xff]
      %v557 = vld [vmem:[#allocation2 + $0x398] sm:$0xff]
      %v558 = vld [vmem:[#allocation2 + $0x3a0] sm:$0xff]
      %v559 = vld [vmem:[#allocation2 + $0x3a8] sm:$0xff]
      %v560 = vld [vmem:[#allocation2 + $0x3b0] sm:$0xff]
      %v561 = vld [vmem:[#allocation2 + $0x3b8] sm:$0xff]
      %v562 = vld [vmem:[#allocation2 + $0x3c0] sm:$0xff]
      %v563 = vld [vmem:[#allocation2 + $0x3c8] sm:$0xff]
      %v564 = vld [vmem:[#allocation2 + $0x3d0] sm:$0xff]
      %v565 = vld [vmem:[#allocation2 + $0x3d8] sm:$0xff]
      %v566 = vld [vmem:[#allocation2 + $0x3e0] sm:$0xff]
      %v567 = vld [vmem:[#allocation2 + $0x3e8] sm:$0xff]
      %v568 = vld [vmem:[#allocation2 + $0x3f0] sm:$0xff]
      %v569 = vld [vmem:[#allocation2 + $0x3f8] sm:$0xff]
      %v570 = vld [vmem:[%s281] sm:$0xff]
      %v571 = vld [vmem:[%s281 + $0x8] sm:$0xff]
      %v572 = vld [vmem:[%s281 + $0x10] sm:$0xf]
      %v573 = vld [vmem:[%s281 + $0x14] sm:$0xff]
      %v574 = vld [vmem:[%s281 + $0x1c] sm:$0xff]
      %v575 = vld [vmem:[%s281 + $0x24] sm:$0xf]
      %v576 = vld [vmem:[%s281 + $0x28] sm:$0xff]
      %v577 = vld [vmem:[%s281 + $0x30] sm:$0xff]
      %v578 = vld [vmem:[%s281 + $0x38] sm:$0xf]
      %v579 = vld [vmem:[%s281 + $0x3c] sm:$0xff]
      %v580 = vld [vmem:[%s281 + $0x44] sm:$0xff]
      %v581 = vld [vmem:[%s281 + $0x4c] sm:$0xf]
      %v582 = vld [vmem:[%s281 + $0x50] sm:$0xff]
      %v583 = vld [vmem:[%s281 + $0x58] sm:$0xff]
      %v584 = vld [vmem:[%s281 + $0x60] sm:$0xf]
      %v585 = vld [vmem:[%s281 + $0x64] sm:$0xff]
      %v586 = vld [vmem:[%s281 + $0x6c] sm:$0xff]
      %v587 = vld [vmem:[%s281 + $0x74] sm:$0xf]
      %v588 = vld [vmem:[%s281 + $0x78] sm:$0xff]
      %v589 = vld [vmem:[%s281 + $0x80] sm:$0xff]
      %v590 = vld [vmem:[%s281 + $0x88] sm:$0xf]
      %v591 = vld [vmem:[%s281 + $0x8c] sm:$0xff]
      %v592 = vld [vmem:[%s281 + $0x94] sm:$0xff]
      %v593 = vld [vmem:[%s281 + $0x9c] sm:$0xf]
      %v594 = vld [vmem:[%s281 + $0xa0] sm:$0xff]
      %v595 = vld [vmem:[%s281 + $0xa8] sm:$0xff]
      %v596 = vld [vmem:[%s281 + $0xb0] sm:$0xf]
      %v597 = vld [vmem:[%s281 + $0xb4] sm:$0xff]
      %v598 = vld [vmem:[%s281 + $0xbc] sm:$0xff]
      %v599 = vld [vmem:[%s281 + $0xc4] sm:$0xf]
      %v600 = vld [vmem:[%s281 + $0xc8] sm:$0xff]
      %v601 = vld [vmem:[%s281 + $0xd0] sm:$0xff]
      %v602 = vld [vmem:[%s281 + $0xd8] sm:$0xf]
      %v603 = vld [vmem:[%s281 + $0xdc] sm:$0xff]
      %v604 = vld [vmem:[%s281 + $0xe4] sm:$0xff]
      %v605 = vld [vmem:[%s281 + $0xec] sm:$0xf]
      %v606 = vld [vmem:[%s281 + $0xf0] sm:$0xff]
      %v607 = vld [vmem:[%s281 + $0xf8] sm:$0xff]
      %v608 = vld [vmem:[%s281 + $0x100] sm:$0xf]
      %v609 = vld [vmem:[%s281 + $0x104] sm:$0xff]
      %v610 = vld [vmem:[%s281 + $0x10c] sm:$0xff]
      %v611 = vld [vmem:[%s281 + $0x114] sm:$0xf]
      %v612 = vld [vmem:[%s281 + $0x118] sm:$0xff]
      %v613 = vld [vmem:[%s281 + $0x120] sm:$0xff]
      %v614 = vld [vmem:[%s281 + $0x128] sm:$0xf]
      %v615 = vld [vmem:[%s281 + $0x12c] sm:$0xff]
      %v616 = vld [vmem:[%s281 + $0x134] sm:$0xff]
      %v617 = vld [vmem:[%s281 + $0x13c] sm:$0xf]
      %v618 = vld [vmem:[%s281 + $0x140] sm:$0xff]
      %v619 = vld [vmem:[%s281 + $0x148] sm:$0xff]
      %v620 = vld [vmem:[%s281 + $0x150] sm:$0xf]
      %v621 = vld [vmem:[%s281 + $0x154] sm:$0xff]
      %v622 = vld [vmem:[%s281 + $0x15c] sm:$0xff]
      %v623 = vld [vmem:[%s281 + $0x164] sm:$0xf]
      %v624 = vld [vmem:[%s281 + $0x168] sm:$0xff]
      %v625 = vld [vmem:[%s281 + $0x170] sm:$0xff]
      %v626 = vld [vmem:[%s281 + $0x178] sm:$0xf]
      %v627 = vld [vmem:[%s281 + $0x17c] sm:$0xff]
      %v628 = vld [vmem:[%s281 + $0x184] sm:$0xff]
      %v629 = vld [vmem:[%s281 + $0x18c] sm:$0xf]
      %v630 = vld [vmem:[%s281 + $0x190] sm:$0xff]
      %v631 = vld [vmem:[%s281 + $0x198] sm:$0xff]
      %v632 = vld [vmem:[%s281 + $0x1a0] sm:$0xf]
      %v633 = vld [vmem:[%s281 + $0x1a4] sm:$0xff]
      %v634 = vld [vmem:[%s281 + $0x1ac] sm:$0xff]
      %v635 = vld [vmem:[%s281 + $0x1b4] sm:$0xf]
      %v636 = vld [vmem:[%s281 + $0x1b8] sm:$0xff]
      %v637 = vld [vmem:[%s281 + $0x1c0] sm:$0xff]
      %v638 = vld [vmem:[%s281 + $0x1c8] sm:$0xf]
      %v639 = vld [vmem:[%s281 + $0x1cc] sm:$0xff]
      %v640 = vld [vmem:[%s281 + $0x1d4] sm:$0xff]
      %v641 = vld [vmem:[%s281 + $0x1dc] sm:$0xf]
      %v642 = vld [vmem:[%s281 + $0x1e0] sm:$0xff]
      %v643 = vld [vmem:[%s281 + $0x1e8] sm:$0xff]
      %v644 = vld [vmem:[%s281 + $0x1f0] sm:$0xf]
      %v645 = vld [vmem:[%s281 + $0x1f4] sm:$0xff]
      %v646 = vld [vmem:[%s281 + $0x1fc] sm:$0xff]
      %v647 = vld [vmem:[%s281 + $0x204] sm:$0xf]
      %v648 = vld [vmem:[%s281 + $0x208] sm:$0xff]
      %v649 = vld [vmem:[%s281 + $0x210] sm:$0xff]
      %v650 = vld [vmem:[%s281 + $0x218] sm:$0xf]
      %v651 = vld [vmem:[%s281 + $0x21c] sm:$0xff]
      %v652 = vld [vmem:[%s281 + $0x224] sm:$0xff]
      %v653 = vld [vmem:[%s281 + $0x22c] sm:$0xf]
      %v654 = vld [vmem:[%s281 + $0x230] sm:$0xff]
      %v655 = vld [vmem:[%s281 + $0x238] sm:$0xff]
      %v656 = vld [vmem:[%s281 + $0x240] sm:$0xf]
      %v657 = vld [vmem:[%s281 + $0x244] sm:$0xff]
      %v658 = vld [vmem:[%s281 + $0x24c] sm:$0xff]
      %v659 = vld [vmem:[%s281 + $0x254] sm:$0xf]
      %v660 = vld [vmem:[%s281 + $0x258] sm:$0xff]
      %v661 = vld [vmem:[%s281 + $0x260] sm:$0xff]
      %v662 = vld [vmem:[%s281 + $0x268] sm:$0xf]
      %v663 = vld [vmem:[%s281 + $0x26c] sm:$0xff]
      %v664 = vld [vmem:[%s281 + $0x274] sm:$0xff]
      %v665 = vld [vmem:[%s281 + $0x27c] sm:$0xf]
      %v666 = vld [vmem:[%s281 + $0x280] sm:$0xff]
      %v667 = vld [vmem:[%s281 + $0x288] sm:$0xff]
      %v668 = vld [vmem:[%s281 + $0x290] sm:$0xf]
      %v669 = vld [vmem:[%s281 + $0x294] sm:$0xff]
      %v670 = vld [vmem:[%s281 + $0x29c] sm:$0xff]
      %v671 = vld [vmem:[%s281 + $0x2a4] sm:$0xf]
      %v672 = vld [vmem:[%s281 + $0x2a8] sm:$0xff]
      %v673 = vld [vmem:[%s281 + $0x2b0] sm:$0xff]
      %v674 = vld [vmem:[%s281 + $0x2b8] sm:$0xf]
      %v675 = vld [vmem:[%s281 + $0x2bc] sm:$0xff]
      %v676 = vld [vmem:[%s281 + $0x2c4] sm:$0xff]
      %v677 = vld [vmem:[%s281 + $0x2cc] sm:$0xf]
      %v678 = vld [vmem:[%s281 + $0x2d0] sm:$0xff]
      %v679 = vld [vmem:[%s281 + $0x2d8] sm:$0xff]
      %v680 = vld [vmem:[%s281 + $0x2e0] sm:$0xf]
      %v681 = vld [vmem:[%s281 + $0x2e4] sm:$0xff]
      %v682 = vld [vmem:[%s281 + $0x2ec] sm:$0xff]
      %v683 = vld [vmem:[%s281 + $0x2f4] sm:$0xf]
      %v684 = vld [vmem:[%s281 + $0x2f8] sm:$0xff]
      %v685 = vld [vmem:[%s281 + $0x300] sm:$0xff]
      %v686 = vld [vmem:[%s281 + $0x308] sm:$0xf]
      %v687 = vld [vmem:[%s281 + $0x30c] sm:$0xff]
      %v688 = vld [vmem:[%s281 + $0x314] sm:$0xff]
      %v689 = vld [vmem:[%s281 + $0x31c] sm:$0xf]
      %v690 = vld [vmem:[%s281 + $0x320] sm:$0xff]
      %v691 = vld [vmem:[%s281 + $0x328] sm:$0xff]
      %v692 = vld [vmem:[%s281 + $0x330] sm:$0xf]
      %v693 = vld [vmem:[%s281 + $0x334] sm:$0xff]
      %v694 = vld [vmem:[%s281 + $0x33c] sm:$0xff]
      %v695 = vld [vmem:[%s281 + $0x344] sm:$0xf]
      %v696 = vld [vmem:[%s281 + $0x348] sm:$0xff]
      %v697 = vld [vmem:[%s281 + $0x350] sm:$0xff]
      %v698 = vld [vmem:[%s281 + $0x358] sm:$0xf]
      %v699 = vld [vmem:[%s281 + $0x35c] sm:$0xff]
      %v700 = vld [vmem:[%s281 + $0x364] sm:$0xff]
      %v701 = vld [vmem:[%s281 + $0x36c] sm:$0xf]
      %v702 = vld [vmem:[%s281 + $0x370] sm:$0xff]
      %v703 = vld [vmem:[%s281 + $0x378] sm:$0xff]
      %v704 = vld [vmem:[%s281 + $0x380] sm:$0xf]
      %v705 = vld [vmem:[%s281 + $0x384] sm:$0xff]
      %v706 = vld [vmem:[%s281 + $0x38c] sm:$0xff]
      %v707 = vld [vmem:[%s281 + $0x394] sm:$0xf]
      %v708 = vld [vmem:[%s281 + $0x398] sm:$0xff]
      %v709 = vld [vmem:[%s281 + $0x3a0] sm:$0xff]
      %v710 = vld [vmem:[%s281 + $0x3a8] sm:$0xf]
      %v711 = vld [vmem:[%s281 + $0x3ac] sm:$0xff]
      %v712 = vld [vmem:[%s281 + $0x3b4] sm:$0xff]
      %v713 = vld [vmem:[%s281 + $0x3bc] sm:$0xf]
      %v714 = vld [vmem:[%s281 + $0x3c0] sm:$0xff]
      %v715 = vld [vmem:[%s281 + $0x3c8] sm:$0xff]
      %v716 = vld [vmem:[%s281 + $0x3d0] sm:$0xf]
      %v717 = vld [vmem:[%s281 + $0x3d4] sm:$0xff]
      %v718 = vld [vmem:[%s281 + $0x3dc] sm:$0xff]
      %v719 = vld [vmem:[%s281 + $0x3e4] sm:$0xf]
      %v720 = vld [vmem:[%s281 + $0x3e8] sm:$0xff]
      %v721 = vld [vmem:[%s281 + $0x3f0] sm:$0xff]
      %v722 = vld [vmem:[%s281 + $0x3f8] sm:$0xf]
      %v723 = vld [vmem:[%s281 + $0x3fc] sm:$0xff]
      %v724 = vld [vmem:[%s281 + $0x404] sm:$0xff]
      %v725 = vld [vmem:[%s281 + $0x40c] sm:$0xf]
      %v726 = vld [vmem:[%s281 + $0x410] sm:$0xff]
      %v727 = vld [vmem:[%s281 + $0x418] sm:$0xff]
      %v728 = vld [vmem:[%s281 + $0x420] sm:$0xf]
      %v729 = vld [vmem:[%s281 + $0x424] sm:$0xff]
      %v730 = vld [vmem:[%s281 + $0x42c] sm:$0xff]
      %v731 = vld [vmem:[%s281 + $0x434] sm:$0xf]
      %v732 = vld [vmem:[%s281 + $0x438] sm:$0xff]
      %v733 = vld [vmem:[%s281 + $0x440] sm:$0xff]
      %v734 = vld [vmem:[%s281 + $0x448] sm:$0xf]
      %v735 = vld [vmem:[%s281 + $0x44c] sm:$0xff]
      %v736 = vld [vmem:[%s281 + $0x454] sm:$0xff]
      %v737 = vld [vmem:[%s281 + $0x45c] sm:$0xf]
      %v738 = vld [vmem:[%s281 + $0x460] sm:$0xff]
      %v739 = vld [vmem:[%s281 + $0x468] sm:$0xff]
      %v740 = vld [vmem:[%s281 + $0x470] sm:$0xf]
      %v741 = vld [vmem:[%s281 + $0x474] sm:$0xff]
      %v742 = vld [vmem:[%s281 + $0x47c] sm:$0xff]
      %v743 = vld [vmem:[%s281 + $0x484] sm:$0xf]
      %v744 = vld [vmem:[%s281 + $0x488] sm:$0xff]
      %v745 = vld [vmem:[%s281 + $0x490] sm:$0xff]
      %v746 = vld [vmem:[%s281 + $0x498] sm:$0xf]
      %v747 = vld [vmem:[%s281 + $0x49c] sm:$0xff]
      %v748 = vld [vmem:[%s281 + $0x4a4] sm:$0xff]
      %v749 = vld [vmem:[%s281 + $0x4ac] sm:$0xf]
      %v750 = vld [vmem:[%s281 + $0x4b0] sm:$0xff]
      %v751 = vld [vmem:[%s281 + $0x4b8] sm:$0xff]
      %v752 = vld [vmem:[%s281 + $0x4c0] sm:$0xf]
      %v753 = vld [vmem:[%s281 + $0x4c4] sm:$0xff]
      %v754 = vld [vmem:[%s281 + $0x4cc] sm:$0xff]
      %v755 = vld [vmem:[%s281 + $0x4d4] sm:$0xf]
      %v756 = vld [vmem:[%s281 + $0x4d8] sm:$0xff]
      %v757 = vld [vmem:[%s281 + $0x4e0] sm:$0xff]
      %v758 = vld [vmem:[%s281 + $0x4e8] sm:$0xf]
      %v759 = vld [vmem:[%s281 + $0x4ec] sm:$0xff]
      %v760 = vld [vmem:[%s281 + $0x4f4] sm:$0xff]
      %v761 = vld [vmem:[%s281 + $0x4fc] sm:$0xf]
      %v762 = vld [vmem:[%s281 + $0x500] sm:$0xff]
      %v763 = vld [vmem:[%s281 + $0x508] sm:$0xff]
      %v764 = vld [vmem:[%s281 + $0x510] sm:$0xf]
      %v765 = vld [vmem:[%s281 + $0x514] sm:$0xff]
      %v766 = vld [vmem:[%s281 + $0x51c] sm:$0xff]
      %v767 = vld [vmem:[%s281 + $0x524] sm:$0xf]
      %v768 = vld [vmem:[%s281 + $0x528] sm:$0xff]
      %v769 = vld [vmem:[%s281 + $0x530] sm:$0xff]
      %v770 = vld [vmem:[%s281 + $0x538] sm:$0xf]
      %v771 = vld [vmem:[%s281 + $0x53c] sm:$0xff]
      %v772 = vld [vmem:[%s281 + $0x544] sm:$0xff]
      %v773 = vld [vmem:[%s281 + $0x54c] sm:$0xf]
      %v774 = vld [vmem:[%s281 + $0x550] sm:$0xff]
      %v775 = vld [vmem:[%s281 + $0x558] sm:$0xff]
      %v776 = vld [vmem:[%s281 + $0x560] sm:$0xf]
      %v777 = vld [vmem:[%s281 + $0x564] sm:$0xff]
      %v778 = vld [vmem:[%s281 + $0x56c] sm:$0xff]
      %v779 = vld [vmem:[%s281 + $0x574] sm:$0xf]
      %v780 = vld [vmem:[%s281 + $0x578] sm:$0xff]
      %v781 = vld [vmem:[%s281 + $0x580] sm:$0xff]
      %v782 = vld [vmem:[%s281 + $0x588] sm:$0xf]
      %v783 = vld [vmem:[%s281 + $0x58c] sm:$0xff]
      %v784 = vld [vmem:[%s281 + $0x594] sm:$0xff]
      %v785 = vld [vmem:[%s281 + $0x59c] sm:$0xf]
      %v786 = vld [vmem:[%s281 + $0x5a0] sm:$0xff]
      %v787 = vld [vmem:[%s281 + $0x5a8] sm:$0xff]
      %v788 = vld [vmem:[%s281 + $0x5b0] sm:$0xf]
      %v789 = vld [vmem:[%s281 + $0x5b4] sm:$0xff]
      %v790 = vld [vmem:[%s281 + $0x5bc] sm:$0xff]
      %v791 = vld [vmem:[%s281 + $0x5c4] sm:$0xf]
      %v792 = vld [vmem:[%s281 + $0x5c8] sm:$0xff]
      %v793 = vld [vmem:[%s281 + $0x5d0] sm:$0xff]
      %v794 = vld [vmem:[%s281 + $0x5d8] sm:$0xf]
      %v795 = vld [vmem:[%s281 + $0x5dc] sm:$0xff]
      %v796 = vld [vmem:[%s281 + $0x5e4] sm:$0xff]
      %v797 = vld [vmem:[%s281 + $0x5ec] sm:$0xf]
      %v798 = vld [vmem:[%s281 + $0x5f0] sm:$0xff]
      %v799 = vld [vmem:[%s281 + $0x5f8] sm:$0xff]
      %v800 = vld [vmem:[%s281 + $0x600] sm:$0xf]
      %v801 = vld [vmem:[%s281 + $0x604] sm:$0xff]
      %v802 = vld [vmem:[%s281 + $0x60c] sm:$0xff]
      %v803 = vld [vmem:[%s281 + $0x614] sm:$0xf]
      %v804 = vld [vmem:[%s281 + $0x618] sm:$0xff]
      %v805 = vld [vmem:[%s281 + $0x620] sm:$0xff]
      %v806 = vld [vmem:[%s281 + $0x628] sm:$0xf]
      %v807 = vld [vmem:[%s281 + $0x62c] sm:$0xff]
      %v808 = vld [vmem:[%s281 + $0x634] sm:$0xff]
      %v809 = vld [vmem:[%s281 + $0x63c] sm:$0xf]
      %v810 = vld [vmem:[%s281 + $0x640] sm:$0xff]
      %v811 = vld [vmem:[%s281 + $0x648] sm:$0xff]
      %v812 = vld [vmem:[%s281 + $0x650] sm:$0xf]
      %v813 = vld [vmem:[%s281 + $0x654] sm:$0xff]
      %v814 = vld [vmem:[%s281 + $0x65c] sm:$0xff]
      %v815 = vld [vmem:[%s281 + $0x664] sm:$0xf]
      %v816 = vld [vmem:[%s281 + $0x668] sm:$0xff]
      %v817 = vld [vmem:[%s281 + $0x670] sm:$0xff]
      %v818 = vld [vmem:[%s281 + $0x678] sm:$0xf]
      %v819 = vld [vmem:[%s281 + $0x67c] sm:$0xff]
      %v820 = vld [vmem:[%s281 + $0x684] sm:$0xff]
      %v821 = vld [vmem:[%s281 + $0x68c] sm:$0xf]
      %v822 = vld [vmem:[%s281 + $0x690] sm:$0xff]
      %v823 = vld [vmem:[%s281 + $0x698] sm:$0xff]
      %v824 = vld [vmem:[%s281 + $0x6a0] sm:$0xf]
      %v825 = vld [vmem:[%s281 + $0x6a4] sm:$0xff]
      %v826 = vld [vmem:[%s281 + $0x6ac] sm:$0xff]
      %v827 = vld [vmem:[%s281 + $0x6b4] sm:$0xf]
      %v828 = vld [vmem:[%s281 + $0x6b8] sm:$0xff]
      %v829 = vld [vmem:[%s281 + $0x6c0] sm:$0xff]
      %v830 = vld [vmem:[%s281 + $0x6c8] sm:$0xf]
      %v831 = vld [vmem:[%s281 + $0x6cc] sm:$0xff]
      %v832 = vld [vmem:[%s281 + $0x6d4] sm:$0xff]
      %v833 = vld [vmem:[%s281 + $0x6dc] sm:$0xf]
      %v834 = vld [vmem:[%s281 + $0x6e0] sm:$0xff]
      %v835 = vld [vmem:[%s281 + $0x6e8] sm:$0xff]
      %v836 = vld [vmem:[%s281 + $0x6f0] sm:$0xf]
      %v837 = vld [vmem:[%s281 + $0x6f4] sm:$0xff]
      %v838 = vld [vmem:[%s281 + $0x6fc] sm:$0xff]
      %v839 = vld [vmem:[%s281 + $0x704] sm:$0xf]
      %v840 = vld [vmem:[%s281 + $0x708] sm:$0xff]
      %v841 = vld [vmem:[%s281 + $0x710] sm:$0xff]
      %v842 = vld [vmem:[%s281 + $0x718] sm:$0xf]
      %v843 = vld [vmem:[%s281 + $0x71c] sm:$0xff]
      %v844 = vld [vmem:[%s281 + $0x724] sm:$0xff]
      %v845 = vld [vmem:[%s281 + $0x72c] sm:$0xf]
      %v846 = vld [vmem:[%s281 + $0x730] sm:$0xff]
      %v847 = vld [vmem:[%s281 + $0x738] sm:$0xff]
      %v848 = vld [vmem:[%s281 + $0x740] sm:$0xf]
      %v849 = vld [vmem:[%s281 + $0x744] sm:$0xff]
      %v850 = vld [vmem:[%s281 + $0x74c] sm:$0xff]
      %v851 = vld [vmem:[%s281 + $0x754] sm:$0xf]
      %v852 = vld [vmem:[%s281 + $0x758] sm:$0xff]
      %v853 = vld [vmem:[%s281 + $0x760] sm:$0xff]
      %v854 = vld [vmem:[%s281 + $0x768] sm:$0xf]
      %v855 = vld [vmem:[%s281 + $0x76c] sm:$0xff]
      %v856 = vld [vmem:[%s281 + $0x774] sm:$0xff]
      %v857 = vld [vmem:[%s281 + $0x77c] sm:$0xf]
      %v858 = vld [vmem:[%s281 + $0x780] sm:$0xff]
      %v859 = vld [vmem:[%s281 + $0x788] sm:$0xff]
      %v860 = vld [vmem:[%s281 + $0x790] sm:$0xf]
      %v861 = vld [vmem:[%s281 + $0x794] sm:$0xff]
      %v862 = vld [vmem:[%s281 + $0x79c] sm:$0xff]
      %v863 = vld [vmem:[%s281 + $0x7a4] sm:$0xf]
      %v864 = vld [vmem:[%s281 + $0x7a8] sm:$0xff]
      %v865 = vld [vmem:[%s281 + $0x7b0] sm:$0xff]
      %v866 = vld [vmem:[%s281 + $0x7b8] sm:$0xf]
      %v867 = vld [vmem:[%s281 + $0x7bc] sm:$0xff]
      %v868 = vld [vmem:[%s281 + $0x7c4] sm:$0xff]
      %v869 = vld [vmem:[%s281 + $0x7cc] sm:$0xf]
      %v870 = vld [vmem:[%s281 + $0x7d0] sm:$0xff]
      %v871 = vld [vmem:[%s281 + $0x7d8] sm:$0xff]
      %v872 = vld [vmem:[%s281 + $0x7e0] sm:$0xf]
      %v873 = vld [vmem:[%s281 + $0x7e4] sm:$0xff]
      %v874 = vld [vmem:[%s281 + $0x7ec] sm:$0xff]
      %v875 = vld [vmem:[%s281 + $0x7f4] sm:$0xf]
      %v876 = vld [vmem:[%s281 + $0x7f8] sm:$0xff]
      %v877 = vld [vmem:[%s281 + $0x800] sm:$0xff]
      %v878 = vld [vmem:[%s281 + $0x808] sm:$0xf]
      %v879 = vld [vmem:[%s281 + $0x80c] sm:$0xff]
      %v880 = vld [vmem:[%s281 + $0x814] sm:$0xff]
      %v881 = vld [vmem:[%s281 + $0x81c] sm:$0xf]
      %v882 = vld [vmem:[%s281 + $0x820] sm:$0xff]
      %v883 = vld [vmem:[%s281 + $0x828] sm:$0xff]
      %v884 = vld [vmem:[%s281 + $0x830] sm:$0xf]
      %v885 = vld [vmem:[%s281 + $0x834] sm:$0xff]
      %v886 = vld [vmem:[%s281 + $0x83c] sm:$0xff]
      %v887 = vld [vmem:[%s281 + $0x844] sm:$0xf]
      %v888 = vld [vmem:[%s281 + $0x848] sm:$0xff]
      %v889 = vld [vmem:[%s281 + $0x850] sm:$0xff]
      %v890 = vld [vmem:[%s281 + $0x858] sm:$0xf]
      %v891 = vld [vmem:[%s281 + $0x85c] sm:$0xff]
      %v892 = vld [vmem:[%s281 + $0x864] sm:$0xff]
      %v893 = vld [vmem:[%s281 + $0x86c] sm:$0xf]
      %v894 = vld [vmem:[%s281 + $0x870] sm:$0xff]
      %v895 = vld [vmem:[%s281 + $0x878] sm:$0xff]
      %v896 = vld [vmem:[%s281 + $0x880] sm:$0xf]
      %v897 = vld [vmem:[%s281 + $0x884] sm:$0xff]
      %v898 = vld [vmem:[%s281 + $0x88c] sm:$0xff]
      %v899 = vld [vmem:[%s281 + $0x894] sm:$0xf]
      %v900 = vld [vmem:[%s281 + $0x898] sm:$0xff]
      %v901 = vld [vmem:[%s281 + $0x8a0] sm:$0xff]
      %v902 = vld [vmem:[%s281 + $0x8a8] sm:$0xf]
      %v903 = vld [vmem:[%s281 + $0x8ac] sm:$0xff]
      %v904 = vld [vmem:[%s281 + $0x8b4] sm:$0xff]
      %v905 = vld [vmem:[%s281 + $0x8bc] sm:$0xf]
      %v906 = vld [vmem:[%s281 + $0x8c0] sm:$0xff]
      %v907 = vld [vmem:[%s281 + $0x8c8] sm:$0xff]
      %v908 = vld [vmem:[%s281 + $0x8d0] sm:$0xf]
      %v909 = vld [vmem:[%s281 + $0x8d4] sm:$0xff]
      %v910 = vld [vmem:[%s281 + $0x8dc] sm:$0xff]
      %v911 = vld [vmem:[%s281 + $0x8e4] sm:$0xf]
      %v912 = vld [vmem:[%s281 + $0x8e8] sm:$0xff]
      %v913 = vld [vmem:[%s281 + $0x8f0] sm:$0xff]
      %v914 = vld [vmem:[%s281 + $0x8f8] sm:$0xf]
      %v915 = vld [vmem:[%s281 + $0x8fc] sm:$0xff]
      %v916 = vld [vmem:[%s281 + $0x904] sm:$0xff]
      %v917 = vld [vmem:[%s281 + $0x90c] sm:$0xf]
      %v918 = vld [vmem:[%s281 + $0x910] sm:$0xff]
      %v919 = vld [vmem:[%s281 + $0x918] sm:$0xff]
      %v920 = vld [vmem:[%s281 + $0x920] sm:$0xf]
      %v921 = vld [vmem:[%s281 + $0x924] sm:$0xff]
      %v922 = vld [vmem:[%s281 + $0x92c] sm:$0xff]
      %v923 = vld [vmem:[%s281 + $0x934] sm:$0xf]
      %v924 = vld [vmem:[%s281 + $0x938] sm:$0xff]
      %v925 = vld [vmem:[%s281 + $0x940] sm:$0xff]
      %v926 = vld [vmem:[%s281 + $0x948] sm:$0xf]
      %v927 = vld [vmem:[%s281 + $0x94c] sm:$0xff]
      %v928 = vld [vmem:[%s281 + $0x954] sm:$0xff]
      %v929 = vld [vmem:[%s281 + $0x95c] sm:$0xf]
      %v930 = vld [vmem:[%s281 + $0x960] sm:$0xff]
      %v931 = vld [vmem:[%s281 + $0x968] sm:$0xff]
      %v932 = vld [vmem:[%s281 + $0x970] sm:$0xf]
      %v933 = vld [vmem:[%s281 + $0x974] sm:$0xff]
      %v934 = vld [vmem:[%s281 + $0x97c] sm:$0xff]
      %v935 = vld [vmem:[%s281 + $0x984] sm:$0xf]
      %v936 = vld [vmem:[%s281 + $0x988] sm:$0xff]
      %v937 = vld [vmem:[%s281 + $0x990] sm:$0xff]
      %v938 = vld [vmem:[%s281 + $0x998] sm:$0xf]
      %v939 = vld [vmem:[%s281 + $0x99c] sm:$0xff]
      %v940 = vld [vmem:[%s281 + $0x9a4] sm:$0xff]
      %v941 = vld [vmem:[%s281 + $0x9ac] sm:$0xf]
      %v942 = vld [vmem:[%s281 + $0x9b0] sm:$0xff]
      %v943 = vld [vmem:[%s281 + $0x9b8] sm:$0xff]
      %v944 = vld [vmem:[%s281 + $0x9c0] sm:$0xf]
      %v945 = vld [vmem:[%s281 + $0x9c4] sm:$0xff]
      %v946 = vld [vmem:[%s281 + $0x9cc] sm:$0xff]
      %v947 = vld [vmem:[%s281 + $0x9d4] sm:$0xf]
      %v948 = vld [vmem:[%s281 + $0x9d8] sm:$0xff]
      %v949 = vld [vmem:[%s281 + $0x9e0] sm:$0xff]
      %v950 = vld [vmem:[%s281 + $0x9e8] sm:$0xf]
      %v951 = vld [vmem:[%s281 + $0x9ec] sm:$0xff]
      %v952 = vld [vmem:[%s281 + $0x9f4] sm:$0xff]
      %v953 = vld [vmem:[%s281 + $0x9fc] sm:$0xf]
      %v954 = vld [vmem:[%s291] sm:$0xf]
      %v955 = vld [vmem:[%s291 + $0x4] sm:$0xf]
      %v956 = vld [vmem:[%s291 + $0x8] sm:$0xf]
      %v957 = vld [vmem:[%s291 + $0xc] sm:$0xf]
      %v958 = vld [vmem:[%s291 + $0x10] sm:$0xf]
      %v959 = vld [vmem:[%s291 + $0x14] sm:$0xf]
      %v960 = vld [vmem:[%s291 + $0x18] sm:$0xf]
      %v961 = vld [vmem:[%s291 + $0x1c] sm:$0xf]
      %v962 = vld [vmem:[%s291 + $0x20] sm:$0xf]
      %v963 = vld [vmem:[%s291 + $0x24] sm:$0xf]
      %v964 = vld [vmem:[%s291 + $0x28] sm:$0xf]
      %v965 = vld [vmem:[%s291 + $0x2c] sm:$0xf]
      %v966 = vld [vmem:[%s291 + $0x30] sm:$0xf]
      %v967 = vld [vmem:[%s291 + $0x34] sm:$0xf]
      %v968 = vld [vmem:[%s291 + $0x38] sm:$0xf]
      %v969 = vld [vmem:[%s291 + $0x3c] sm:$0xf]
      %v970 = vld [vmem:[%s291 + $0x40] sm:$0xf]
      %v971 = vld [vmem:[%s291 + $0x44] sm:$0xf]
      %v972 = vld [vmem:[%s291 + $0x48] sm:$0xf]
      %v973 = vld [vmem:[%s291 + $0x4c] sm:$0xf]
      %v974 = vld [vmem:[%s291 + $0x50] sm:$0xf]
      %v975 = vld [vmem:[%s291 + $0x54] sm:$0xf]
      %v976 = vld [vmem:[%s291 + $0x58] sm:$0xf]
      %v977 = vld [vmem:[%s291 + $0x5c] sm:$0xf]
      %v978 = vld [vmem:[%s291 + $0x60] sm:$0xf]
      %v979 = vld [vmem:[%s291 + $0x64] sm:$0xf]
      %v980 = vld [vmem:[%s291 + $0x68] sm:$0xf]
      %v981 = vld [vmem:[%s291 + $0x6c] sm:$0xf]
      %v982 = vld [vmem:[%s291 + $0x70] sm:$0xf]
      %v983 = vld [vmem:[%s291 + $0x74] sm:$0xf]
      %v984 = vld [vmem:[%s291 + $0x78] sm:$0xf]
      %v985 = vld [vmem:[%s291 + $0x7c] sm:$0xf]
      %v986 = vld [vmem:[%s291 + $0x80] sm:$0xf]
      %v987 = vld [vmem:[%s291 + $0x84] sm:$0xf]
      %v988 = vld [vmem:[%s291 + $0x88] sm:$0xf]
      %v989 = vld [vmem:[%s291 + $0x8c] sm:$0xf]
      %v990 = vld [vmem:[%s291 + $0x90] sm:$0xf]
      %v991 = vld [vmem:[%s291 + $0x94] sm:$0xf]
      %v992 = vld [vmem:[%s291 + $0x98] sm:$0xf]
      %v993 = vld [vmem:[%s291 + $0x9c] sm:$0xf]
      %v994 = vld [vmem:[%s291 + $0xa0] sm:$0xf]
      %v995 = vld [vmem:[%s291 + $0xa4] sm:$0xf]
      %v996 = vld [vmem:[%s291 + $0xa8] sm:$0xf]
      %v997 = vld [vmem:[%s291 + $0xac] sm:$0xf]
      %v998 = vld [vmem:[%s291 + $0xb0] sm:$0xf]
      %v999 = vld [vmem:[%s291 + $0xb4] sm:$0xf]
      %v1000 = vld [vmem:[%s291 + $0xb8] sm:$0xf]
      %v1001 = vld [vmem:[%s291 + $0xbc] sm:$0xf]
      %v1002 = vld [vmem:[%s291 + $0xc0] sm:$0xf]
      %v1003 = vld [vmem:[%s291 + $0xc4] sm:$0xf]
      %v1004 = vld [vmem:[%s291 + $0xc8] sm:$0xf]
      %v1005 = vld [vmem:[%s291 + $0xcc] sm:$0xf]
      %v1006 = vld [vmem:[%s291 + $0xd0] sm:$0xf]
      %v1007 = vld [vmem:[%s291 + $0xd4] sm:$0xf]
      %v1008 = vld [vmem:[%s291 + $0xd8] sm:$0xf]
      %v1009 = vld [vmem:[%s291 + $0xdc] sm:$0xf]
      %v1010 = vld [vmem:[%s291 + $0xe0] sm:$0xf]
      %v1011 = vld [vmem:[%s291 + $0xe4] sm:$0xf]
      %v1012 = vld [vmem:[%s291 + $0xe8] sm:$0xf]
      %v1013 = vld [vmem:[%s291 + $0xec] sm:$0xf]
      %v1014 = vld [vmem:[%s291 + $0xf0] sm:$0xf]
      %v1015 = vld [vmem:[%s291 + $0xf4] sm:$0xf]
      %v1016 = vld [vmem:[%s291 + $0xf8] sm:$0xf]
      %v1017 = vld [vmem:[%s291 + $0xfc] sm:$0xf]
      %v1018 = vld [vmem:[%s291 + $0x100] sm:$0xf]
      %v1019 = vld [vmem:[%s291 + $0x104] sm:$0xf]
      %v1020 = vld [vmem:[%s291 + $0x108] sm:$0xf]
      %v1021 = vld [vmem:[%s291 + $0x10c] sm:$0xf]
      %v1022 = vld [vmem:[%s291 + $0x110] sm:$0xf]
      %v1023 = vld [vmem:[%s291 + $0x114] sm:$0xf]
      %v1024 = vld [vmem:[%s291 + $0x118] sm:$0xf]
      %v1025 = vld [vmem:[%s291 + $0x11c] sm:$0xf]
      %v1026 = vld [vmem:[%s291 + $0x120] sm:$0xf]
      %v1027 = vld [vmem:[%s291 + $0x124] sm:$0x3]
      %v1412 = vunpack.c.l.b16 %v570
      %v1413 = vunpack.c.h.b16 %v570
      %v1414 = vunpack.c.l.b16 %v571
      %v1415 = vunpack.c.h.b16 %v571
      %v1416 = vunpack.c.l.b16 %v572
      %v1417 = vunpack.c.l.b16 %v573
      %v1418 = vunpack.c.h.b16 %v573
      %v1419 = vunpack.c.l.b16 %v574
      %v1420 = vunpack.c.h.b16 %v574
      %v1421 = vunpack.c.l.b16 %v575
      %v1422 = vunpack.c.l.b16 %v576
      %v1423 = vunpack.c.h.b16 %v576
      %v1424 = vunpack.c.l.b16 %v577
      %v1425 = vunpack.c.h.b16 %v577
      %v1426 = vunpack.c.l.b16 %v578
      %v1427 = vunpack.c.l.b16 %v579
      %v1428 = vunpack.c.h.b16 %v579
      %v1429 = vunpack.c.l.b16 %v580
      %v1430 = vunpack.c.h.b16 %v580
      %v1431 = vunpack.c.l.b16 %v581
      %v1432 = vunpack.c.l.b16 %v582
      %v1433 = vunpack.c.h.b16 %v582
      %v1434 = vunpack.c.l.b16 %v583
      %v1435 = vunpack.c.h.b16 %v583
      %v1436 = vunpack.c.l.b16 %v584
      %v1437 = vunpack.c.l.b16 %v585
      %v1438 = vunpack.c.h.b16 %v585
      %v1439 = vunpack.c.l.b16 %v586
      %v1440 = vunpack.c.h.b16 %v586
      %v1441 = vunpack.c.l.b16 %v587
      %v1442 = vunpack.c.l.b16 %v588
      %v1443 = vunpack.c.h.b16 %v588
      %v1444 = vunpack.c.l.b16 %v589
      %v1445 = vunpack.c.h.b16 %v589
      %v1446 = vunpack.c.l.b16 %v590
      %v1447 = vunpack.c.l.b16 %v591
      %v1448 = vunpack.c.h.b16 %v591
      %v1449 = vunpack.c.l.b16 %v592
      %v1450 = vunpack.c.h.b16 %v592
      %v1451 = vunpack.c.l.b16 %v593
      %v1452 = vunpack.c.l.b16 %v594
      %v1453 = vunpack.c.h.b16 %v594
      %v1454 = vunpack.c.l.b16 %v595
      %v1455 = vunpack.c.h.b16 %v595
      %v1456 = vunpack.c.l.b16 %v596
      %v1457 = vunpack.c.l.b16 %v597
      %v1458 = vunpack.c.h.b16 %v597
      %v1459 = vunpack.c.l.b16 %v598
      %v1460 = vunpack.c.h.b16 %v598
      %v1461 = vunpack.c.l.b16 %v599
      %v1462 = vunpack.c.l.b16 %v600
      %v1463 = vunpack.c.h.b16 %v600
      %v1464 = vunpack.c.l.b16 %v601
      %v1465 = vunpack.c.h.b16 %v601
      %v1466 = vunpack.c.l.b16 %v602
      %v1467 = vunpack.c.l.b16 %v603
      %v1468 = vunpack.c.h.b16 %v603
      %v1469 = vunpack.c.l.b16 %v604
      %v1470 = vunpack.c.h.b16 %v604
      %v1471 = vunpack.c.l.b16 %v605
      %v1472 = vunpack.c.l.b16 %v606
      %v1473 = vunpack.c.h.b16 %v606
      %v1474 = vunpack.c.l.b16 %v607
      %v1475 = vunpack.c.h.b16 %v607
      %v1476 = vunpack.c.l.b16 %v608
      %v1477 = vunpack.c.l.b16 %v609
      %v1478 = vunpack.c.h.b16 %v609
      %v1479 = vunpack.c.l.b16 %v610
      %v1480 = vunpack.c.h.b16 %v610
      %v1481 = vunpack.c.l.b16 %v611
      %v1482 = vunpack.c.l.b16 %v612
      %v1483 = vunpack.c.h.b16 %v612
      %v1484 = vunpack.c.l.b16 %v613
      %v1485 = vunpack.c.h.b16 %v613
      %v1486 = vunpack.c.l.b16 %v614
      %v1487 = vunpack.c.l.b16 %v615
      %v1488 = vunpack.c.h.b16 %v615
      %v1489 = vunpack.c.l.b16 %v616
      %v1490 = vunpack.c.h.b16 %v616
      %v1491 = vunpack.c.l.b16 %v617
      %v1492 = vunpack.c.l.b16 %v618
      %v1493 = vunpack.c.h.b16 %v618
      %v1494 = vunpack.c.l.b16 %v619
      %v1495 = vunpack.c.h.b16 %v619
      %v1496 = vunpack.c.l.b16 %v620
      %v1497 = vunpack.c.l.b16 %v621
      %v1498 = vunpack.c.h.b16 %v621
      %v1499 = vunpack.c.l.b16 %v622
      %v1500 = vunpack.c.h.b16 %v622
      %v1501 = vunpack.c.l.b16 %v623
      %v1502 = vunpack.c.l.b16 %v624
      %v1503 = vunpack.c.h.b16 %v624
      %v1504 = vunpack.c.l.b16 %v625
      %v1505 = vunpack.c.h.b16 %v625
      %v1506 = vunpack.c.l.b16 %v626
      %v1507 = vunpack.c.l.b16 %v627
      %v1508 = vunpack.c.h.b16 %v627
      %v1509 = vunpack.c.l.b16 %v628
      %v1510 = vunpack.c.h.b16 %v628
      %v1511 = vunpack.c.l.b16 %v629
      %v1512 = vunpack.c.l.b16 %v630
      %v1513 = vunpack.c.h.b16 %v630
      %v1514 = vunpack.c.l.b16 %v631
      %v1515 = vunpack.c.h.b16 %v631
      %v1516 = vunpack.c.l.b16 %v632
      %v1517 = vunpack.c.l.b16 %v633
      %v1518 = vunpack.c.h.b16 %v633
      %v1519 = vunpack.c.l.b16 %v634
      %v1520 = vunpack.c.h.b16 %v634
      %v1521 = vunpack.c.l.b16 %v635
      %v1522 = vunpack.c.l.b16 %v636
      %v1523 = vunpack.c.h.b16 %v636
      %v1524 = vunpack.c.l.b16 %v637
      %v1525 = vunpack.c.h.b16 %v637
      %v1526 = vunpack.c.l.b16 %v638
      %v1527 = vunpack.c.l.b16 %v639
      %v1528 = vunpack.c.h.b16 %v639
      %v1529 = vunpack.c.l.b16 %v640
      %v1530 = vunpack.c.h.b16 %v640
      %v1531 = vunpack.c.l.b16 %v641
      %v1532 = vunpack.c.l.b16 %v642
      %v1533 = vunpack.c.h.b16 %v642
      %v1534 = vunpack.c.l.b16 %v643
      %v1535 = vunpack.c.h.b16 %v643
      %v1536 = vunpack.c.l.b16 %v644
      %v1537 = vunpack.c.l.b16 %v645
      %v1538 = vunpack.c.h.b16 %v645
      %v1539 = vunpack.c.l.b16 %v646
      %v1540 = vunpack.c.h.b16 %v646
      %v1541 = vunpack.c.l.b16 %v647
      %v1542 = vunpack.c.l.b16 %v648
      %v1543 = vunpack.c.h.b16 %v648
      %v1544 = vunpack.c.l.b16 %v649
      %v1545 = vunpack.c.h.b16 %v649
      %v1546 = vunpack.c.l.b16 %v650
      %v1547 = vunpack.c.l.b16 %v651
      %v1548 = vunpack.c.h.b16 %v651
      %v1549 = vunpack.c.l.b16 %v652
      %v1550 = vunpack.c.h.b16 %v652
      %v1551 = vunpack.c.l.b16 %v653
      %v1552 = vunpack.c.l.b16 %v654
      %v1553 = vunpack.c.h.b16 %v654
      %v1554 = vunpack.c.l.b16 %v655
      %v1555 = vunpack.c.h.b16 %v655
      %v1556 = vunpack.c.l.b16 %v656
      %v1557 = vunpack.c.l.b16 %v657
      %v1558 = vunpack.c.h.b16 %v657
      %v1559 = vunpack.c.l.b16 %v658
      %v1560 = vunpack.c.h.b16 %v658
      %v1561 = vunpack.c.l.b16 %v659
      %v1562 = vunpack.c.l.b16 %v660
      %v1563 = vunpack.c.h.b16 %v660
      %v1564 = vunpack.c.l.b16 %v661
      %v1565 = vunpack.c.h.b16 %v661
      %v1566 = vunpack.c.l.b16 %v662
      %v1567 = vunpack.c.l.b16 %v663
      %v1568 = vunpack.c.h.b16 %v663
      %v1569 = vunpack.c.l.b16 %v664
      %v1570 = vunpack.c.h.b16 %v664
      %v1571 = vunpack.c.l.b16 %v665
      %v1572 = vunpack.c.l.b16 %v666
      %v1573 = vunpack.c.h.b16 %v666
      %v1574 = vunpack.c.l.b16 %v667
      %v1575 = vunpack.c.h.b16 %v667
      %v1576 = vunpack.c.l.b16 %v668
      %v1577 = vunpack.c.l.b16 %v669
      %v1578 = vunpack.c.h.b16 %v669
      %v1579 = vunpack.c.l.b16 %v670
      %v1580 = vunpack.c.h.b16 %v670
      %v1581 = vunpack.c.l.b16 %v671
      %v1582 = vunpack.c.l.b16 %v672
      %v1583 = vunpack.c.h.b16 %v672
      %v1584 = vunpack.c.l.b16 %v673
      %v1585 = vunpack.c.h.b16 %v673
      %v1586 = vunpack.c.l.b16 %v674
      %v1587 = vunpack.c.l.b16 %v675
      %v1588 = vunpack.c.h.b16 %v675
      %v1589 = vunpack.c.l.b16 %v676
      %v1590 = vunpack.c.h.b16 %v676
      %v1591 = vunpack.c.l.b16 %v677
      %v1592 = vunpack.c.l.b16 %v678
      %v1593 = vunpack.c.h.b16 %v678
      %v1594 = vunpack.c.l.b16 %v679
      %v1595 = vunpack.c.h.b16 %v679
      %v1596 = vunpack.c.l.b16 %v680
      %v1597 = vunpack.c.l.b16 %v681
      %v1598 = vunpack.c.h.b16 %v681
      %v1599 = vunpack.c.l.b16 %v682
      %v1600 = vunpack.c.h.b16 %v682
      %v1601 = vunpack.c.l.b16 %v683
      %v1602 = vunpack.c.l.b16 %v684
      %v1603 = vunpack.c.h.b16 %v684
      %v1604 = vunpack.c.l.b16 %v685
      %v1605 = vunpack.c.h.b16 %v685
      %v1606 = vunpack.c.l.b16 %v686
      %v1607 = vunpack.c.l.b16 %v687
      %v1608 = vunpack.c.h.b16 %v687
      %v1609 = vunpack.c.l.b16 %v688
      %v1610 = vunpack.c.h.b16 %v688
      %v1611 = vunpack.c.l.b16 %v689
      %v1612 = vunpack.c.l.b16 %v690
      %v1613 = vunpack.c.h.b16 %v690
      %v1614 = vunpack.c.l.b16 %v691
      %v1615 = vunpack.c.h.b16 %v691
      %v1616 = vunpack.c.l.b16 %v692
      %v1617 = vunpack.c.l.b16 %v693
      %v1618 = vunpack.c.h.b16 %v693
      %v1619 = vunpack.c.l.b16 %v694
      %v1620 = vunpack.c.h.b16 %v694
      %v1621 = vunpack.c.l.b16 %v695
      %v1622 = vunpack.c.l.b16 %v696
      %v1623 = vunpack.c.h.b16 %v696
      %v1624 = vunpack.c.l.b16 %v697
      %v1625 = vunpack.c.h.b16 %v697
      %v1626 = vunpack.c.l.b16 %v698
      %v1627 = vunpack.c.l.b16 %v699
      %v1628 = vunpack.c.h.b16 %v699
      %v1629 = vunpack.c.l.b16 %v700
      %v1630 = vunpack.c.h.b16 %v700
      %v1631 = vunpack.c.l.b16 %v701
      %v1632 = vunpack.c.l.b16 %v702
      %v1633 = vunpack.c.h.b16 %v702
      %v1634 = vunpack.c.l.b16 %v703
      %v1635 = vunpack.c.h.b16 %v703
      %v1636 = vunpack.c.l.b16 %v704
      %v1637 = vunpack.c.l.b16 %v705
      %v1638 = vunpack.c.h.b16 %v705
      %v1639 = vunpack.c.l.b16 %v706
      %v1640 = vunpack.c.h.b16 %v706
      %v1641 = vunpack.c.l.b16 %v707
      %v1642 = vunpack.c.l.b16 %v708
      %v1643 = vunpack.c.h.b16 %v708
      %v1644 = vunpack.c.l.b16 %v709
      %v1645 = vunpack.c.h.b16 %v709
      %v1646 = vunpack.c.l.b16 %v710
      %v1647 = vunpack.c.l.b16 %v711
      %v1648 = vunpack.c.h.b16 %v711
      %v1649 = vunpack.c.l.b16 %v712
      %v1650 = vunpack.c.h.b16 %v712
      %v1651 = vunpack.c.l.b16 %v713
      %v1652 = vunpack.c.l.b16 %v714
      %v1653 = vunpack.c.h.b16 %v714
      %v1654 = vunpack.c.l.b16 %v715
      %v1655 = vunpack.c.h.b16 %v715
      %v1656 = vunpack.c.l.b16 %v716
      %v1657 = vunpack.c.l.b16 %v717
      %v1658 = vunpack.c.h.b16 %v717
      %v1659 = vunpack.c.l.b16 %v718
      %v1660 = vunpack.c.h.b16 %v718
      %v1661 = vunpack.c.l.b16 %v719
      %v1662 = vunpack.c.l.b16 %v720
      %v1663 = vunpack.c.h.b16 %v720
      %v1664 = vunpack.c.l.b16 %v721
      %v1665 = vunpack.c.h.b16 %v721
      %v1666 = vunpack.c.l.b16 %v722
      %v1667 = vunpack.c.l.b16 %v723
      %v1668 = vunpack.c.h.b16 %v723
      %v1669 = vunpack.c.l.b16 %v724
      %v1670 = vunpack.c.h.b16 %v724
      %v1671 = vunpack.c.l.b16 %v725
      %v1672 = vunpack.c.l.b16 %v726
      %v1673 = vunpack.c.h.b16 %v726
      %v1674 = vunpack.c.l.b16 %v727
      %v1675 = vunpack.c.h.b16 %v727
      %v1676 = vunpack.c.l.b16 %v728
      %v1677 = vunpack.c.l.b16 %v729
      %v1678 = vunpack.c.h.b16 %v729
      %v1679 = vunpack.c.l.b16 %v730
      %v1680 = vunpack.c.h.b16 %v730
      %v1681 = vunpack.c.l.b16 %v731
      %v1682 = vunpack.c.l.b16 %v732
      %v1683 = vunpack.c.h.b16 %v732
      %v1684 = vunpack.c.l.b16 %v733
      %v1685 = vunpack.c.h.b16 %v733
      %v1686 = vunpack.c.l.b16 %v734
      %v1687 = vunpack.c.l.b16 %v735
      %v1688 = vunpack.c.h.b16 %v735
      %v1689 = vunpack.c.l.b16 %v736
      %v1690 = vunpack.c.h.b16 %v736
      %v1691 = vunpack.c.l.b16 %v737
      %v1692 = vunpack.c.l.b16 %v738
      %v1693 = vunpack.c.h.b16 %v738
      %v1694 = vunpack.c.l.b16 %v739
      %v1695 = vunpack.c.h.b16 %v739
      %v1696 = vunpack.c.l.b16 %v740
      %v1697 = vunpack.c.l.b16 %v741
      %v1698 = vunpack.c.h.b16 %v741
      %v1699 = vunpack.c.l.b16 %v742
      %v1700 = vunpack.c.h.b16 %v742
      %v1701 = vunpack.c.l.b16 %v743
      %v1702 = vunpack.c.l.b16 %v744
      %v1703 = vunpack.c.h.b16 %v744
      %v1704 = vunpack.c.l.b16 %v745
      %v1705 = vunpack.c.h.b16 %v745
      %v1706 = vunpack.c.l.b16 %v746
      %v1707 = vunpack.c.l.b16 %v747
      %v1708 = vunpack.c.h.b16 %v747
      %v1709 = vunpack.c.l.b16 %v748
      %v1710 = vunpack.c.h.b16 %v748
      %v1711 = vunpack.c.l.b16 %v749
      %v1712 = vunpack.c.l.b16 %v750
      %v1713 = vunpack.c.h.b16 %v750
      %v1714 = vunpack.c.l.b16 %v751
      %v1715 = vunpack.c.h.b16 %v751
      %v1716 = vunpack.c.l.b16 %v752
      %v1717 = vunpack.c.l.b16 %v753
      %v1718 = vunpack.c.h.b16 %v753
      %v1719 = vunpack.c.l.b16 %v754
      %v1720 = vunpack.c.h.b16 %v754
      %v1721 = vunpack.c.l.b16 %v755
      %v1722 = vunpack.c.l.b16 %v756
      %v1723 = vunpack.c.h.b16 %v756
      %v1724 = vunpack.c.l.b16 %v757
      %v1725 = vunpack.c.h.b16 %v757
      %v1726 = vunpack.c.l.b16 %v758
      %v1727 = vunpack.c.l.b16 %v759
      %v1728 = vunpack.c.h.b16 %v759
      %v1729 = vunpack.c.l.b16 %v760
      %v1730 = vunpack.c.h.b16 %v760
      %v1731 = vunpack.c.l.b16 %v761
      %v1732 = vunpack.c.l.b16 %v762
      %v1733 = vunpack.c.h.b16 %v762
      %v1734 = vunpack.c.l.b16 %v763
      %v1735 = vunpack.c.h.b16 %v763
      %v1736 = vunpack.c.l.b16 %v764
      %v1737 = vunpack.c.l.b16 %v765
      %v1738 = vunpack.c.h.b16 %v765
      %v1739 = vunpack.c.l.b16 %v766
      %v1740 = vunpack.c.h.b16 %v766
      %v1741 = vunpack.c.l.b16 %v767
      %v1742 = vunpack.c.l.b16 %v768
      %v1743 = vunpack.c.h.b16 %v768
      %v1744 = vunpack.c.l.b16 %v769
      %v1745 = vunpack.c.h.b16 %v769
      %v1746 = vunpack.c.l.b16 %v770
      %v1747 = vunpack.c.l.b16 %v771
      %v1748 = vunpack.c.h.b16 %v771
      %v1749 = vunpack.c.l.b16 %v772
      %v1750 = vunpack.c.h.b16 %v772
      %v1751 = vunpack.c.l.b16 %v773
      %v1752 = vunpack.c.l.b16 %v774
      %v1753 = vunpack.c.h.b16 %v774
      %v1754 = vunpack.c.l.b16 %v775
      %v1755 = vunpack.c.h.b16 %v775
      %v1756 = vunpack.c.l.b16 %v776
      %v1757 = vunpack.c.l.b16 %v777
      %v1758 = vunpack.c.h.b16 %v777
      %v1759 = vunpack.c.l.b16 %v778
      %v1760 = vunpack.c.h.b16 %v778
      %v1761 = vunpack.c.l.b16 %v779
      %v1762 = vunpack.c.l.b16 %v780
      %v1763 = vunpack.c.h.b16 %v780
      %v1764 = vunpack.c.l.b16 %v781
      %v1765 = vunpack.c.h.b16 %v781
      %v1766 = vunpack.c.l.b16 %v782
      %v1767 = vunpack.c.l.b16 %v783
      %v1768 = vunpack.c.h.b16 %v783
      %v1769 = vunpack.c.l.b16 %v784
      %v1770 = vunpack.c.h.b16 %v784
      %v1771 = vunpack.c.l.b16 %v785
      %v1772 = vunpack.c.l.b16 %v786
      %v1773 = vunpack.c.h.b16 %v786
      %v1774 = vunpack.c.l.b16 %v787
      %v1775 = vunpack.c.h.b16 %v787
      %v1776 = vunpack.c.l.b16 %v788
      %v1777 = vunpack.c.l.b16 %v789
      %v1778 = vunpack.c.h.b16 %v789
      %v1779 = vunpack.c.l.b16 %v790
      %v1780 = vunpack.c.h.b16 %v790
      %v1781 = vunpack.c.l.b16 %v791
      %v1782 = vunpack.c.l.b16 %v792
      %v1783 = vunpack.c.h.b16 %v792
      %v1784 = vunpack.c.l.b16 %v793
      %v1785 = vunpack.c.h.b16 %v793
      %v1786 = vunpack.c.l.b16 %v794
      %v1787 = vunpack.c.l.b16 %v795
      %v1788 = vunpack.c.h.b16 %v795
      %v1789 = vunpack.c.l.b16 %v796
      %v1790 = vunpack.c.h.b16 %v796
      %v1791 = vunpack.c.l.b16 %v797
      %v1792 = vunpack.c.l.b16 %v798
      %v1793 = vunpack.c.h.b16 %v798
      %v1794 = vunpack.c.l.b16 %v799
      %v1795 = vunpack.c.h.b16 %v799
      %v1796 = vunpack.c.l.b16 %v800
      %v1797 = vunpack.c.l.b16 %v801
      %v1798 = vunpack.c.h.b16 %v801
      %v1799 = vunpack.c.l.b16 %v802
      %v1800 = vunpack.c.h.b16 %v802
      %v1801 = vunpack.c.l.b16 %v803
      %v1802 = vunpack.c.l.b16 %v804
      %v1803 = vunpack.c.h.b16 %v804
      %v1804 = vunpack.c.l.b16 %v805
      %v1805 = vunpack.c.h.b16 %v805
      %v1806 = vunpack.c.l.b16 %v806
      %v1807 = vunpack.c.l.b16 %v807
      %v1808 = vunpack.c.h.b16 %v807
      %v1809 = vunpack.c.l.b16 %v808
      %v1810 = vunpack.c.h.b16 %v808
      %v1811 = vunpack.c.l.b16 %v809
      %v1812 = vunpack.c.l.b16 %v810
      %v1813 = vunpack.c.h.b16 %v810
      %v1814 = vunpack.c.l.b16 %v811
      %v1815 = vunpack.c.h.b16 %v811
      %v1816 = vunpack.c.l.b16 %v812
      %v1817 = vunpack.c.l.b16 %v813
      %v1818 = vunpack.c.h.b16 %v813
      %v1819 = vunpack.c.l.b16 %v814
      %v1820 = vunpack.c.h.b16 %v814
      %v1821 = vunpack.c.l.b16 %v815
      %v1822 = vunpack.c.l.b16 %v816
      %v1823 = vunpack.c.h.b16 %v816
      %v1824 = vunpack.c.l.b16 %v817
      %v1825 = vunpack.c.h.b16 %v817
      %v1826 = vunpack.c.l.b16 %v818
      %v1827 = vunpack.c.l.b16 %v819
      %v1828 = vunpack.c.h.b16 %v819
      %v1829 = vunpack.c.l.b16 %v820
      %v1830 = vunpack.c.h.b16 %v820
      %v1831 = vunpack.c.l.b16 %v821
      %v1832 = vunpack.c.l.b16 %v822
      %v1833 = vunpack.c.h.b16 %v822
      %v1834 = vunpack.c.l.b16 %v823
      %v1835 = vunpack.c.h.b16 %v823
      %v1836 = vunpack.c.l.b16 %v824
      %v1837 = vunpack.c.l.b16 %v825
      %v1838 = vunpack.c.h.b16 %v825
      %v1839 = vunpack.c.l.b16 %v826
      %v1840 = vunpack.c.h.b16 %v826
      %v1841 = vunpack.c.l.b16 %v827
      %v1842 = vunpack.c.l.b16 %v828
      %v1843 = vunpack.c.h.b16 %v828
      %v1844 = vunpack.c.l.b16 %v829
      %v1845 = vunpack.c.h.b16 %v829
      %v1846 = vunpack.c.l.b16 %v830
      %v1847 = vunpack.c.l.b16 %v831
      %v1848 = vunpack.c.h.b16 %v831
      %v1849 = vunpack.c.l.b16 %v832
      %v1850 = vunpack.c.h.b16 %v832
      %v1851 = vunpack.c.l.b16 %v833
      %v1852 = vunpack.c.l.b16 %v834
      %v1853 = vunpack.c.h.b16 %v834
      %v1854 = vunpack.c.l.b16 %v835
      %v1855 = vunpack.c.h.b16 %v835
      %v1856 = vunpack.c.l.b16 %v836
      %v1857 = vunpack.c.l.b16 %v837
      %v1858 = vunpack.c.h.b16 %v837
      %v1859 = vunpack.c.l.b16 %v838
      %v1860 = vunpack.c.h.b16 %v838
      %v1861 = vunpack.c.l.b16 %v839
      %v1862 = vunpack.c.l.b16 %v840
      %v1863 = vunpack.c.h.b16 %v840
      %v1864 = vunpack.c.l.b16 %v841
      %v1865 = vunpack.c.h.b16 %v841
      %v1866 = vunpack.c.l.b16 %v842
      %v1867 = vunpack.c.l.b16 %v843
      %v1868 = vunpack.c.h.b16 %v843
      %v1869 = vunpack.c.l.b16 %v844
      %v1870 = vunpack.c.h.b16 %v844
      %v1871 = vunpack.c.l.b16 %v845
      %v1872 = vunpack.c.l.b16 %v846
      %v1873 = vunpack.c.h.b16 %v846
      %v1874 = vunpack.c.l.b16 %v847
      %v1875 = vunpack.c.h.b16 %v847
      %v1876 = vunpack.c.l.b16 %v848
      %v1877 = vunpack.c.l.b16 %v849
      %v1878 = vunpack.c.h.b16 %v849
      %v1879 = vunpack.c.l.b16 %v850
      %v1880 = vunpack.c.h.b16 %v850
      %v1881 = vunpack.c.l.b16 %v851
      %v1882 = vunpack.c.l.b16 %v852
      %v1883 = vunpack.c.h.b16 %v852
      %v1884 = vunpack.c.l.b16 %v853
      %v1885 = vunpack.c.h.b16 %v853
      %v1886 = vunpack.c.l.b16 %v854
      %v1887 = vunpack.c.l.b16 %v855
      %v1888 = vunpack.c.h.b16 %v855
      %v1889 = vunpack.c.l.b16 %v856
      %v1890 = vunpack.c.h.b16 %v856
      %v1891 = vunpack.c.l.b16 %v857
      %v1892 = vunpack.c.l.b16 %v858
      %v1893 = vunpack.c.h.b16 %v858
      %v1894 = vunpack.c.l.b16 %v859
      %v1895 = vunpack.c.h.b16 %v859
      %v1896 = vunpack.c.l.b16 %v860
      %v1897 = vunpack.c.l.b16 %v861
      %v1898 = vunpack.c.h.b16 %v861
      %v1899 = vunpack.c.l.b16 %v862
      %v1900 = vunpack.c.h.b16 %v862
      %v1901 = vunpack.c.l.b16 %v863
      %v1902 = vunpack.c.l.b16 %v864
      %v1903 = vunpack.c.h.b16 %v864
      %v1904 = vunpack.c.l.b16 %v865
      %v1905 = vunpack.c.h.b16 %v865
      %v1906 = vunpack.c.l.b16 %v866
      %v1907 = vunpack.c.l.b16 %v867
      %v1908 = vunpack.c.h.b16 %v867
      %v1909 = vunpack.c.l.b16 %v868
      %v1910 = vunpack.c.h.b16 %v868
      %v1911 = vunpack.c.l.b16 %v869
      %v1912 = vunpack.c.l.b16 %v870
      %v1913 = vunpack.c.h.b16 %v870
      %v1914 = vunpack.c.l.b16 %v871
      %v1915 = vunpack.c.h.b16 %v871
      %v1916 = vunpack.c.l.b16 %v872
      %v1917 = vunpack.c.l.b16 %v873
      %v1918 = vunpack.c.h.b16 %v873
      %v1919 = vunpack.c.l.b16 %v874
      %v1920 = vunpack.c.h.b16 %v874
      %v1921 = vunpack.c.l.b16 %v875
      %v1922 = vunpack.c.l.b16 %v876
      %v1923 = vunpack.c.h.b16 %v876
      %v1924 = vunpack.c.l.b16 %v877
      %v1925 = vunpack.c.h.b16 %v877
      %v1926 = vunpack.c.l.b16 %v878
      %v1927 = vunpack.c.l.b16 %v879
      %v1928 = vunpack.c.h.b16 %v879
      %v1929 = vunpack.c.l.b16 %v880
      %v1930 = vunpack.c.h.b16 %v880
      %v1931 = vunpack.c.l.b16 %v881
      %v1932 = vunpack.c.l.b16 %v882
      %v1933 = vunpack.c.h.b16 %v882
      %v1934 = vunpack.c.l.b16 %v883
      %v1935 = vunpack.c.h.b16 %v883
      %v1936 = vunpack.c.l.b16 %v884
      %v1937 = vunpack.c.l.b16 %v885
      %v1938 = vunpack.c.h.b16 %v885
      %v1939 = vunpack.c.l.b16 %v886
      %v1940 = vunpack.c.h.b16 %v886
      %v1941 = vunpack.c.l.b16 %v887
      %v1942 = vunpack.c.l.b16 %v888
      %v1943 = vunpack.c.h.b16 %v888
      %v1944 = vunpack.c.l.b16 %v889
      %v1945 = vunpack.c.h.b16 %v889
      %v1946 = vunpack.c.l.b16 %v890
      %v1947 = vunpack.c.l.b16 %v891
      %v1948 = vunpack.c.h.b16 %v891
      %v1949 = vunpack.c.l.b16 %v892
      %v1950 = vunpack.c.h.b16 %v892
      %v1951 = vunpack.c.l.b16 %v893
      %v1952 = vunpack.c.l.b16 %v894
      %v1953 = vunpack.c.h.b16 %v894
      %v1954 = vunpack.c.l.b16 %v895
      %v1955 = vunpack.c.h.b16 %v895
      %v1956 = vunpack.c.l.b16 %v896
      %v1957 = vunpack.c.l.b16 %v897
      %v1958 = vunpack.c.h.b16 %v897
      %v1959 = vunpack.c.l.b16 %v898
      %v1960 = vunpack.c.h.b16 %v898
      %v1961 = vunpack.c.l.b16 %v899
      %v1962 = vunpack.c.l.b16 %v900
      %v1963 = vunpack.c.h.b16 %v900
      %v1964 = vunpack.c.l.b16 %v901
      %v1965 = vunpack.c.h.b16 %v901
      %v1966 = vunpack.c.l.b16 %v902
      %v1967 = vunpack.c.l.b16 %v903
      %v1968 = vunpack.c.h.b16 %v903
      %v1969 = vunpack.c.l.b16 %v904
      %v1970 = vunpack.c.h.b16 %v904
      %v1971 = vunpack.c.l.b16 %v905
      %v1972 = vunpack.c.l.b16 %v906
      %v1973 = vunpack.c.h.b16 %v906
      %v1974 = vunpack.c.l.b16 %v907
      %v1975 = vunpack.c.h.b16 %v907
      %v1976 = vunpack.c.l.b16 %v908
      %v1977 = vunpack.c.l.b16 %v909
      %v1978 = vunpack.c.h.b16 %v909
      %v1979 = vunpack.c.l.b16 %v910
      %v1980 = vunpack.c.h.b16 %v910
      %v1981 = vunpack.c.l.b16 %v911
      %v1982 = vunpack.c.l.b16 %v912
      %v1983 = vunpack.c.h.b16 %v912
      %v1984 = vunpack.c.l.b16 %v913
      %v1985 = vunpack.c.h.b16 %v913
      %v1986 = vunpack.c.l.b16 %v914
      %v1987 = vunpack.c.l.b16 %v915
      %v1988 = vunpack.c.h.b16 %v915
      %v1989 = vunpack.c.l.b16 %v916
      %v1990 = vunpack.c.h.b16 %v916
      %v1991 = vunpack.c.l.b16 %v917
      %v1992 = vunpack.c.l.b16 %v918
      %v1993 = vunpack.c.h.b16 %v918
      %v1994 = vunpack.c.l.b16 %v919
      %v1995 = vunpack.c.h.b16 %v919
      %v1996 = vunpack.c.l.b16 %v920
      %v1997 = vunpack.c.l.b16 %v921
      %v1998 = vunpack.c.h.b16 %v921
      %v1999 = vunpack.c.l.b16 %v922
      %v2000 = vunpack.c.h.b16 %v922
      %v2001 = vunpack.c.l.b16 %v923
      %v2002 = vunpack.c.l.b16 %v924
      %v2003 = vunpack.c.h.b16 %v924
      %v2004 = vunpack.c.l.b16 %v925
      %v2005 = vunpack.c.h.b16 %v925
      %v2006 = vunpack.c.l.b16 %v926
      %v2007 = vunpack.c.l.b16 %v927
      %v2008 = vunpack.c.h.b16 %v927
      %v2009 = vunpack.c.l.b16 %v928
      %v2010 = vunpack.c.h.b16 %v928
      %v2011 = vunpack.c.l.b16 %v929
      %v2012 = vunpack.c.l.b16 %v930
      %v2013 = vunpack.c.h.b16 %v930
      %v2014 = vunpack.c.l.b16 %v931
      %v2015 = vunpack.c.h.b16 %v931
      %v2016 = vunpack.c.l.b16 %v932
      %v2017 = vunpack.c.l.b16 %v933
      %v2018 = vunpack.c.h.b16 %v933
      %v2019 = vunpack.c.l.b16 %v934
      %v2020 = vunpack.c.h.b16 %v934
      %v2021 = vunpack.c.l.b16 %v935
      %v2022 = vunpack.c.l.b16 %v936
      %v2023 = vunpack.c.h.b16 %v936
      %v2024 = vunpack.c.l.b16 %v937
      %v2025 = vunpack.c.h.b16 %v937
      %v2026 = vunpack.c.l.b16 %v938
      %v2027 = vunpack.c.l.b16 %v939
      %v2028 = vunpack.c.h.b16 %v939
      %v2029 = vunpack.c.l.b16 %v940
      %v2030 = vunpack.c.h.b16 %v940
      %v2031 = vunpack.c.l.b16 %v941
      %v2032 = vunpack.c.l.b16 %v942
      %v2033 = vunpack.c.h.b16 %v942
      %v2034 = vunpack.c.l.b16 %v943
      %v2035 = vunpack.c.h.b16 %v943
      %v2036 = vunpack.c.l.b16 %v944
      %v2037 = vunpack.c.l.b16 %v945
      %v2038 = vunpack.c.h.b16 %v945
      %v2039 = vunpack.c.l.b16 %v946
      %v2040 = vunpack.c.h.b16 %v946
      %v2041 = vunpack.c.l.b16 %v947
      %v2042 = vunpack.c.l.b16 %v948
      %v2043 = vunpack.c.h.b16 %v948
      %v2044 = vunpack.c.l.b16 %v949
      %v2045 = vunpack.c.h.b16 %v949
      %v2046 = vunpack.c.l.b16 %v950
      %v2047 = vunpack.c.l.b16 %v951
      %v2048 = vunpack.c.h.b16 %v951
      %v2049 = vunpack.c.l.b16 %v952
      %v2050 = vunpack.c.h.b16 %v952
      %v2051 = vunpack.c.l.b16 %v953
      %v2052 = vpack.c.b16 %v1417, %v1412
      %v2053 = vpack.c.b16 %v1418, %v1413
      %v2054 = vpack.c.b16 %v1419, %v1414
      %v2055 = vpack.c.b16 %v1420, %v1415
      %v2056 = vpack.c.b16 %v1421, %v1416
      %v2057 = vpack.c.b16 %v1427, %v1422
      %v2058 = vpack.c.b16 %v1428, %v1423
      %v2059 = vpack.c.b16 %v1429, %v1424
      %v2060 = vpack.c.b16 %v1430, %v1425
      %v2061 = vpack.c.b16 %v1431, %v1426
      %v2062 = vpack.c.b16 %v1437, %v1432
      %v2063 = vpack.c.b16 %v1438, %v1433
      %v2064 = vpack.c.b16 %v1439, %v1434
      %v2065 = vpack.c.b16 %v1440, %v1435
      %v2066 = vpack.c.b16 %v1441, %v1436
      %v2067 = vpack.c.b16 %v1447, %v1442
      %v2068 = vpack.c.b16 %v1448, %v1443
      %v2069 = vpack.c.b16 %v1449, %v1444
      %v2070 = vpack.c.b16 %v1450, %v1445
      %v2071 = vpack.c.b16 %v1451, %v1446
      %v2072 = vpack.c.b16 %v1457, %v1452
      %v2073 = vpack.c.b16 %v1458, %v1453
      %v2074 = vpack.c.b16 %v1459, %v1454
      %v2075 = vpack.c.b16 %v1460, %v1455
      %v2076 = vpack.c.b16 %v1461, %v1456
      %v2077 = vpack.c.b16 %v1467, %v1462
      %v2078 = vpack.c.b16 %v1468, %v1463
      %v2079 = vpack.c.b16 %v1469, %v1464
      %v2080 = vpack.c.b16 %v1470, %v1465
      %v2081 = vpack.c.b16 %v1471, %v1466
      %v2082 = vpack.c.b16 %v1477, %v1472
      %v2083 = vpack.c.b16 %v1478, %v1473
      %v2084 = vpack.c.b16 %v1479, %v1474
      %v2085 = vpack.c.b16 %v1480, %v1475
      %v2086 = vpack.c.b16 %v1481, %v1476
      %v2087 = vpack.c.b16 %v1487, %v1482
      %v2088 = vpack.c.b16 %v1488, %v1483
      %v2089 = vpack.c.b16 %v1489, %v1484
      %v2090 = vpack.c.b16 %v1490, %v1485
      %v2091 = vpack.c.b16 %v1491, %v1486
      %v2092 = vpack.c.b16 %v1497, %v1492
      %v2093 = vpack.c.b16 %v1498, %v1493
      %v2094 = vpack.c.b16 %v1499, %v1494
      %v2095 = vpack.c.b16 %v1500, %v1495
      %v2096 = vpack.c.b16 %v1501, %v1496
      %v2097 = vpack.c.b16 %v1507, %v1502
      %v2098 = vpack.c.b16 %v1508, %v1503
      %v2099 = vpack.c.b16 %v1509, %v1504
      %v2100 = vpack.c.b16 %v1510, %v1505
      %v2101 = vpack.c.b16 %v1511, %v1506
      %v2102 = vpack.c.b16 %v1517, %v1512
      %v2103 = vpack.c.b16 %v1518, %v1513
      %v2104 = vpack.c.b16 %v1519, %v1514
      %v2105 = vpack.c.b16 %v1520, %v1515
      %v2106 = vpack.c.b16 %v1521, %v1516
      %v2107 = vpack.c.b16 %v1527, %v1522
      %v2108 = vpack.c.b16 %v1528, %v1523
      %v2109 = vpack.c.b16 %v1529, %v1524
      %v2110 = vpack.c.b16 %v1530, %v1525
      %v2111 = vpack.c.b16 %v1531, %v1526
      %v2112 = vpack.c.b16 %v1537, %v1532
      %v2113 = vpack.c.b16 %v1538, %v1533
      %v2114 = vpack.c.b16 %v1539, %v1534
      %v2115 = vpack.c.b16 %v1540, %v1535
      %v2116 = vpack.c.b16 %v1541, %v1536
      %v2117 = vpack.c.b16 %v1547, %v1542
      %v2118 = vpack.c.b16 %v1548, %v1543
      %v2119 = vpack.c.b16 %v1549, %v1544
      %v2120 = vpack.c.b16 %v1550, %v1545
      %v2121 = vpack.c.b16 %v1551, %v1546
      %v2122 = vpack.c.b16 %v1557, %v1552
      %v2123 = vpack.c.b16 %v1558, %v1553
      %v2124 = vpack.c.b16 %v1559, %v1554
      %v2125 = vpack.c.b16 %v1560, %v1555
      %v2126 = vpack.c.b16 %v1561, %v1556
      %v2127 = vpack.c.b16 %v1567, %v1562
      %v2128 = vpack.c.b16 %v1568, %v1563
      %v2129 = vpack.c.b16 %v1569, %v1564
      %v2130 = vpack.c.b16 %v1570, %v1565
      %v2131 = vpack.c.b16 %v1571, %v1566
      %v2132 = vpack.c.b16 %v1577, %v1572
      %v2133 = vpack.c.b16 %v1578, %v1573
      %v2134 = vpack.c.b16 %v1579, %v1574
      %v2135 = vpack.c.b16 %v1580, %v1575
      %v2136 = vpack.c.b16 %v1581, %v1576
      %v2137 = vpack.c.b16 %v1587, %v1582
      %v2138 = vpack.c.b16 %v1588, %v1583
      %v2139 = vpack.c.b16 %v1589, %v1584
      %v2140 = vpack.c.b16 %v1590, %v1585
      %v2141 = vpack.c.b16 %v1591, %v1586
      %v2142 = vpack.c.b16 %v1597, %v1592
      %v2143 = vpack.c.b16 %v1598, %v1593
      %v2144 = vpack.c.b16 %v1599, %v1594
      %v2145 = vpack.c.b16 %v1600, %v1595
      %v2146 = vpack.c.b16 %v1601, %v1596
      %v2147 = vpack.c.b16 %v1607, %v1602
      %v2148 = vpack.c.b16 %v1608, %v1603
      %v2149 = vpack.c.b16 %v1609, %v1604
      %v2150 = vpack.c.b16 %v1610, %v1605
      %v2151 = vpack.c.b16 %v1611, %v1606
      %v2152 = vpack.c.b16 %v1617, %v1612
      %v2153 = vpack.c.b16 %v1618, %v1613
      %v2154 = vpack.c.b16 %v1619, %v1614
      %v2155 = vpack.c.b16 %v1620, %v1615
      %v2156 = vpack.c.b16 %v1621, %v1616
      %v2157 = vpack.c.b16 %v1627, %v1622
      %v2158 = vpack.c.b16 %v1628, %v1623
      %v2159 = vpack.c.b16 %v1629, %v1624
      %v2160 = vpack.c.b16 %v1630, %v1625
      %v2161 = vpack.c.b16 %v1631, %v1626
      %v2162 = vpack.c.b16 %v1637, %v1632
      %v2163 = vpack.c.b16 %v1638, %v1633
      %v2164 = vpack.c.b16 %v1639, %v1634
      %v2165 = vpack.c.b16 %v1640, %v1635
      %v2166 = vpack.c.b16 %v1641, %v1636
      %v2167 = vpack.c.b16 %v1647, %v1642
      %v2168 = vpack.c.b16 %v1648, %v1643
      %v2169 = vpack.c.b16 %v1649, %v1644
      %v2170 = vpack.c.b16 %v1650, %v1645
      %v2171 = vpack.c.b16 %v1651, %v1646
      %v2172 = vpack.c.b16 %v1657, %v1652
      %v2173 = vpack.c.b16 %v1658, %v1653
      %v2174 = vpack.c.b16 %v1659, %v1654
      %v2175 = vpack.c.b16 %v1660, %v1655
      %v2176 = vpack.c.b16 %v1661, %v1656
      %v2177 = vpack.c.b16 %v1667, %v1662
      %v2178 = vpack.c.b16 %v1668, %v1663
      %v2179 = vpack.c.b16 %v1669, %v1664
      %v2180 = vpack.c.b16 %v1670, %v1665
      %v2181 = vpack.c.b16 %v1671, %v1666
      %v2182 = vpack.c.b16 %v1677, %v1672
      %v2183 = vpack.c.b16 %v1678, %v1673
      %v2184 = vpack.c.b16 %v1679, %v1674
      %v2185 = vpack.c.b16 %v1680, %v1675
      %v2186 = vpack.c.b16 %v1681, %v1676
      %v2187 = vpack.c.b16 %v1687, %v1682
      %v2188 = vpack.c.b16 %v1688, %v1683
      %v2189 = vpack.c.b16 %v1689, %v1684
      %v2190 = vpack.c.b16 %v1690, %v1685
      %v2191 = vpack.c.b16 %v1691, %v1686
      %v2192 = vpack.c.b16 %v1697, %v1692
      %v2193 = vpack.c.b16 %v1698, %v1693
      %v2194 = vpack.c.b16 %v1699, %v1694
      %v2195 = vpack.c.b16 %v1700, %v1695
      %v2196 = vpack.c.b16 %v1701, %v1696
      %v2197 = vpack.c.b16 %v1707, %v1702
      %v2198 = vpack.c.b16 %v1708, %v1703
      %v2199 = vpack.c.b16 %v1709, %v1704
      %v2200 = vpack.c.b16 %v1710, %v1705
      %v2201 = vpack.c.b16 %v1711, %v1706
      %v2202 = vpack.c.b16 %v1717, %v1712
      %v2203 = vpack.c.b16 %v1718, %v1713
      %v2204 = vpack.c.b16 %v1719, %v1714
      %v2205 = vpack.c.b16 %v1720, %v1715
      %v2206 = vpack.c.b16 %v1721, %v1716
      %v2207 = vpack.c.b16 %v1727, %v1722
      %v2208 = vpack.c.b16 %v1728, %v1723
      %v2209 = vpack.c.b16 %v1729, %v1724
      %v2210 = vpack.c.b16 %v1730, %v1725
      %v2211 = vpack.c.b16 %v1731, %v1726
      %v2212 = vpack.c.b16 %v1737, %v1732
      %v2213 = vpack.c.b16 %v1738, %v1733
      %v2214 = vpack.c.b16 %v1739, %v1734
      %v2215 = vpack.c.b16 %v1740, %v1735
      %v2216 = vpack.c.b16 %v1741, %v1736
      %v2217 = vpack.c.b16 %v1747, %v1742
      %v2218 = vpack.c.b16 %v1748, %v1743
      %v2219 = vpack.c.b16 %v1749, %v1744
      %v2220 = vpack.c.b16 %v1750, %v1745
      %v2221 = vpack.c.b16 %v1751, %v1746
      %v2222 = vpack.c.b16 %v1757, %v1752
      %v2223 = vpack.c.b16 %v1758, %v1753
      %v2224 = vpack.c.b16 %v1759, %v1754
      %v2225 = vpack.c.b16 %v1760, %v1755
      %v2226 = vpack.c.b16 %v1761, %v1756
      %v2227 = vpack.c.b16 %v1767, %v1762
      %v2228 = vpack.c.b16 %v1768, %v1763
      %v2229 = vpack.c.b16 %v1769, %v1764
      %v2230 = vpack.c.b16 %v1770, %v1765
      %v2231 = vpack.c.b16 %v1771, %v1766
      %v2232 = vpack.c.b16 %v1777, %v1772
      %v2233 = vpack.c.b16 %v1778, %v1773
      %v2234 = vpack.c.b16 %v1779, %v1774
      %v2235 = vpack.c.b16 %v1780, %v1775
      %v2236 = vpack.c.b16 %v1781, %v1776
      %v2237 = vpack.c.b16 %v1787, %v1782
      %v2238 = vpack.c.b16 %v1788, %v1783
      %v2239 = vpack.c.b16 %v1789, %v1784
      %v2240 = vpack.c.b16 %v1790, %v1785
      %v2241 = vpack.c.b16 %v1791, %v1786
      %v2242 = vpack.c.b16 %v1797, %v1792
      %v2243 = vpack.c.b16 %v1798, %v1793
      %v2244 = vpack.c.b16 %v1799, %v1794
      %v2245 = vpack.c.b16 %v1800, %v1795
      %v2246 = vpack.c.b16 %v1801, %v1796
      %v2247 = vpack.c.b16 %v1807, %v1802
      %v2248 = vpack.c.b16 %v1808, %v1803
      %v2249 = vpack.c.b16 %v1809, %v1804
      %v2250 = vpack.c.b16 %v1810, %v1805
      %v2251 = vpack.c.b16 %v1811, %v1806
      %v2252 = vpack.c.b16 %v1817, %v1812
      %v2253 = vpack.c.b16 %v1818, %v1813
      %v2254 = vpack.c.b16 %v1819, %v1814
      %v2255 = vpack.c.b16 %v1820, %v1815
      %v2256 = vpack.c.b16 %v1821, %v1816
      %v2257 = vpack.c.b16 %v1827, %v1822
      %v2258 = vpack.c.b16 %v1828, %v1823
      %v2259 = vpack.c.b16 %v1829, %v1824
      %v2260 = vpack.c.b16 %v1830, %v1825
      %v2261 = vpack.c.b16 %v1831, %v1826
      %v2262 = vpack.c.b16 %v1837, %v1832
      %v2263 = vpack.c.b16 %v1838, %v1833
      %v2264 = vpack.c.b16 %v1839, %v1834
      %v2265 = vpack.c.b16 %v1840, %v1835
      %v2266 = vpack.c.b16 %v1841, %v1836
      %v2267 = vpack.c.b16 %v1847, %v1842
      %v2268 = vpack.c.b16 %v1848, %v1843
      %v2269 = vpack.c.b16 %v1849, %v1844
      %v2270 = vpack.c.b16 %v1850, %v1845
      %v2271 = vpack.c.b16 %v1851, %v1846
      %v2272 = vpack.c.b16 %v1857, %v1852
      %v2273 = vpack.c.b16 %v1858, %v1853
      %v2274 = vpack.c.b16 %v1859, %v1854
      %v2275 = vpack.c.b16 %v1860, %v1855
      %v2276 = vpack.c.b16 %v1861, %v1856
      %v2277 = vpack.c.b16 %v1867, %v1862
      %v2278 = vpack.c.b16 %v1868, %v1863
      %v2279 = vpack.c.b16 %v1869, %v1864
      %v2280 = vpack.c.b16 %v1870, %v1865
      %v2281 = vpack.c.b16 %v1871, %v1866
      %v2282 = vpack.c.b16 %v1877, %v1872
      %v2283 = vpack.c.b16 %v1878, %v1873
      %v2284 = vpack.c.b16 %v1879, %v1874
      %v2285 = vpack.c.b16 %v1880, %v1875
      %v2286 = vpack.c.b16 %v1881, %v1876
      %v2287 = vpack.c.b16 %v1887, %v1882
      %v2288 = vpack.c.b16 %v1888, %v1883
      %v2289 = vpack.c.b16 %v1889, %v1884
      %v2290 = vpack.c.b16 %v1890, %v1885
      %v2291 = vpack.c.b16 %v1891, %v1886
      %v2292 = vpack.c.b16 %v1897, %v1892
      %v2293 = vpack.c.b16 %v1898, %v1893
      %v2294 = vpack.c.b16 %v1899, %v1894
      %v2295 = vpack.c.b16 %v1900, %v1895
      %v2296 = vpack.c.b16 %v1901, %v1896
      %v2297 = vpack.c.b16 %v1907, %v1902
      %v2298 = vpack.c.b16 %v1908, %v1903
      %v2299 = vpack.c.b16 %v1909, %v1904
      %v2300 = vpack.c.b16 %v1910, %v1905
      %v2301 = vpack.c.b16 %v1911, %v1906
      %v2302 = vpack.c.b16 %v1917, %v1912
      %v2303 = vpack.c.b16 %v1918, %v1913
      %v2304 = vpack.c.b16 %v1919, %v1914
      %v2305 = vpack.c.b16 %v1920, %v1915
      %v2306 = vpack.c.b16 %v1921, %v1916
      %v2307 = vpack.c.b16 %v1927, %v1922
      %v2308 = vpack.c.b16 %v1928, %v1923
      %v2309 = vpack.c.b16 %v1929, %v1924
      %v2310 = vpack.c.b16 %v1930, %v1925
      %v2311 = vpack.c.b16 %v1931, %v1926
      %v2312 = vpack.c.b16 %v1937, %v1932
      %v2313 = vpack.c.b16 %v1938, %v1933
      %v2314 = vpack.c.b16 %v1939, %v1934
      %v2315 = vpack.c.b16 %v1940, %v1935
      %v2316 = vpack.c.b16 %v1941, %v1936
      %v2317 = vpack.c.b16 %v1947, %v1942
      %v2318 = vpack.c.b16 %v1948, %v1943
      %v2319 = vpack.c.b16 %v1949, %v1944
      %v2320 = vpack.c.b16 %v1950, %v1945
      %v2321 = vpack.c.b16 %v1951, %v1946
      %v2322 = vpack.c.b16 %v1957, %v1952
      %v2323 = vpack.c.b16 %v1958, %v1953
      %v2324 = vpack.c.b16 %v1959, %v1954
      %v2325 = vpack.c.b16 %v1960, %v1955
      %v2326 = vpack.c.b16 %v1961, %v1956
      %v2327 = vpack.c.b16 %v1967, %v1962
      %v2328 = vpack.c.b16 %v1968, %v1963
      %v2329 = vpack.c.b16 %v1969, %v1964
      %v2330 = vpack.c.b16 %v1970, %v1965
      %v2331 = vpack.c.b16 %v1971, %v1966
      %v2332 = vpack.c.b16 %v1977, %v1972
      %v2333 = vpack.c.b16 %v1978, %v1973
      %v2334 = vpack.c.b16 %v1979, %v1974
      %v2335 = vpack.c.b16 %v1980, %v1975
      %v2336 = vpack.c.b16 %v1981, %v1976
      %v2337 = vpack.c.b16 %v1987, %v1982
      %v2338 = vpack.c.b16 %v1988, %v1983
      %v2339 = vpack.c.b16 %v1989, %v1984
      %v2340 = vpack.c.b16 %v1990, %v1985
      %v2341 = vpack.c.b16 %v1991, %v1986
      %v2342 = vpack.c.b16 %v1997, %v1992
      %v2343 = vpack.c.b16 %v1998, %v1993
      %v2344 = vpack.c.b16 %v1999, %v1994
      %v2345 = vpack.c.b16 %v2000, %v1995
      %v2346 = vpack.c.b16 %v2001, %v1996
      %v2347 = vpack.c.b16 %v2007, %v2002
      %v2348 = vpack.c.b16 %v2008, %v2003
      %v2349 = vpack.c.b16 %v2009, %v2004
      %v2350 = vpack.c.b16 %v2010, %v2005
      %v2351 = vpack.c.b16 %v2011, %v2006
      %v2352 = vpack.c.b16 %v2017, %v2012
      %v2353 = vpack.c.b16 %v2018, %v2013
      %v2354 = vpack.c.b16 %v2019, %v2014
      %v2355 = vpack.c.b16 %v2020, %v2015
      %v2356 = vpack.c.b16 %v2021, %v2016
      %v2357 = vpack.c.b16 %v2027, %v2022
      %v2358 = vpack.c.b16 %v2028, %v2023
      %v2359 = vpack.c.b16 %v2029, %v2024
      %v2360 = vpack.c.b16 %v2030, %v2025
      %v2361 = vpack.c.b16 %v2031, %v2026
      %v2362 = vpack.c.b16 %v2037, %v2032
      %v2363 = vpack.c.b16 %v2038, %v2033
      %v2364 = vpack.c.b16 %v2039, %v2034
      %v2365 = vpack.c.b16 %v2040, %v2035
      %v2366 = vpack.c.b16 %v2041, %v2036
      %v2367 = vpack.c.b16 %v2047, %v2042
      %v2368 = vpack.c.b16 %v2048, %v2043
      %v2369 = vpack.c.b16 %v2049, %v2044
      %v2370 = vpack.c.b16 %v2050, %v2045
      %v2371 = vpack.c.b16 %v2051, %v2046
      %v2702 = vunpack.c.l.b16 %v954
      %v2703 = vunpack.c.l.b16 %v955
      %v2704 = vunpack.c.l.b16 %v956
      %v2705 = vunpack.c.l.b16 %v957
      %v2706 = vunpack.c.l.b16 %v958
      %v2707 = vunpack.c.l.b16 %v959
      %v2708 = vunpack.c.l.b16 %v960
      %v2709 = vunpack.c.l.b16 %v961
      %v2710 = vunpack.c.l.b16 %v962
      %v2711 = vunpack.c.l.b16 %v963
      %v2712 = vunpack.c.l.b16 %v964
      %v2713 = vunpack.c.l.b16 %v965
      %v2714 = vunpack.c.l.b16 %v966
      %v2715 = vunpack.c.l.b16 %v967
      %v2716 = vunpack.c.l.b16 %v968
      %v2717 = vunpack.c.l.b16 %v969
      %v2718 = vunpack.c.l.b16 %v970
      %v2719 = vunpack.c.l.b16 %v971
      %v2720 = vunpack.c.l.b16 %v972
      %v2721 = vunpack.c.l.b16 %v973
      %v2722 = vunpack.c.l.b16 %v974
      %v2723 = vunpack.c.l.b16 %v975
      %v2724 = vunpack.c.l.b16 %v976
      %v2725 = vunpack.c.l.b16 %v977
      %v2726 = vunpack.c.l.b16 %v978
      %v2727 = vunpack.c.l.b16 %v979
      %v2728 = vunpack.c.l.b16 %v980
      %v2729 = vunpack.c.l.b16 %v981
      %v2730 = vunpack.c.l.b16 %v982
      %v2731 = vunpack.c.l.b16 %v983
      %v2732 = vunpack.c.l.b16 %v984
      %v2733 = vunpack.c.l.b16 %v985
      %v2734 = vunpack.c.l.b16 %v986
      %v2735 = vunpack.c.l.b16 %v987
      %v2736 = vunpack.c.l.b16 %v988
      %v2737 = vunpack.c.l.b16 %v989
      %v2738 = vunpack.c.l.b16 %v990
      %v2739 = vunpack.c.l.b16 %v991
      %v2740 = vunpack.c.l.b16 %v992
      %v2741 = vunpack.c.l.b16 %v993
      %v2742 = vunpack.c.l.b16 %v994
      %v2743 = vunpack.c.l.b16 %v995
      %v2744 = vunpack.c.l.b16 %v996
      %v2745 = vunpack.c.l.b16 %v997
      %v2746 = vunpack.c.l.b16 %v998
      %v2747 = vunpack.c.l.b16 %v999
      %v2748 = vunpack.c.l.b16 %v1000
      %v2749 = vunpack.c.l.b16 %v1001
      %v2750 = vunpack.c.l.b16 %v1002
      %v2751 = vunpack.c.l.b16 %v1003
      %v2752 = vunpack.c.l.b16 %v1004
      %v2753 = vunpack.c.l.b16 %v1005
      %v2754 = vunpack.c.l.b16 %v1006
      %v2755 = vunpack.c.l.b16 %v1007
      %v2756 = vunpack.c.l.b16 %v1008
      %v2757 = vunpack.c.l.b16 %v1009
      %v2758 = vunpack.c.l.b16 %v1010
      %v2759 = vunpack.c.l.b16 %v1011
      %v2760 = vunpack.c.l.b16 %v1012
      %v2761 = vunpack.c.l.b16 %v1013
      %v2762 = vunpack.c.l.b16 %v1014
      %v2763 = vunpack.c.l.b16 %v1015
      %v2764 = vunpack.c.l.b16 %v1016
      %v2765 = vunpack.c.l.b16 %v1017
      %v2766 = vunpack.c.l.b16 %v1018
      %v2767 = vunpack.c.l.b16 %v1019
      %v2768 = vunpack.c.l.b16 %v1020
      %v2769 = vunpack.c.l.b16 %v1021
      %v2770 = vunpack.c.l.b16 %v1022
      %v2771 = vunpack.c.l.b16 %v1023
      %v2772 = vunpack.c.l.b16 %v1024
      %v2773 = vunpack.c.l.b16 %v1025
      %v2774 = vunpack.c.l.b16 %v1026
      %v2775 = vunpack.c.l.b16 %v1027
      %v2776 = vpack.c.b16 %v2703, %v2702
      %v2777 = vpack.c.b16 %v2705, %v2704
      %v2778 = vpack.c.b16 %v2707, %v2706
      %v2779 = vpack.c.b16 %v2709, %v2708
      %v2780 = vpack.c.b16 %v2711, %v2710
      %v2781 = vpack.c.b16 %v2713, %v2712
      %v2782 = vpack.c.b16 %v2715, %v2714
      %v2783 = vpack.c.b16 %v2717, %v2716
      %v2784 = vpack.c.b16 %v2719, %v2718
      %v2785 = vpack.c.b16 %v2721, %v2720
      %v2786 = vpack.c.b16 %v2723, %v2722
      %v2787 = vpack.c.b16 %v2725, %v2724
      %v2788 = vpack.c.b16 %v2727, %v2726
      %v2789 = vpack.c.b16 %v2729, %v2728
      %v2790 = vpack.c.b16 %v2731, %v2730
      %v2791 = vpack.c.b16 %v2733, %v2732
      %v2792 = vpack.c.b16 %v2735, %v2734
      %v2793 = vpack.c.b16 %v2737, %v2736
      %v2794 = vpack.c.b16 %v2739, %v2738
      %v2795 = vpack.c.b16 %v2741, %v2740
      %v2796 = vpack.c.b16 %v2743, %v2742
      %v2797 = vpack.c.b16 %v2745, %v2744
      %v2798 = vpack.c.b16 %v2747, %v2746
      %v2799 = vpack.c.b16 %v2749, %v2748
      %v2800 = vpack.c.b16 %v2751, %v2750
      %v2801 = vpack.c.b16 %v2753, %v2752
      %v2802 = vpack.c.b16 %v2755, %v2754
      %v2803 = vpack.c.b16 %v2757, %v2756
      %v2804 = vpack.c.b16 %v2759, %v2758
      %v2805 = vpack.c.b16 %v2761, %v2760
      %v2806 = vpack.c.b16 %v2763, %v2762
      %v2807 = vpack.c.b16 %v2765, %v2764
      %v2808 = vpack.c.b16 %v2767, %v2766
      %v2809 = vpack.c.b16 %v2769, %v2768
      %v2810 = vpack.c.b16 %v2771, %v2770
      %v2811 = vpack.c.b16 %v2773, %v2772
      %v2812 = vpack.c.b16 %v2775, %v2774
      %vm2849 = vcmask 621568
      %v2851 = vsel %vm2849, %v2056, 0
      %v2854 = vsel %vm2849, %v2061, 0
      %v2857 = vsel %vm2849, %v2066, 0
      %v2860 = vsel %vm2849, %v2071, 0
      %v2863 = vsel %vm2849, %v2076, 0
      %v2866 = vsel %vm2849, %v2081, 0
      %v2869 = vsel %vm2849, %v2086, 0
      %v2872 = vsel %vm2849, %v2091, 0
      %v2875 = vsel %vm2849, %v2096, 0
      %v2878 = vsel %vm2849, %v2101, 0
      %v2881 = vsel %vm2849, %v2106, 0
      %v2884 = vsel %vm2849, %v2111, 0
      %v2887 = vsel %vm2849, %v2116, 0
      %v2890 = vsel %vm2849, %v2121, 0
      %v2893 = vsel %vm2849, %v2126, 0
      %v2896 = vsel %vm2849, %v2131, 0
      %v2899 = vsel %vm2849, %v2136, 0
      %v2902 = vsel %vm2849, %v2141, 0
      %v2905 = vsel %vm2849, %v2146, 0
      %v2908 = vsel %vm2849, %v2151, 0
      %v2911 = vsel %vm2849, %v2156, 0
      %v2914 = vsel %vm2849, %v2161, 0
      %v2917 = vsel %vm2849, %v2166, 0
      %v2920 = vsel %vm2849, %v2171, 0
      %v2923 = vsel %vm2849, %v2176, 0
      %v2926 = vsel %vm2849, %v2181, 0
      %v2929 = vsel %vm2849, %v2186, 0
      %v2932 = vsel %vm2849, %v2191, 0
      %v2935 = vsel %vm2849, %v2196, 0
      %v2938 = vsel %vm2849, %v2201, 0
      %v2941 = vsel %vm2849, %v2206, 0
      %v2944 = vsel %vm2849, %v2211, 0
      %v2947 = vsel %vm2849, %v2216, 0
      %v2950 = vsel %vm2849, %v2221, 0
      %v2953 = vsel %vm2849, %v2226, 0
      %v2956 = vsel %vm2849, %v2231, 0
      %v2959 = vsel %vm2849, %v2236, 0
      %v2962 = vsel %vm2849, %v2241, 0
      %v2965 = vsel %vm2849, %v2246, 0
      %v2968 = vsel %vm2849, %v2251, 0
      %v2971 = vsel %vm2849, %v2256, 0
      %v2974 = vsel %vm2849, %v2261, 0
      %v2977 = vsel %vm2849, %v2266, 0
      %v2980 = vsel %vm2849, %v2271, 0
      %v2983 = vsel %vm2849, %v2276, 0
      %v2986 = vsel %vm2849, %v2281, 0
      %v2989 = vsel %vm2849, %v2286, 0
      %v2992 = vsel %vm2849, %v2291, 0
      %v2995 = vsel %vm2849, %v2296, 0
      %v2998 = vsel %vm2849, %v2301, 0
      %v3001 = vsel %vm2849, %v2306, 0
      %v3004 = vsel %vm2849, %v2311, 0
      %v3007 = vsel %vm2849, %v2316, 0
      %v3010 = vsel %vm2849, %v2321, 0
      %v3013 = vsel %vm2849, %v2326, 0
      %v3016 = vsel %vm2849, %v2331, 0
      %v3019 = vsel %vm2849, %v2336, 0
      %v3022 = vsel %vm2849, %v2341, 0
      %v3025 = vsel %vm2849, %v2346, 0
      %v3028 = vsel %vm2849, %v2351, 0
      %v3031 = vsel %vm2849, %v2356, 0
      %v3034 = vsel %vm2849, %v2361, 0
      %v3037 = vsel %vm2849, %v2366, 0
      %v3040 = vsel %vm2849, %v2371, 0
      %vm3042 = vcmask 1045504
      %v3044 = vsel %vm3042, %v2812, 0
      %3046 = vmatprep.subr.bf16.mxu0 0
      %3047 = vmatpush1.bf16.msra.mxu0 %v2776
      %3048 = vmatprep.subr.bf16.mxu0 0
      %3049 = vmatpush1.bf16.msra.mxu0 %v2777
      %3050 = vmatprep.subr.bf16.mxu0 0
      %3051 = vmatpush1.bf16.msra.mxu0 %v2778
      %3052 = vmatprep.subr.bf16.mxu0 0
      %3053 = vmatpush1.bf16.msra.mxu0 %v2779
      %3054 = vmatprep.subr.bf16.mxu0 0
      %3055 = vmatpush1.bf16.msra.mxu0 %v2780
      %3056 = vmatprep.subr.bf16.mxu0 0
      %3057 = vmatpush1.bf16.msra.mxu0 %v2781
      %3058 = vmatprep.subr.bf16.mxu0 0
      %3059 = vmatpush1.bf16.msra.mxu0 %v2782
      %3060 = vmatprep.subr.bf16.mxu0 0
      %3061 = vmatpush1.bf16.msra.mxu0 %v2783
      %3062 = vmatprep.subr.bf16.mxu0 0
      %3063 = vmatpush1.bf16.msra.mxu0 %v2784
      %3064 = vmatprep.subr.bf16.mxu0 0
      %3065 = vmatpush1.bf16.msra.mxu0 %v2785
      %3066 = vmatprep.subr.bf16.mxu0 0
      %3067 = vmatpush1.bf16.msra.mxu0 %v2786
      %3068 = vmatprep.subr.bf16.mxu0 0
      %3069 = vmatpush1.bf16.msra.mxu0 %v2787
      %3070 = vmatprep.subr.bf16.mxu0 0
      %3071 = vmatpush1.bf16.msra.mxu0 %v2788
      %3072 = vmatprep.subr.bf16.mxu0 0
      %3073 = vmatpush1.bf16.msra.mxu0 %v2789
      %3074 = vmatprep.subr.bf16.mxu0 0
      %3075 = vmatpush1.bf16.msra.mxu0 %v2790
      %3076 = vmatprep.subr.bf16.mxu0 0
      %3077 = vmatpush1.bf16.msra.mxu0 %v2791
      %3078 = vmatprep.mubr.bf16.mxu0 %v2053
      %3079 = vmatmul.mubr.bf16.gmra.mrb[0].mxu0 %v2052
      %v3080 = vpop.f32.mrb[0].mxu0
      %v3081 = vadd.f32 0.0, %v3080
      %v3082 = vpop.f32.mrb[0].mxu0
      %v3083 = vpop.f32.mrb[0].mxu0
      %v3084 = vadd.f32 0.0, %v3083
      %v3085 = vpop.f32.mrb[0].mxu0
      %3086 = vmatprep.mubr.bf16.mxu0 %v2058
      %3087 = vmatmul.mubr.bf16.gmra.mrb[0].mxu0 %v2057
      %v3088 = vpop.f32.mrb[0].mxu0
      %v3089 = vadd.f32 0.0, %v3088
      %v3090 = vpop.f32.mrb[0].mxu0
      %v3091 = vpop.f32.mrb[0].mxu0
      %v3092 = vadd.f32 0.0, %v3091
      %v3093 = vpop.f32.mrb[0].mxu0
      %3094 = vmatprep.mubr.bf16.mxu0 %v2063
      %3095 = vmatmul.mubr.bf16.gmra.mrb[0].mxu0 %v2062
      %v3096 = vpop.f32.mrb[0].mxu0
      %v3097 = vadd.f32 0.0, %v3096
      %v3098 = vpop.f32.mrb[0].mxu0
      %v3099 = vpop.f32.mrb[0].mxu0
      %v3100 = vadd.f32 0.0, %v3099
      %v3101 = vpop.f32.mrb[0].mxu0
      %3102 = vmatprep.mubr.bf16.mxu0 %v2068
      %3103 = vmatmul.mubr.bf16.gmra.mrb[0].mxu0 %v2067
      %v3104 = vpop.f32.mrb[0].mxu0
      %v3105 = vadd.f32 0.0, %v3104
      %v3106 = vpop.f32.mrb[0].mxu0
      %v3107 = vpop.f32.mrb[0].mxu0
      %v3108 = vadd.f32 0.0, %v3107
      %v3109 = vpop.f32.mrb[0].mxu0
      %3110 = vmatprep.mubr.bf16.mxu0 %v2073
      %3111 = vmatmul.mubr.bf16.gmra.mrb[0].mxu0 %v2072
      %v3112 = vpop.f32.mrb[0].mxu0
      %v3113 = vadd.f32 0.0, %v3112
      %v3114 = vpop.f32.mrb[0].mxu0
      %v3115 = vpop.f32.mrb[0].mxu0
      %v3116 = vadd.f32 0.0, %v3115
      %v3117 = vpop.f32.mrb[0].mxu0
      %3118 = vmatprep.mubr.bf16.mxu0 %v2078
      %3119 = vmatmul.mubr.bf16.gmra.mrb[0].mxu0 %v2077
      %v3120 = vpop.f32.mrb[0].mxu0
      %v3121 = vadd.f32 0.0, %v3120
      %v3122 = vpop.f32.mrb[0].mxu0
      %v3123 = vpop.f32.mrb[0].mxu0
      %v3124 = vadd.f32 0.0, %v3123
      %v3125 = vpop.f32.mrb[0].mxu0
      %3126 = vmatprep.mubr.bf16.mxu0 %v2083
      %3127 = vmatmul.mubr.bf16.gmra.mrb[0].mxu0 %v2082
      %v3128 = vpop.f32.mrb[0].mxu0
      %v3129 = vadd.f32 0.0, %v3128
      %v3130 = vpop.f32.mrb[0].mxu0
      %v3131 = vpop.f32.mrb[0].mxu0
      %v3132 = vadd.f32 0.0, %v3131
      %v3133 = vpop.f32.mrb[0].mxu0
      %3134 = vmatprep.mubr.bf16.mxu0 %v2088
      %3135 = vmatmul.mubr.bf16.gmra.mrb[0].mxu0 %v2087
      %v3136 = vpop.f32.mrb[0].mxu0
      %v3137 = vadd.f32 0.0, %v3136
      %v3138 = vpop.f32.mrb[0].mxu0
      %v3139 = vpop.f32.mrb[0].mxu0
      %v3140 = vadd.f32 0.0, %v3139
      %v3141 = vpop.f32.mrb[0].mxu0
      %3142 = vmatprep.mubr.bf16.mxu0 %v2093
      %3143 = vmatmul.mubr.bf16.gmra.mrb[0].mxu0 %v2092
      %v3144 = vpop.f32.mrb[0].mxu0
      %v3145 = vadd.f32 0.0, %v3144
      %v3146 = vpop.f32.mrb[0].mxu0
      %v3147 = vpop.f32.mrb[0].mxu0
      %v3148 = vadd.f32 0.0, %v3147
      %v3149 = vpop.f32.mrb[0].mxu0
      %3150 = vmatprep.mubr.bf16.mxu0 %v2098
      %3151 = vmatmul.mubr.bf16.gmra.mrb[0].mxu0 %v2097
      %v3152 = vpop.f32.mrb[0].mxu0
      %v3153 = vadd.f32 0.0, %v3152
      %v3154 = vpop.f32.mrb[0].mxu0
      %v3155 = vpop.f32.mrb[0].mxu0
      %v3156 = vadd.f32 0.0, %v3155
      %v3157 = vpop.f32.mrb[0].mxu0
      %3158 = vmatprep.mubr.bf16.mxu0 %v2103
      %3159 = vmatmul.mubr.bf16.gmra.mrb[0].mxu0 %v2102
      %v3160 = vpop.f32.mrb[0].mxu0
      %v3161 = vadd.f32 0.0, %v3160
      %v3162 = vpop.f32.mrb[0].mxu0
      %v3163 = vpop.f32.mrb[0].mxu0
      %v3164 = vadd.f32 0.0, %v3163
      %v3165 = vpop.f32.mrb[0].mxu0
      %3166 = vmatprep.mubr.bf16.mxu0 %v2108
      %3167 = vmatmul.mubr.bf16.gmra.mrb[0].mxu0 %v2107
      %v3168 = vpop.f32.mrb[0].mxu0
      %v3169 = vadd.f32 0.0, %v3168
      %v3170 = vpop.f32.mrb[0].mxu0
      %v3171 = vpop.f32.mrb[0].mxu0
      %v3172 = vadd.f32 0.0, %v3171
      %v3173 = vpop.f32.mrb[0].mxu0
      %3174 = vmatprep.mubr.bf16.mxu0 %v2113
      %3175 = vmatmul.mubr.bf16.gmra.mrb[0].mxu0 %v2112
      %v3176 = vpop.f32.mrb[0].mxu0
      %v3177 = vadd.f32 0.0, %v3176
      %v3178 = vpop.f32.mrb[0].mxu0
      %v3179 = vpop.f32.mrb[0].mxu0
      %v3180 = vadd.f32 0.0, %v3179
      %v3181 = vpop.f32.mrb[0].mxu0
      %3182 = vmatprep.mubr.bf16.mxu0 %v2118
      %3183 = vmatmul.mubr.bf16.gmra.mrb[0].mxu0 %v2117
      %v3184 = vpop.f32.mrb[0].mxu0
      %v3185 = vadd.f32 0.0, %v3184
      %v3186 = vpop.f32.mrb[0].mxu0
      %v3187 = vpop.f32.mrb[0].mxu0
      %v3188 = vadd.f32 0.0, %v3187
      %v3189 = vpop.f32.mrb[0].mxu0
      %3190 = vmatprep.mubr.bf16.mxu0 %v2123
      %3191 = vmatmul.mubr.bf16.gmra.mrb[0].mxu0 %v2122
      %v3192 = vpop.f32.mrb[0].mxu0
      %v3193 = vadd.f32 0.0, %v3192
      %v3194 = vpop.f32.mrb[0].mxu0
      %v3195 = vpop.f32.mrb[0].mxu0
      %v3196 = vadd.f32 0.0, %v3195
      %v3197 = vpop.f32.mrb[0].mxu0
      %3198 = vmatprep.mubr.bf16.mxu0 %v2128
      %3199 = vmatmul.mubr.bf16.gmra.mrb[0].mxu0 %v2127
      %v3200 = vpop.f32.mrb[0].mxu0
      %v3201 = vadd.f32 0.0, %v3200
      %v3202 = vpop.f32.mrb[0].mxu0
      %v3203 = vpop.f32.mrb[0].mxu0
      %v3204 = vadd.f32 0.0, %v3203
      %v3205 = vpop.f32.mrb[0].mxu0
      %3206 = vmatprep.mubr.bf16.mxu0 %v2133
      %3207 = vmatmul.mubr.bf16.gmra.mrb[0].mxu0 %v2132
      %v3208 = vpop.f32.mrb[0].mxu0
      %v3209 = vadd.f32 0.0, %v3208
      %v3210 = vpop.f32.mrb[0].mxu0
      %v3211 = vpop.f32.mrb[0].mxu0
      %v3212 = vadd.f32 0.0, %v3211
      %v3213 = vpop.f32.mrb[0].mxu0
      %3214 = vmatprep.mubr.bf16.mxu0 %v2138
      %3215 = vmatmul.mubr.bf16.gmra.mrb[0].mxu0 %v2137
      %v3216 = vpop.f32.mrb[0].mxu0
      %v3217 = vadd.f32 0.0, %v3216
      %v3218 = vpop.f32.mrb[0].mxu0
      %v3219 = vpop.f32.mrb[0].mxu0
      %v3220 = vadd.f32 0.0, %v3219
      %v3221 = vpop.f32.mrb[0].mxu0
      %3222 = vmatprep.mubr.bf16.mxu0 %v2143
      %3223 = vmatmul.mubr.bf16.gmra.mrb[0].mxu0 %v2142
      %v3224 = vpop.f32.mrb[0].mxu0
      %v3225 = vadd.f32 0.0, %v3224
      %v3226 = vpop.f32.mrb[0].mxu0
      %v3227 = vpop.f32.mrb[0].mxu0
      %v3228 = vadd.f32 0.0, %v3227
      %v3229 = vpop.f32.mrb[0].mxu0
      %3230 = vmatprep.mubr.bf16.mxu0 %v2148
      %3231 = vmatmul.mubr.bf16.gmra.mrb[0].mxu0 %v2147
      %v3232 = vpop.f32.mrb[0].mxu0
      %v3233 = vadd.f32 0.0, %v3232
      %v3234 = vpop.f32.mrb[0].mxu0
      %v3235 = vpop.f32.mrb[0].mxu0
      %v3236 = vadd.f32 0.0, %v3235
      %v3237 = vpop.f32.mrb[0].mxu0
      %3238 = vmatprep.mubr.bf16.mxu0 %v2153
      %3239 = vmatmul.mubr.bf16.gmra.mrb[0].mxu0 %v2152
      %v3240 = vpop.f32.mrb[0].mxu0
      %v3241 = vadd.f32 0.0, %v3240
      %v3242 = vpop.f32.mrb[0].mxu0
      %v3243 = vpop.f32.mrb[0].mxu0
      %v3244 = vadd.f32 0.0, %v3243
      %v3245 = vpop.f32.mrb[0].mxu0
      %3246 = vmatprep.mubr.bf16.mxu0 %v2158
      %3247 = vmatmul.mubr.bf16.gmra.mrb[0].mxu0 %v2157
      %v3248 = vpop.f32.mrb[0].mxu0
      %v3249 = vadd.f32 0.0, %v3248
      %v3250 = vpop.f32.mrb[0].mxu0
      %v3251 = vpop.f32.mrb[0].mxu0
      %v3252 = vadd.f32 0.0, %v3251
      %v3253 = vpop.f32.mrb[0].mxu0
      %3254 = vmatprep.mubr.bf16.mxu0 %v2163
      %3255 = vmatmul.mubr.bf16.gmra.mrb[0].mxu0 %v2162
      %v3256 = vpop.f32.mrb[0].mxu0
      %v3257 = vadd.f32 0.0, %v3256
      %v3258 = vpop.f32.mrb[0].mxu0
      %v3259 = vpop.f32.mrb[0].mxu0
      %v3260 = vadd.f32 0.0, %v3259
      %v3261 = vpop.f32.mrb[0].mxu0
      %3262 = vmatprep.mubr.bf16.mxu0 %v2168
      %3263 = vmatmul.mubr.bf16.gmra.mrb[0].mxu0 %v2167
      %v3264 = vpop.f32.mrb[0].mxu0
      %v3265 = vadd.f32 0.0, %v3264
      %v3266 = vpop.f32.mrb[0].mxu0
      %v3267 = vpop.f32.mrb[0].mxu0
      %v3268 = vadd.f32 0.0, %v3267
      %v3269 = vpop.f32.mrb[0].mxu0
      %3270 = vmatprep.mubr.bf16.mxu0 %v2173
      %3271 = vmatmul.mubr.bf16.gmra.mrb[0].mxu0 %v2172
      %v3272 = vpop.f32.mrb[0].mxu0
      %v3273 = vadd.f32 0.0, %v3272
      %v3274 = vpop.f32.mrb[0].mxu0
      %v3275 = vpop.f32.mrb[0].mxu0
      %v3276 = vadd.f32 0.0, %v3275
      %v3277 = vpop.f32.mrb[0].mxu0
      %3278 = vmatprep.mubr.bf16.mxu0 %v2178
      %3279 = vmatmul.mubr.bf16.gmra.mrb[0].mxu0 %v2177
      %v3280 = vpop.f32.mrb[0].mxu0
      %v3281 = vadd.f32 0.0, %v3280
      %v3282 = vpop.f32.mrb[0].mxu0
      %v3283 = vpop.f32.mrb[0].mxu0
      %v3284 = vadd.f32 0.0, %v3283
      %v3285 = vpop.f32.mrb[0].mxu0
      %3286 = vmatprep.mubr.bf16.mxu0 %v2183
      %3287 = vmatmul.mubr.bf16.gmra.mrb[0].mxu0 %v2182
      %v3288 = vpop.f32.mrb[0].mxu0
      %v3289 = vadd.f32 0.0, %v3288
      %v3290 = vpop.f32.mrb[0].mxu0
      %v3291 = vpop.f32.mrb[0].mxu0
      %v3292 = vadd.f32 0.0, %v3291
      %v3293 = vpop.f32.mrb[0].mxu0
      %3294 = vmatprep.mubr.bf16.mxu0 %v2188
      %3295 = vmatmul.mubr.bf16.gmra.mrb[0].mxu0 %v2187
      %v3296 = vpop.f32.mrb[0].mxu0
      %v3297 = vadd.f32 0.0, %v3296
      %v3298 = vpop.f32.mrb[0].mxu0
      %v3299 = vpop.f32.mrb[0].mxu0
      %v3300 = vadd.f32 0.0, %v3299
      %v3301 = vpop.f32.mrb[0].mxu0
      %3302 = vmatprep.mubr.bf16.mxu0 %v2193
      %3303 = vmatmul.mubr.bf16.gmra.mrb[0].mxu0 %v2192
      %v3304 = vpop.f32.mrb[0].mxu0
      %v3305 = vadd.f32 0.0, %v3304
      %v3306 = vpop.f32.mrb[0].mxu0
      %v3307 = vpop.f32.mrb[0].mxu0
      %v3308 = vadd.f32 0.0, %v3307
      %v3309 = vpop.f32.mrb[0].mxu0
      %3310 = vmatprep.mubr.bf16.mxu0 %v2198
      %3311 = vmatmul.mubr.bf16.gmra.mrb[0].mxu0 %v2197
      %v3312 = vpop.f32.mrb[0].mxu0
      %v3313 = vadd.f32 0.0, %v3312
      %v3314 = vpop.f32.mrb[0].mxu0
      %v3315 = vpop.f32.mrb[0].mxu0
      %v3316 = vadd.f32 0.0, %v3315
      %v3317 = vpop.f32.mrb[0].mxu0
      %3318 = vmatprep.mubr.bf16.mxu0 %v2203
      %3319 = vmatmul.mubr.bf16.gmra.mrb[0].mxu0 %v2202
      %v3320 = vpop.f32.mrb[0].mxu0
      %v3321 = vadd.f32 0.0, %v3320
      %v3322 = vpop.f32.mrb[0].mxu0
      %v3323 = vpop.f32.mrb[0].mxu0
      %v3324 = vadd.f32 0.0, %v3323
      %v3325 = vpop.f32.mrb[0].mxu0
      %3326 = vmatprep.mubr.bf16.mxu0 %v2208
      %3327 = vmatmul.mubr.bf16.gmra.mrb[0].mxu0 %v2207
      %v3328 = vpop.f32.mrb[0].mxu0
      %v3329 = vadd.f32 0.0, %v3328
      %v3330 = vpop.f32.mrb[0].mxu0
      %v3331 = vpop.f32.mrb[0].mxu0
      %v3332 = vadd.f32 0.0, %v3331
      %v3333 = vpop.f32.mrb[0].mxu0
      %3334 = vmatprep.mubr.bf16.mxu0 %v2213
      %3335 = vmatmul.mubr.bf16.gmra.mrb[0].mxu0 %v2212
      %v3336 = vpop.f32.mrb[0].mxu0
      %v3337 = vadd.f32 0.0, %v3336
      %v3338 = vpop.f32.mrb[0].mxu0
      %v3339 = vpop.f32.mrb[0].mxu0
      %v3340 = vadd.f32 0.0, %v3339
      %v3341 = vpop.f32.mrb[0].mxu0
      %3342 = vmatprep.mubr.bf16.mxu0 %v2218
      %3343 = vmatmul.mubr.bf16.gmra.mrb[0].mxu0 %v2217
      %v3344 = vpop.f32.mrb[0].mxu0
      %v3345 = vadd.f32 0.0, %v3344
      %v3346 = vpop.f32.mrb[0].mxu0
      %v3347 = vpop.f32.mrb[0].mxu0
      %v3348 = vadd.f32 0.0, %v3347
      %v3349 = vpop.f32.mrb[0].mxu0
      %3350 = vmatprep.mubr.bf16.mxu0 %v2223
      %3351 = vmatmul.mubr.bf16.gmra.mrb[0].mxu0 %v2222
      %v3352 = vpop.f32.mrb[0].mxu0
      %v3353 = vadd.f32 0.0, %v3352
      %v3354 = vpop.f32.mrb[0].mxu0
      %v3355 = vpop.f32.mrb[0].mxu0
      %v3356 = vadd.f32 0.0, %v3355
      %v3357 = vpop.f32.mrb[0].mxu0
      %3358 = vmatprep.mubr.bf16.mxu0 %v2228
      %3359 = vmatmul.mubr.bf16.gmra.mrb[0].mxu0 %v2227
      %v3360 = vpop.f32.mrb[0].mxu0
      %v3361 = vadd.f32 0.0, %v3360
      %v3362 = vpop.f32.mrb[0].mxu0
      %v3363 = vpop.f32.mrb[0].mxu0
      %v3364 = vadd.f32 0.0, %v3363
      %v3365 = vpop.f32.mrb[0].mxu0
      %3366 = vmatprep.mubr.bf16.mxu0 %v2233
      %3367 = vmatmul.mubr.bf16.gmra.mrb[0].mxu0 %v2232
      %v3368 = vpop.f32.mrb[0].mxu0
      %v3369 = vadd.f32 0.0, %v3368
      %v3370 = vpop.f32.mrb[0].mxu0
      %v3371 = vpop.f32.mrb[0].mxu0
      %v3372 = vadd.f32 0.0, %v3371
      %v3373 = vpop.f32.mrb[0].mxu0
      %3374 = vmatprep.mubr.bf16.mxu0 %v2238
      %3375 = vmatmul.mubr.bf16.gmra.mrb[0].mxu0 %v2237
      %v3376 = vpop.f32.mrb[0].mxu0
      %v3377 = vadd.f32 0.0, %v3376
      %v3378 = vpop.f32.mrb[0].mxu0
      %v3379 = vpop.f32.mrb[0].mxu0
      %v3380 = vadd.f32 0.0, %v3379
      %v3381 = vpop.f32.mrb[0].mxu0
      %3382 = vmatprep.mubr.bf16.mxu0 %v2243
      %3383 = vmatmul.mubr.bf16.gmra.mrb[0].mxu0 %v2242
      %v3384 = vpop.f32.mrb[0].mxu0
      %v3385 = vadd.f32 0.0, %v3384
      %v3386 = vpop.f32.mrb[0].mxu0
      %v3387 = vpop.f32.mrb[0].mxu0
      %v3388 = vadd.f32 0.0, %v3387
      %v3389 = vpop.f32.mrb[0].mxu0
      %3390 = vmatprep.mubr.bf16.mxu0 %v2248
      %3391 = vmatmul.mubr.bf16.gmra.mrb[0].mxu0 %v2247
      %v3392 = vpop.f32.mrb[0].mxu0
      %v3393 = vadd.f32 0.0, %v3392
      %v3394 = vpop.f32.mrb[0].mxu0
      %v3395 = vpop.f32.mrb[0].mxu0
      %v3396 = vadd.f32 0.0, %v3395
      %v3397 = vpop.f32.mrb[0].mxu0
      %3398 = vmatprep.mubr.bf16.mxu0 %v2253
      %3399 = vmatmul.mubr.bf16.gmra.mrb[0].mxu0 %v2252
      %v3400 = vpop.f32.mrb[0].mxu0
      %v3401 = vadd.f32 0.0, %v3400
      %v3402 = vpop.f32.mrb[0].mxu0
      %v3403 = vpop.f32.mrb[0].mxu0
      %v3404 = vadd.f32 0.0, %v3403
      %v3405 = vpop.f32.mrb[0].mxu0
      %3406 = vmatprep.mubr.bf16.mxu0 %v2258
      %3407 = vmatmul.mubr.bf16.gmra.mrb[0].mxu0 %v2257
      %v3408 = vpop.f32.mrb[0].mxu0
      %v3409 = vadd.f32 0.0, %v3408
      %v3410 = vpop.f32.mrb[0].mxu0
      %v3411 = vpop.f32.mrb[0].mxu0
      %v3412 = vadd.f32 0.0, %v3411
      %v3413 = vpop.f32.mrb[0].mxu0
      %3414 = vmatprep.mubr.bf16.mxu0 %v2263
      %3415 = vmatmul.mubr.bf16.gmra.mrb[0].mxu0 %v2262
      %v3416 = vpop.f32.mrb[0].mxu0
      %v3417 = vadd.f32 0.0, %v3416
      %v3418 = vpop.f32.mrb[0].mxu0
      %v3419 = vpop.f32.mrb[0].mxu0
      %v3420 = vadd.f32 0.0, %v3419
      %v3421 = vpop.f32.mrb[0].mxu0
      %3422 = vmatprep.mubr.bf16.mxu0 %v2268
      %3423 = vmatmul.mubr.bf16.gmra.mrb[0].mxu0 %v2267
      %v3424 = vpop.f32.mrb[0].mxu0
      %v3425 = vadd.f32 0.0, %v3424
      %v3426 = vpop.f32.mrb[0].mxu0
      %v3427 = vpop.f32.mrb[0].mxu0
      %v3428 = vadd.f32 0.0, %v3427
      %v3429 = vpop.f32.mrb[0].mxu0
      %3430 = vmatprep.mubr.bf16.mxu0 %v2273
      %3431 = vmatmul.mubr.bf16.gmra.mrb[0].mxu0 %v2272
      %v3432 = vpop.f32.mrb[0].mxu0
      %v3433 = vadd.f32 0.0, %v3432
      %v3434 = vpop.f32.mrb[0].mxu0
      %v3435 = vpop.f32.mrb[0].mxu0
      %v3436 = vadd.f32 0.0, %v3435
      %v3437 = vpop.f32.mrb[0].mxu0
      %3438 = vmatprep.mubr.bf16.mxu0 %v2278
      %3439 = vmatmul.mubr.bf16.gmra.mrb[0].mxu0 %v2277
      %v3440 = vpop.f32.mrb[0].mxu0
      %v3441 = vadd.f32 0.0, %v3440
      %v3442 = vpop.f32.mrb[0].mxu0
      %v3443 = vpop.f32.mrb[0].mxu0
      %v3444 = vadd.f32 0.0, %v3443
      %v3445 = vpop.f32.mrb[0].mxu0
      %3446 = vmatprep.mubr.bf16.mxu0 %v2283
      %3447 = vmatmul.mubr.bf16.gmra.mrb[0].mxu0 %v2282
      %v3448 = vpop.f32.mrb[0].mxu0
      %v3449 = vadd.f32 0.0, %v3448
      %v3450 = vpop.f32.mrb[0].mxu0
      %v3451 = vpop.f32.mrb[0].mxu0
      %v3452 = vadd.f32 0.0, %v3451
      %v3453 = vpop.f32.mrb[0].mxu0
      %3454 = vmatprep.mubr.bf16.mxu0 %v2288
      %3455 = vmatmul.mubr.bf16.gmra.mrb[0].mxu0 %v2287
      %v3456 = vpop.f32.mrb[0].mxu0
      %v3457 = vadd.f32 0.0, %v3456
      %v3458 = vpop.f32.mrb[0].mxu0
      %v3459 = vpop.f32.mrb[0].mxu0
      %v3460 = vadd.f32 0.0, %v3459
      %v3461 = vpop.f32.mrb[0].mxu0
      %3462 = vmatprep.mubr.bf16.mxu0 %v2293
      %3463 = vmatmul.mubr.bf16.gmra.mrb[0].mxu0 %v2292
      %v3464 = vpop.f32.mrb[0].mxu0
      %v3465 = vadd.f32 0.0, %v3464
      %v3466 = vpop.f32.mrb[0].mxu0
      %v3467 = vpop.f32.mrb[0].mxu0
      %v3468 = vadd.f32 0.0, %v3467
      %v3469 = vpop.f32.mrb[0].mxu0
      %3470 = vmatprep.mubr.bf16.mxu0 %v2298
      %3471 = vmatmul.mubr.bf16.gmra.mrb[0].mxu0 %v2297
      %v3472 = vpop.f32.mrb[0].mxu0
      %v3473 = vadd.f32 0.0, %v3472
      %v3474 = vpop.f32.mrb[0].mxu0
      %v3475 = vpop.f32.mrb[0].mxu0
      %v3476 = vadd.f32 0.0, %v3475
      %v3477 = vpop.f32.mrb[0].mxu0
      %3478 = vmatprep.mubr.bf16.mxu0 %v2303
      %3479 = vmatmul.mubr.bf16.gmra.mrb[0].mxu0 %v2302
      %v3480 = vpop.f32.mrb[0].mxu0
      %v3481 = vadd.f32 0.0, %v3480
      %v3482 = vpop.f32.mrb[0].mxu0
      %v3483 = vpop.f32.mrb[0].mxu0
      %v3484 = vadd.f32 0.0, %v3483
      %v3485 = vpop.f32.mrb[0].mxu0
      %3486 = vmatprep.mubr.bf16.mxu0 %v2308
      %3487 = vmatmul.mubr.bf16.gmra.mrb[0].mxu0 %v2307
      %v3488 = vpop.f32.mrb[0].mxu0
      %v3489 = vadd.f32 0.0, %v3488
      %v3490 = vpop.f32.mrb[0].mxu0
      %v3491 = vpop.f32.mrb[0].mxu0
      %v3492 = vadd.f32 0.0, %v3491
      %v3493 = vpop.f32.mrb[0].mxu0
      %3494 = vmatprep.mubr.bf16.mxu0 %v2313
      %3495 = vmatmul.mubr.bf16.gmra.mrb[0].mxu0 %v2312
      %v3496 = vpop.f32.mrb[0].mxu0
      %v3497 = vadd.f32 0.0, %v3496
      %v3498 = vpop.f32.mrb[0].mxu0
      %v3499 = vpop.f32.mrb[0].mxu0
      %v3500 = vadd.f32 0.0, %v3499
      %v3501 = vpop.f32.mrb[0].mxu0
      %3502 = vmatprep.mubr.bf16.mxu0 %v2318
      %3503 = vmatmul.mubr.bf16.gmra.mrb[0].mxu0 %v2317
      %v3504 = vpop.f32.mrb[0].mxu0
      %v3505 = vadd.f32 0.0, %v3504
      %v3506 = vpop.f32.mrb[0].mxu0
      %v3507 = vpop.f32.mrb[0].mxu0
      %v3508 = vadd.f32 0.0, %v3507
      %v3509 = vpop.f32.mrb[0].mxu0
      %3510 = vmatprep.mubr.bf16.mxu0 %v2323
      %3511 = vmatmul.mubr.bf16.gmra.mrb[0].mxu0 %v2322
      %v3512 = vpop.f32.mrb[0].mxu0
      %v3513 = vadd.f32 0.0, %v3512
      %v3514 = vpop.f32.mrb[0].mxu0
      %v3515 = vpop.f32.mrb[0].mxu0
      %v3516 = vadd.f32 0.0, %v3515
      %v3517 = vpop.f32.mrb[0].mxu0
      %3518 = vmatprep.mubr.bf16.mxu0 %v2328
      %3519 = vmatmul.mubr.bf16.gmra.mrb[0].mxu0 %v2327
      %v3520 = vpop.f32.mrb[0].mxu0
      %v3521 = vadd.f32 0.0, %v3520
      %v3522 = vpop.f32.mrb[0].mxu0
      %v3523 = vpop.f32.mrb[0].mxu0
      %v3524 = vadd.f32 0.0, %v3523
      %v3525 = vpop.f32.mrb[0].mxu0
      %3526 = vmatprep.mubr.bf16.mxu0 %v2333
      %3527 = vmatmul.mubr.bf16.gmra.mrb[0].mxu0 %v2332
      %v3528 = vpop.f32.mrb[0].mxu0
      %v3529 = vadd.f32 0.0, %v3528
      %v3530 = vpop.f32.mrb[0].mxu0
      %v3531 = vpop.f32.mrb[0].mxu0
      %v3532 = vadd.f32 0.0, %v3531
      %v3533 = vpop.f32.mrb[0].mxu0
      %3534 = vmatprep.mubr.bf16.mxu0 %v2338
      %3535 = vmatmul.mubr.bf16.gmra.mrb[0].mxu0 %v2337
      %v3536 = vpop.f32.mrb[0].mxu0
      %v3537 = vadd.f32 0.0, %v3536
      %v3538 = vpop.f32.mrb[0].mxu0
      %v3539 = vpop.f32.mrb[0].mxu0
      %v3540 = vadd.f32 0.0, %v3539
      %v3541 = vpop.f32.mrb[0].mxu0
      %3542 = vmatprep.mubr.bf16.mxu0 %v2343
      %3543 = vmatmul.mubr.bf16.gmra.mrb[0].mxu0 %v2342
      %v3544 = vpop.f32.mrb[0].mxu0
      %v3545 = vadd.f32 0.0, %v3544
      %v3546 = vpop.f32.mrb[0].mxu0
      %v3547 = vpop.f32.mrb[0].mxu0
      %v3548 = vadd.f32 0.0, %v3547
      %v3549 = vpop.f32.mrb[0].mxu0
      %3550 = vmatprep.mubr.bf16.mxu0 %v2348
      %3551 = vmatmul.mubr.bf16.gmra.mrb[0].mxu0 %v2347
      %v3552 = vpop.f32.mrb[0].mxu0
      %v3553 = vadd.f32 0.0, %v3552
      %v3554 = vpop.f32.mrb[0].mxu0
      %v3555 = vpop.f32.mrb[0].mxu0
      %v3556 = vadd.f32 0.0, %v3555
      %v3557 = vpop.f32.mrb[0].mxu0
      %3558 = vmatprep.mubr.bf16.mxu0 %v2353
      %3559 = vmatmul.mubr.bf16.gmra.mrb[0].mxu0 %v2352
      %v3560 = vpop.f32.mrb[0].mxu0
      %v3561 = vadd.f32 0.0, %v3560
      %v3562 = vpop.f32.mrb[0].mxu0
      %v3563 = vpop.f32.mrb[0].mxu0
      %v3564 = vadd.f32 0.0, %v3563
      %v3565 = vpop.f32.mrb[0].mxu0
      %3566 = vmatprep.mubr.bf16.mxu0 %v2358
      %3567 = vmatmul.mubr.bf16.gmra.mrb[0].mxu0 %v2357
      %v3568 = vpop.f32.mrb[0].mxu0
      %v3569 = vadd.f32 0.0, %v3568
      %v3570 = vpop.f32.mrb[0].mxu0
      %v3571 = vpop.f32.mrb[0].mxu0
      %v3572 = vadd.f32 0.0, %v3571
      %v3573 = vpop.f32.mrb[0].mxu0
      %3574 = vmatprep.mubr.bf16.mxu0 %v2363
      %3575 = vmatmul.mubr.bf16.gmra.mrb[0].mxu0 %v2362
      %v3576 = vpop.f32.mrb[0].mxu0
      %v3577 = vadd.f32 0.0, %v3576
      %v3578 = vpop.f32.mrb[0].mxu0
      %v3579 = vpop.f32.mrb[0].mxu0
      %v3580 = vadd.f32 0.0, %v3579
      %v3581 = vpop.f32.mrb[0].mxu0
      %3582 = vmatprep.mubr.bf16.mxu0 %v2368
      %3583 = vmatmul.mubr.bf16.gmra.mrb[0].mxu0 %v2367
      %v3584 = vpop.f32.mrb[0].mxu0
      %v3585 = vadd.f32 0.0, %v3584
      %v3586 = vpop.f32.mrb[0].mxu0
      %v3587 = vpop.f32.mrb[0].mxu0
      %v3588 = vadd.f32 0.0, %v3587
      %v3589 = vpop.f32.mrb[0].mxu0
      %3590 = vdwg.mxu0
      %3591 = vmatprep.subr.bf16.mxu0 0
      %3592 = vmatpush1.bf16.msra.mxu0 %v2792
      %3593 = vmatprep.subr.bf16.mxu0 0
      %3594 = vmatpush1.bf16.msra.mxu0 %v2793
      %3595 = vmatprep.subr.bf16.mxu0 0
      %3596 = vmatpush1.bf16.msra.mxu0 %v2794
      %3597 = vmatprep.subr.bf16.mxu0 0
      %3598 = vmatpush1.bf16.msra.mxu0 %v2795
      %3599 = vmatprep.subr.bf16.mxu0 0
      %3600 = vmatpush1.bf16.msra.mxu0 %v2796
      %3601 = vmatprep.subr.bf16.mxu0 0
      %3602 = vmatpush1.bf16.msra.mxu0 %v2797
      %3603 = vmatprep.subr.bf16.mxu0 0
      %3604 = vmatpush1.bf16.msra.mxu0 %v2798
      %3605 = vmatprep.subr.bf16.mxu0 0
      %3606 = vmatpush1.bf16.msra.mxu0 %v2799
      %3607 = vmatprep.subr.bf16.mxu0 0
      %3608 = vmatpush1.bf16.msra.mxu0 %v2800
      %3609 = vmatprep.subr.bf16.mxu0 0
      %3610 = vmatpush1.bf16.msra.mxu0 %v2801
      %3611 = vmatprep.subr.bf16.mxu0 0
      %3612 = vmatpush1.bf16.msra.mxu0 %v2802
      %3613 = vmatprep.subr.bf16.mxu0 0
      %3614 = vmatpush1.bf16.msra.mxu0 %v2803
      %3615 = vmatprep.subr.bf16.mxu0 0
      %3616 = vmatpush1.bf16.msra.mxu0 %v2804
      %3617 = vmatprep.subr.bf16.mxu0 0
      %3618 = vmatpush1.bf16.msra.mxu0 %v2805
      %3619 = vmatprep.subr.bf16.mxu0 0
      %3620 = vmatpush1.bf16.msra.mxu0 %v2806
      %3621 = vmatprep.subr.bf16.mxu0 0
      %3622 = vmatpush1.bf16.msra.mxu0 %v2807
      %3623 = vmatprep.mubr.bf16.mxu0 %v2055
      %3624 = vmatmul.mubr.bf16.gmra.mrb[0].mxu0 %v2054
      %v3625 = vpop.f32.mrb[0].mxu0
      %v3626 = vadd.f32 %v3081, %v3625
      %v3627 = vpop.f32.mrb[0].mxu0
      %v3628 = vpop.f32.mrb[0].mxu0
      %v3629 = vadd.f32 %v3084, %v3628
      %v3630 = vpop.f32.mrb[0].mxu0
      %3631 = vmatprep.mubr.bf16.mxu0 %v2060
      %3632 = vmatmul.mubr.bf16.gmra.mrb[0].mxu0 %v2059
      %v3633 = vpop.f32.mrb[0].mxu0
      %v3634 = vadd.f32 %v3089, %v3633
      %v3635 = vpop.f32.mrb[0].mxu0
      %v3636 = vpop.f32.mrb[0].mxu0
      %v3637 = vadd.f32 %v3092, %v3636
      %v3638 = vpop.f32.mrb[0].mxu0
      %3639 = vmatprep.mubr.bf16.mxu0 %v2065
      %3640 = vmatmul.mubr.bf16.gmra.mrb[0].mxu0 %v2064
      %v3641 = vpop.f32.mrb[0].mxu0
      %v3642 = vadd.f32 %v3097, %v3641
      %v3643 = vpop.f32.mrb[0].mxu0
      %v3644 = vpop.f32.mrb[0].mxu0
      %v3645 = vadd.f32 %v3100, %v3644
      %v3646 = vpop.f32.mrb[0].mxu0
      %3647 = vmatprep.mubr.bf16.mxu0 %v2070
      %3648 = vmatmul.mubr.bf16.gmra.mrb[0].mxu0 %v2069
      %v3649 = vpop.f32.mrb[0].mxu0
      %v3650 = vadd.f32 %v3105, %v3649
      %v3651 = vpop.f32.mrb[0].mxu0
      %v3652 = vpop.f32.mrb[0].mxu0
      %v3653 = vadd.f32 %v3108, %v3652
      %v3654 = vpop.f32.mrb[0].mxu0
      %3655 = vmatprep.mubr.bf16.mxu0 %v2075
      %3656 = vmatmul.mubr.bf16.gmra.mrb[0].mxu0 %v2074
      %v3657 = vpop.f32.mrb[0].mxu0
      %v3658 = vadd.f32 %v3113, %v3657
      %v3659 = vpop.f32.mrb[0].mxu0
      %v3660 = vpop.f32.mrb[0].mxu0
      %v3661 = vadd.f32 %v3116, %v3660
      %v3662 = vpop.f32.mrb[0].mxu0
      %3663 = vmatprep.mubr.bf16.mxu0 %v2080
      %3664 = vmatmul.mubr.bf16.gmra.mrb[0].mxu0 %v2079
      %v3665 = vpop.f32.mrb[0].mxu0
      %v3666 = vadd.f32 %v3121, %v3665
      %v3667 = vpop.f32.mrb[0].mxu0
      %v3668 = vpop.f32.mrb[0].mxu0
      %v3669 = vadd.f32 %v3124, %v3668
      %v3670 = vpop.f32.mrb[0].mxu0
      %3671 = vmatprep.mubr.bf16.mxu0 %v2085
      %3672 = vmatmul.mubr.bf16.gmra.mrb[0].mxu0 %v2084
      %v3673 = vpop.f32.mrb[0].mxu0
      %v3674 = vadd.f32 %v3129, %v3673
      %v3675 = vpop.f32.mrb[0].mxu0
      %v3676 = vpop.f32.mrb[0].mxu0
      %v3677 = vadd.f32 %v3132, %v3676
      %v3678 = vpop.f32.mrb[0].mxu0
      %3679 = vmatprep.mubr.bf16.mxu0 %v2090
      %3680 = vmatmul.mubr.bf16.gmra.mrb[0].mxu0 %v2089
      %v3681 = vpop.f32.mrb[0].mxu0
      %v3682 = vadd.f32 %v3137, %v3681
      %v3683 = vpop.f32.mrb[0].mxu0
      %v3684 = vpop.f32.mrb[0].mxu0
      %v3685 = vadd.f32 %v3140, %v3684
      %v3686 = vpop.f32.mrb[0].mxu0
      %3687 = vmatprep.mubr.bf16.mxu0 %v2095
      %3688 = vmatmul.mubr.bf16.gmra.mrb[0].mxu0 %v2094
      %v3689 = vpop.f32.mrb[0].mxu0
      %v3690 = vadd.f32 %v3145, %v3689
      %v3691 = vpop.f32.mrb[0].mxu0
      %v3692 = vpop.f32.mrb[0].mxu0
      %v3693 = vadd.f32 %v3148, %v3692
      %v3694 = vpop.f32.mrb[0].mxu0
      %3695 = vmatprep.mubr.bf16.mxu0 %v2100
      %3696 = vmatmul.mubr.bf16.gmra.mrb[0].mxu0 %v2099
      %v3697 = vpop.f32.mrb[0].mxu0
      %v3698 = vadd.f32 %v3153, %v3697
      %v3699 = vpop.f32.mrb[0].mxu0
      %v3700 = vpop.f32.mrb[0].mxu0
      %v3701 = vadd.f32 %v3156, %v3700
      %v3702 = vpop.f32.mrb[0].mxu0
      %3703 = vmatprep.mubr.bf16.mxu0 %v2105
      %3704 = vmatmul.mubr.bf16.gmra.mrb[0].mxu0 %v2104
      %v3705 = vpop.f32.mrb[0].mxu0
      %v3706 = vadd.f32 %v3161, %v3705
      %v3707 = vpop.f32.mrb[0].mxu0
      %v3708 = vpop.f32.mrb[0].mxu0
      %v3709 = vadd.f32 %v3164, %v3708
      %v3710 = vpop.f32.mrb[0].mxu0
      %3711 = vmatprep.mubr.bf16.mxu0 %v2110
      %3712 = vmatmul.mubr.bf16.gmra.mrb[0].mxu0 %v2109
      %v3713 = vpop.f32.mrb[0].mxu0
      %v3714 = vadd.f32 %v3169, %v3713
      %v3715 = vpop.f32.mrb[0].mxu0
      %v3716 = vpop.f32.mrb[0].mxu0
      %v3717 = vadd.f32 %v3172, %v3716
      %v3718 = vpop.f32.mrb[0].mxu0
      %3719 = vmatprep.mubr.bf16.mxu0 %v2115
      %3720 = vmatmul.mubr.bf16.gmra.mrb[0].mxu0 %v2114
      %v3721 = vpop.f32.mrb[0].mxu0
      %v3722 = vadd.f32 %v3177, %v3721
      %v3723 = vpop.f32.mrb[0].mxu0
      %v3724 = vpop.f32.mrb[0].mxu0
      %v3725 = vadd.f32 %v3180, %v3724
      %v3726 = vpop.f32.mrb[0].mxu0
      %3727 = vmatprep.mubr.bf16.mxu0 %v2120
      %3728 = vmatmul.mubr.bf16.gmra.mrb[0].mxu0 %v2119
      %v3729 = vpop.f32.mrb[0].mxu0
      %v3730 = vadd.f32 %v3185, %v3729
      %v3731 = vpop.f32.mrb[0].mxu0
      %v3732 = vpop.f32.mrb[0].mxu0
      %v3733 = vadd.f32 %v3188, %v3732
      %v3734 = vpop.f32.mrb[0].mxu0
      %3735 = vmatprep.mubr.bf16.mxu0 %v2125
      %3736 = vmatmul.mubr.bf16.gmra.mrb[0].mxu0 %v2124
      %v3737 = vpop.f32.mrb[0].mxu0
      %v3738 = vadd.f32 %v3193, %v3737
      %v3739 = vpop.f32.mrb[0].mxu0
      %v3740 = vpop.f32.mrb[0].mxu0
      %v3741 = vadd.f32 %v3196, %v3740
      %v3742 = vpop.f32.mrb[0].mxu0
      %3743 = vmatprep.mubr.bf16.mxu0 %v2130
      %3744 = vmatmul.mubr.bf16.gmra.mrb[0].mxu0 %v2129
      %v3745 = vpop.f32.mrb[0].mxu0
      %v3746 = vadd.f32 %v3201, %v3745
      %v3747 = vpop.f32.mrb[0].mxu0
      %v3748 = vpop.f32.mrb[0].mxu0
      %v3749 = vadd.f32 %v3204, %v3748
      %v3750 = vpop.f32.mrb[0].mxu0
      %3751 = vmatprep.mubr.bf16.mxu0 %v2135
      %3752 = vmatmul.mubr.bf16.gmra.mrb[0].mxu0 %v2134
      %v3753 = vpop.f32.mrb[0].mxu0
      %v3754 = vadd.f32 %v3209, %v3753
      %v3755 = vpop.f32.mrb[0].mxu0
      %v3756 = vpop.f32.mrb[0].mxu0
      %v3757 = vadd.f32 %v3212, %v3756
      %v3758 = vpop.f32.mrb[0].mxu0
      %3759 = vmatprep.mubr.bf16.mxu0 %v2140
      %3760 = vmatmul.mubr.bf16.gmra.mrb[0].mxu0 %v2139
      %v3761 = vpop.f32.mrb[0].mxu0
      %v3762 = vadd.f32 %v3217, %v3761
      %v3763 = vpop.f32.mrb[0].mxu0
      %v3764 = vpop.f32.mrb[0].mxu0
      %v3765 = vadd.f32 %v3220, %v3764
      %v3766 = vpop.f32.mrb[0].mxu0
      %3767 = vmatprep.mubr.bf16.mxu0 %v2145
      %3768 = vmatmul.mubr.bf16.gmra.mrb[0].mxu0 %v2144
      %v3769 = vpop.f32.mrb[0].mxu0
      %v3770 = vadd.f32 %v3225, %v3769
      %v3771 = vpop.f32.mrb[0].mxu0
      %v3772 = vpop.f32.mrb[0].mxu0
      %v3773 = vadd.f32 %v3228, %v3772
      %v3774 = vpop.f32.mrb[0].mxu0
      %3775 = vmatprep.mubr.bf16.mxu0 %v2150
      %3776 = vmatmul.mubr.bf16.gmra.mrb[0].mxu0 %v2149
      %v3777 = vpop.f32.mrb[0].mxu0
      %v3778 = vadd.f32 %v3233, %v3777
      %v3779 = vpop.f32.mrb[0].mxu0
      %v3780 = vpop.f32.mrb[0].mxu0
      %v3781 = vadd.f32 %v3236, %v3780
      %v3782 = vpop.f32.mrb[0].mxu0
      %3783 = vmatprep.mubr.bf16.mxu0 %v2155
      %3784 = vmatmul.mubr.bf16.gmra.mrb[0].mxu0 %v2154
      %v3785 = vpop.f32.mrb[0].mxu0
      %v3786 = vadd.f32 %v3241, %v3785
      %v3787 = vpop.f32.mrb[0].mxu0
      %v3788 = vpop.f32.mrb[0].mxu0
      %v3789 = vadd.f32 %v3244, %v3788
      %v3790 = vpop.f32.mrb[0].mxu0
      %3791 = vmatprep.mubr.bf16.mxu0 %v2160
      %3792 = vmatmul.mubr.bf16.gmra.mrb[0].mxu0 %v2159
      %v3793 = vpop.f32.mrb[0].mxu0
      %v3794 = vadd.f32 %v3249, %v3793
      %v3795 = vpop.f32.mrb[0].mxu0
      %v3796 = vpop.f32.mrb[0].mxu0
      %v3797 = vadd.f32 %v3252, %v3796
      %v3798 = vpop.f32.mrb[0].mxu0
      %3799 = vmatprep.mubr.bf16.mxu0 %v2165
      %3800 = vmatmul.mubr.bf16.gmra.mrb[0].mxu0 %v2164
      %v3801 = vpop.f32.mrb[0].mxu0
      %v3802 = vadd.f32 %v3257, %v3801
      %v3803 = vpop.f32.mrb[0].mxu0
      %v3804 = vpop.f32.mrb[0].mxu0
      %v3805 = vadd.f32 %v3260, %v3804
      %v3806 = vpop.f32.mrb[0].mxu0
      %3807 = vmatprep.mubr.bf16.mxu0 %v2170
      %3808 = vmatmul.mubr.bf16.gmra.mrb[0].mxu0 %v2169
      %v3809 = vpop.f32.mrb[0].mxu0
      %v3810 = vadd.f32 %v3265, %v3809
      %v3811 = vpop.f32.mrb[0].mxu0
      %v3812 = vpop.f32.mrb[0].mxu0
      %v3813 = vadd.f32 %v3268, %v3812
      %v3814 = vpop.f32.mrb[0].mxu0
      %3815 = vmatprep.mubr.bf16.mxu0 %v2175
      %3816 = vmatmul.mubr.bf16.gmra.mrb[0].mxu0 %v2174
      %v3817 = vpop.f32.mrb[0].mxu0
      %v3818 = vadd.f32 %v3273, %v3817
      %v3819 = vpop.f32.mrb[0].mxu0
      %v3820 = vpop.f32.mrb[0].mxu0
      %v3821 = vadd.f32 %v3276, %v3820
      %v3822 = vpop.f32.mrb[0].mxu0
      %3823 = vmatprep.mubr.bf16.mxu0 %v2180
      %3824 = vmatmul.mubr.bf16.gmra.mrb[0].mxu0 %v2179
      %v3825 = vpop.f32.mrb[0].mxu0
      %v3826 = vadd.f32 %v3281, %v3825
      %v3827 = vpop.f32.mrb[0].mxu0
      %v3828 = vpop.f32.mrb[0].mxu0
      %v3829 = vadd.f32 %v3284, %v3828
      %v3830 = vpop.f32.mrb[0].mxu0
      %3831 = vmatprep.mubr.bf16.mxu0 %v2185
      %3832 = vmatmul.mubr.bf16.gmra.mrb[0].mxu0 %v2184
      %v3833 = vpop.f32.mrb[0].mxu0
      %v3834 = vadd.f32 %v3289, %v3833
      %v3835 = vpop.f32.mrb[0].mxu0
      %v3836 = vpop.f32.mrb[0].mxu0
      %v3837 = vadd.f32 %v3292, %v3836
      %v3838 = vpop.f32.mrb[0].mxu0
      %3839 = vmatprep.mubr.bf16.mxu0 %v2190
      %3840 = vmatmul.mubr.bf16.gmra.mrb[0].mxu0 %v2189
      %v3841 = vpop.f32.mrb[0].mxu0
      %v3842 = vadd.f32 %v3297, %v3841
      %v3843 = vpop.f32.mrb[0].mxu0
      %v3844 = vpop.f32.mrb[0].mxu0
      %v3845 = vadd.f32 %v3300, %v3844
      %v3846 = vpop.f32.mrb[0].mxu0
      %3847 = vmatprep.mubr.bf16.mxu0 %v2195
      %3848 = vmatmul.mubr.bf16.gmra.mrb[0].mxu0 %v2194
      %v3849 = vpop.f32.mrb[0].mxu0
      %v3850 = vadd.f32 %v3305, %v3849
      %v3851 = vpop.f32.mrb[0].mxu0
      %v3852 = vpop.f32.mrb[0].mxu0
      %v3853 = vadd.f32 %v3308, %v3852
      %v3854 = vpop.f32.mrb[0].mxu0
      %3855 = vmatprep.mubr.bf16.mxu0 %v2200
      %3856 = vmatmul.mubr.bf16.gmra.mrb[0].mxu0 %v2199
      %v3857 = vpop.f32.mrb[0].mxu0
      %v3858 = vadd.f32 %v3313, %v3857
      %v3859 = vpop.f32.mrb[0].mxu0
      %v3860 = vpop.f32.mrb[0].mxu0
      %v3861 = vadd.f32 %v3316, %v3860
      %v3862 = vpop.f32.mrb[0].mxu0
      %3863 = vmatprep.mubr.bf16.mxu0 %v2205
      %3864 = vmatmul.mubr.bf16.gmra.mrb[0].mxu0 %v2204
      %v3865 = vpop.f32.mrb[0].mxu0
      %v3866 = vadd.f32 %v3321, %v3865
      %v3867 = vpop.f32.mrb[0].mxu0
      %v3868 = vpop.f32.mrb[0].mxu0
      %v3869 = vadd.f32 %v3324, %v3868
      %v3870 = vpop.f32.mrb[0].mxu0
      %3871 = vmatprep.mubr.bf16.mxu0 %v2210
      %3872 = vmatmul.mubr.bf16.gmra.mrb[0].mxu0 %v2209
      %v3873 = vpop.f32.mrb[0].mxu0
      %v3874 = vadd.f32 %v3329, %v3873
      %v3875 = vpop.f32.mrb[0].mxu0
      %v3876 = vpop.f32.mrb[0].mxu0
      %v3877 = vadd.f32 %v3332, %v3876
      %v3878 = vpop.f32.mrb[0].mxu0
      %3879 = vmatprep.mubr.bf16.mxu0 %v2215
      %3880 = vmatmul.mubr.bf16.gmra.mrb[0].mxu0 %v2214
      %v3881 = vpop.f32.mrb[0].mxu0
      %v3882 = vadd.f32 %v3337, %v3881
      %v3883 = vpop.f32.mrb[0].mxu0
      %v3884 = vpop.f32.mrb[0].mxu0
      %v3885 = vadd.f32 %v3340, %v3884
      %v3886 = vpop.f32.mrb[0].mxu0
      %3887 = vmatprep.mubr.bf16.mxu0 %v2220
      %3888 = vmatmul.mubr.bf16.gmra.mrb[0].mxu0 %v2219
      %v3889 = vpop.f32.mrb[0].mxu0
      %v3890 = vadd.f32 %v3345, %v3889
      %v3891 = vpop.f32.mrb[0].mxu0
      %v3892 = vpop.f32.mrb[0].mxu0
      %v3893 = vadd.f32 %v3348, %v3892
      %v3894 = vpop.f32.mrb[0].mxu0
      %3895 = vmatprep.mubr.bf16.mxu0 %v2225
      %3896 = vmatmul.mubr.bf16.gmra.mrb[0].mxu0 %v2224
      %v3897 = vpop.f32.mrb[0].mxu0
      %v3898 = vadd.f32 %v3353, %v3897
      %v3899 = vpop.f32.mrb[0].mxu0
      %v3900 = vpop.f32.mrb[0].mxu0
      %v3901 = vadd.f32 %v3356, %v3900
      %v3902 = vpop.f32.mrb[0].mxu0
      %3903 = vmatprep.mubr.bf16.mxu0 %v2230
      %3904 = vmatmul.mubr.bf16.gmra.mrb[0].mxu0 %v2229
      %v3905 = vpop.f32.mrb[0].mxu0
      %v3906 = vadd.f32 %v3361, %v3905
      %v3907 = vpop.f32.mrb[0].mxu0
      %v3908 = vpop.f32.mrb[0].mxu0
      %v3909 = vadd.f32 %v3364, %v3908
      %v3910 = vpop.f32.mrb[0].mxu0
      %3911 = vmatprep.mubr.bf16.mxu0 %v2235
      %3912 = vmatmul.mubr.bf16.gmra.mrb[0].mxu0 %v2234
      %v3913 = vpop.f32.mrb[0].mxu0
      %v3914 = vadd.f32 %v3369, %v3913
      %v3915 = vpop.f32.mrb[0].mxu0
      %v3916 = vpop.f32.mrb[0].mxu0
      %v3917 = vadd.f32 %v3372, %v3916
      %v3918 = vpop.f32.mrb[0].mxu0
      %3919 = vmatprep.mubr.bf16.mxu0 %v2240
      %3920 = vmatmul.mubr.bf16.gmra.mrb[0].mxu0 %v2239
      %v3921 = vpop.f32.mrb[0].mxu0
      %v3922 = vadd.f32 %v3377, %v3921
      %v3923 = vpop.f32.mrb[0].mxu0
      %v3924 = vpop.f32.mrb[0].mxu0
      %v3925 = vadd.f32 %v3380, %v3924
      %v3926 = vpop.f32.mrb[0].mxu0
      %3927 = vmatprep.mubr.bf16.mxu0 %v2245
      %3928 = vmatmul.mubr.bf16.gmra.mrb[0].mxu0 %v2244
      %v3929 = vpop.f32.mrb[0].mxu0
      %v3930 = vadd.f32 %v3385, %v3929
      %v3931 = vpop.f32.mrb[0].mxu0
      %v3932 = vpop.f32.mrb[0].mxu0
      %v3933 = vadd.f32 %v3388, %v3932
      %v3934 = vpop.f32.mrb[0].mxu0
      %3935 = vmatprep.mubr.bf16.mxu0 %v2250
      %3936 = vmatmul.mubr.bf16.gmra.mrb[0].mxu0 %v2249
      %v3937 = vpop.f32.mrb[0].mxu0
      %v3938 = vadd.f32 %v3393, %v3937
      %v3939 = vpop.f32.mrb[0].mxu0
      %v3940 = vpop.f32.mrb[0].mxu0
      %v3941 = vadd.f32 %v3396, %v3940
      %v3942 = vpop.f32.mrb[0].mxu0
      %3943 = vmatprep.mubr.bf16.mxu0 %v2255
      %3944 = vmatmul.mubr.bf16.gmra.mrb[0].mxu0 %v2254
      %v3945 = vpop.f32.mrb[0].mxu0
      %v3946 = vadd.f32 %v3401, %v3945
      %v3947 = vpop.f32.mrb[0].mxu0
      %v3948 = vpop.f32.mrb[0].mxu0
      %v3949 = vadd.f32 %v3404, %v3948
      %v3950 = vpop.f32.mrb[0].mxu0
      %3951 = vmatprep.mubr.bf16.mxu0 %v2260
      %3952 = vmatmul.mubr.bf16.gmra.mrb[0].mxu0 %v2259
      %v3953 = vpop.f32.mrb[0].mxu0
      %v3954 = vadd.f32 %v3409, %v3953
      %v3955 = vpop.f32.mrb[0].mxu0
      %v3956 = vpop.f32.mrb[0].mxu0
      %v3957 = vadd.f32 %v3412, %v3956
      %v3958 = vpop.f32.mrb[0].mxu0
      %3959 = vmatprep.mubr.bf16.mxu0 %v2265
      %3960 = vmatmul.mubr.bf16.gmra.mrb[0].mxu0 %v2264
      %v3961 = vpop.f32.mrb[0].mxu0
      %v3962 = vadd.f32 %v3417, %v3961
      %v3963 = vpop.f32.mrb[0].mxu0
      %v3964 = vpop.f32.mrb[0].mxu0
      %v3965 = vadd.f32 %v3420, %v3964
      %v3966 = vpop.f32.mrb[0].mxu0
      %3967 = vmatprep.mubr.bf16.mxu0 %v2270
      %3968 = vmatmul.mubr.bf16.gmra.mrb[0].mxu0 %v2269
      %v3969 = vpop.f32.mrb[0].mxu0
      %v3970 = vadd.f32 %v3425, %v3969
      %v3971 = vpop.f32.mrb[0].mxu0
      %v3972 = vpop.f32.mrb[0].mxu0
      %v3973 = vadd.f32 %v3428, %v3972
      %v3974 = vpop.f32.mrb[0].mxu0
      %3975 = vmatprep.mubr.bf16.mxu0 %v2275
      %3976 = vmatmul.mubr.bf16.gmra.mrb[0].mxu0 %v2274
      %v3977 = vpop.f32.mrb[0].mxu0
      %v3978 = vadd.f32 %v3433, %v3977
      %v3979 = vpop.f32.mrb[0].mxu0
      %v3980 = vpop.f32.mrb[0].mxu0
      %v3981 = vadd.f32 %v3436, %v3980
      %v3982 = vpop.f32.mrb[0].mxu0
      %3983 = vmatprep.mubr.bf16.mxu0 %v2280
      %3984 = vmatmul.mubr.bf16.gmra.mrb[0].mxu0 %v2279
      %v3985 = vpop.f32.mrb[0].mxu0
      %v3986 = vadd.f32 %v3441, %v3985
      %v3987 = vpop.f32.mrb[0].mxu0
      %v3988 = vpop.f32.mrb[0].mxu0
      %v3989 = vadd.f32 %v3444, %v3988
      %v3990 = vpop.f32.mrb[0].mxu0
      %3991 = vmatprep.mubr.bf16.mxu0 %v2285
      %3992 = vmatmul.mubr.bf16.gmra.mrb[0].mxu0 %v2284
      %v3993 = vpop.f32.mrb[0].mxu0
      %v3994 = vadd.f32 %v3449, %v3993
      %v3995 = vpop.f32.mrb[0].mxu0
      %v3996 = vpop.f32.mrb[0].mxu0
      %v3997 = vadd.f32 %v3452, %v3996
      %v3998 = vpop.f32.mrb[0].mxu0
      %3999 = vmatprep.mubr.bf16.mxu0 %v2290
      %4000 = vmatmul.mubr.bf16.gmra.mrb[0].mxu0 %v2289
      %v4001 = vpop.f32.mrb[0].mxu0
      %v4002 = vadd.f32 %v3457, %v4001
      %v4003 = vpop.f32.mrb[0].mxu0
      %v4004 = vpop.f32.mrb[0].mxu0
      %v4005 = vadd.f32 %v3460, %v4004
      %v4006 = vpop.f32.mrb[0].mxu0
      %4007 = vmatprep.mubr.bf16.mxu0 %v2295
      %4008 = vmatmul.mubr.bf16.gmra.mrb[0].mxu0 %v2294
      %v4009 = vpop.f32.mrb[0].mxu0
      %v4010 = vadd.f32 %v3465, %v4009
      %v4011 = vpop.f32.mrb[0].mxu0
      %v4012 = vpop.f32.mrb[0].mxu0
      %v4013 = vadd.f32 %v3468, %v4012
      %v4014 = vpop.f32.mrb[0].mxu0
      %4015 = vmatprep.mubr.bf16.mxu0 %v2300
      %4016 = vmatmul.mubr.bf16.gmra.mrb[0].mxu0 %v2299
      %v4017 = vpop.f32.mrb[0].mxu0
      %v4018 = vadd.f32 %v3473, %v4017
      %v4019 = vpop.f32.mrb[0].mxu0
      %v4020 = vpop.f32.mrb[0].mxu0
      %v4021 = vadd.f32 %v3476, %v4020
      %v4022 = vpop.f32.mrb[0].mxu0
      %4023 = vmatprep.mubr.bf16.mxu0 %v2305
      %4024 = vmatmul.mubr.bf16.gmra.mrb[0].mxu0 %v2304
      %v4025 = vpop.f32.mrb[0].mxu0
      %v4026 = vadd.f32 %v3481, %v4025
      %v4027 = vpop.f32.mrb[0].mxu0
      %v4028 = vpop.f32.mrb[0].mxu0
      %v4029 = vadd.f32 %v3484, %v4028
      %v4030 = vpop.f32.mrb[0].mxu0
      %4031 = vmatprep.mubr.bf16.mxu0 %v2310
      %4032 = vmatmul.mubr.bf16.gmra.mrb[0].mxu0 %v2309
      %v4033 = vpop.f32.mrb[0].mxu0
      %v4034 = vadd.f32 %v3489, %v4033
      %v4035 = vpop.f32.mrb[0].mxu0
      %v4036 = vpop.f32.mrb[0].mxu0
      %v4037 = vadd.f32 %v3492, %v4036
      %v4038 = vpop.f32.mrb[0].mxu0
      %4039 = vmatprep.mubr.bf16.mxu0 %v2315
      %4040 = vmatmul.mubr.bf16.gmra.mrb[0].mxu0 %v2314
      %v4041 = vpop.f32.mrb[0].mxu0
      %v4042 = vadd.f32 %v3497, %v4041
      %v4043 = vpop.f32.mrb[0].mxu0
      %v4044 = vpop.f32.mrb[0].mxu0
      %v4045 = vadd.f32 %v3500, %v4044
      %v4046 = vpop.f32.mrb[0].mxu0
      %4047 = vmatprep.mubr.bf16.mxu0 %v2320
      %4048 = vmatmul.mubr.bf16.gmra.mrb[0].mxu0 %v2319
      %v4049 = vpop.f32.mrb[0].mxu0
      %v4050 = vadd.f32 %v3505, %v4049
      %v4051 = vpop.f32.mrb[0].mxu0
      %v4052 = vpop.f32.mrb[0].mxu0
      %v4053 = vadd.f32 %v3508, %v4052
      %v4054 = vpop.f32.mrb[0].mxu0
      %4055 = vmatprep.mubr.bf16.mxu0 %v2325
      %4056 = vmatmul.mubr.bf16.gmra.mrb[0].mxu0 %v2324
      %v4057 = vpop.f32.mrb[0].mxu0
      %v4058 = vadd.f32 %v3513, %v4057
      %v4059 = vpop.f32.mrb[0].mxu0
      %v4060 = vpop.f32.mrb[0].mxu0
      %v4061 = vadd.f32 %v3516, %v4060
      %v4062 = vpop.f32.mrb[0].mxu0
      %4063 = vmatprep.mubr.bf16.mxu0 %v2330
      %4064 = vmatmul.mubr.bf16.gmra.mrb[0].mxu0 %v2329
      %v4065 = vpop.f32.mrb[0].mxu0
      %v4066 = vadd.f32 %v3521, %v4065
      %v4067 = vpop.f32.mrb[0].mxu0
      %v4068 = vpop.f32.mrb[0].mxu0
      %v4069 = vadd.f32 %v3524, %v4068
      %v4070 = vpop.f32.mrb[0].mxu0
      %4071 = vmatprep.mubr.bf16.mxu0 %v2335
      %4072 = vmatmul.mubr.bf16.gmra.mrb[0].mxu0 %v2334
      %v4073 = vpop.f32.mrb[0].mxu0
      %v4074 = vadd.f32 %v3529, %v4073
      %v4075 = vpop.f32.mrb[0].mxu0
      %v4076 = vpop.f32.mrb[0].mxu0
      %v4077 = vadd.f32 %v3532, %v4076
      %v4078 = vpop.f32.mrb[0].mxu0
      %4079 = vmatprep.mubr.bf16.mxu0 %v2340
      %4080 = vmatmul.mubr.bf16.gmra.mrb[0].mxu0 %v2339
      %v4081 = vpop.f32.mrb[0].mxu0
      %v4082 = vadd.f32 %v3537, %v4081
      %v4083 = vpop.f32.mrb[0].mxu0
      %v4084 = vpop.f32.mrb[0].mxu0
      %v4085 = vadd.f32 %v3540, %v4084
      %v4086 = vpop.f32.mrb[0].mxu0
      %4087 = vmatprep.mubr.bf16.mxu0 %v2345
      %4088 = vmatmul.mubr.bf16.gmra.mrb[0].mxu0 %v2344
      %v4089 = vpop.f32.mrb[0].mxu0
      %v4090 = vadd.f32 %v3545, %v4089
      %v4091 = vpop.f32.mrb[0].mxu0
      %v4092 = vpop.f32.mrb[0].mxu0
      %v4093 = vadd.f32 %v3548, %v4092
      %v4094 = vpop.f32.mrb[0].mxu0
      %4095 = vmatprep.mubr.bf16.mxu0 %v2350
      %4096 = vmatmul.mubr.bf16.gmra.mrb[0].mxu0 %v2349
      %v4097 = vpop.f32.mrb[0].mxu0
      %v4098 = vadd.f32 %v3553, %v4097
      %v4099 = vpop.f32.mrb[0].mxu0
      %v4100 = vpop.f32.mrb[0].mxu0
      %v4101 = vadd.f32 %v3556, %v4100
      %v4102 = vpop.f32.mrb[0].mxu0
      %4103 = vmatprep.mubr.bf16.mxu0 %v2355
      %4104 = vmatmul.mubr.bf16.gmra.mrb[0].mxu0 %v2354
      %v4105 = vpop.f32.mrb[0].mxu0
      %v4106 = vadd.f32 %v3561, %v4105
      %v4107 = vpop.f32.mrb[0].mxu0
      %v4108 = vpop.f32.mrb[0].mxu0
      %v4109 = vadd.f32 %v3564, %v4108
      %v4110 = vpop.f32.mrb[0].mxu0
      %4111 = vmatprep.mubr.bf16.mxu0 %v2360
      %4112 = vmatmul.mubr.bf16.gmra.mrb[0].mxu0 %v2359
      %v4113 = vpop.f32.mrb[0].mxu0
      %v4114 = vadd.f32 %v3569, %v4113
      %v4115 = vpop.f32.mrb[0].mxu0
      %v4116 = vpop.f32.mrb[0].mxu0
      %v4117 = vadd.f32 %v3572, %v4116
      %v4118 = vpop.f32.mrb[0].mxu0
      %4119 = vmatprep.mubr.bf16.mxu0 %v2365
      %4120 = vmatmul.mubr.bf16.gmra.mrb[0].mxu0 %v2364
      %v4121 = vpop.f32.mrb[0].mxu0
      %v4122 = vadd.f32 %v3577, %v4121
      %v4123 = vpop.f32.mrb[0].mxu0
      %v4124 = vpop.f32.mrb[0].mxu0
      %v4125 = vadd.f32 %v3580, %v4124
      %v4126 = vpop.f32.mrb[0].mxu0
      %4127 = vmatprep.mubr.bf16.mxu0 %v2370
      %4128 = vmatmul.mubr.bf16.gmra.mrb[0].mxu0 %v2369
      %v4129 = vpop.f32.mrb[0].mxu0
      %v4130 = vadd.f32 %v3585, %v4129
      %v4131 = vpop.f32.mrb[0].mxu0
      %v4132 = vpop.f32.mrb[0].mxu0
      %v4133 = vadd.f32 %v3588, %v4132
      %v4134 = vpop.f32.mrb[0].mxu0
      %4135 = vdwg.mxu0
      %4136 = vmatprep.subr.bf16.mxu0 0
      %4137 = vmatpush1.bf16.msra.mxu0 %v2808
      %4138 = vmatprep.subr.bf16.mxu0 0
      %4139 = vmatpush1.bf16.msra.mxu0 %v2809
      %4140 = vmatprep.subr.bf16.mxu0 0
      %4141 = vmatpush1.bf16.msra.mxu0 %v2810
      %4142 = vmatprep.subr.bf16.mxu0 0
      %4143 = vmatpush1.bf16.msra.mxu0 %v2811
      %4144 = vmatprep.subr.bf16.mxu0 0
      %4145 = vmatpush1.bf16.msra.mxu0 %v3044
      %4146 = vmatprep.subr.bf16.mxu0 0
      %4147 = vmatpush1.bf16.msra.mxu0 0
      %4148 = vmatprep.subr.bf16.mxu0 0
      %4149 = vmatpush1.bf16.msra.mxu0 0
      %4150 = vmatprep.subr.bf16.mxu0 0
      %4151 = vmatpush1.bf16.msra.mxu0 0
      %4152 = vmatprep.subr.bf16.mxu0 0
      %4153 = vmatpush1.bf16.msra.mxu0 0
      %4154 = vmatprep.subr.bf16.mxu0 0
      %4155 = vmatpush1.bf16.msra.mxu0 0
      %4156 = vmatprep.subr.bf16.mxu0 0
      %4157 = vmatpush1.bf16.msra.mxu0 0
      %4158 = vmatprep.subr.bf16.mxu0 0
      %4159 = vmatpush1.bf16.msra.mxu0 0
      %4160 = vmatprep.subr.bf16.mxu0 0
      %4161 = vmatpush1.bf16.msra.mxu0 0
      %4162 = vmatprep.subr.bf16.mxu0 0
      %4163 = vmatpush1.bf16.msra.mxu0 0
      %4164 = vmatprep.subr.bf16.mxu0 0
      %4165 = vmatpush1.bf16.msra.mxu0 0
      %4166 = vmatprep.subr.bf16.mxu0 0
      %4167 = vmatpush1.bf16.msra.mxu0 0
      %4168 = vmatprep.mubr.bf16.mxu0 0
      %4169 = vmatmul.mubr.bf16.gmra.mrb[0].mxu0 %v2851
      %v4170 = vpop.f32.mrb[0].mxu0
      %v4171 = vadd.f32 %v3626, %v4170
      %v4172 = vpop.f32.mrb[0].mxu0
      %v4173 = vpop.f32.mrb[0].mxu0
      %v4174 = vadd.f32 %v3629, %v4173
      %v4175 = vpop.f32.mrb[0].mxu0
      %4176 = vmatprep.mubr.bf16.mxu0 0
      %4177 = vmatmul.mubr.bf16.gmra.mrb[0].mxu0 %v2854
      %v4178 = vpop.f32.mrb[0].mxu0
      %v4179 = vadd.f32 %v3634, %v4178
      %v4180 = vpop.f32.mrb[0].mxu0
      %v4181 = vpop.f32.mrb[0].mxu0
      %v4182 = vadd.f32 %v3637, %v4181
      %v4183 = vpop.f32.mrb[0].mxu0
      %4184 = vmatprep.mubr.bf16.mxu0 0
      %4185 = vmatmul.mubr.bf16.gmra.mrb[0].mxu0 %v2857
      %v4186 = vpop.f32.mrb[0].mxu0
      %v4187 = vadd.f32 %v3642, %v4186
      %v4188 = vpop.f32.mrb[0].mxu0
      %v4189 = vpop.f32.mrb[0].mxu0
      %v4190 = vadd.f32 %v3645, %v4189
      %v4191 = vpop.f32.mrb[0].mxu0
      %4192 = vmatprep.mubr.bf16.mxu0 0
      %4193 = vmatmul.mubr.bf16.gmra.mrb[0].mxu0 %v2860
      %v4194 = vpop.f32.mrb[0].mxu0
      %v4195 = vadd.f32 %v3650, %v4194
      %v4196 = vpop.f32.mrb[0].mxu0
      %v4197 = vpop.f32.mrb[0].mxu0
      %v4198 = vadd.f32 %v3653, %v4197
      %v4199 = vpop.f32.mrb[0].mxu0
      %4200 = vmatprep.mubr.bf16.mxu0 0
      %4201 = vmatmul.mubr.bf16.gmra.mrb[0].mxu0 %v2863
      %v4202 = vpop.f32.mrb[0].mxu0
      %v4203 = vadd.f32 %v3658, %v4202
      %v4204 = vpop.f32.mrb[0].mxu0
      %v4205 = vpop.f32.mrb[0].mxu0
      %v4206 = vadd.f32 %v3661, %v4205
      %v4207 = vpop.f32.mrb[0].mxu0
      %4208 = vmatprep.mubr.bf16.mxu0 0
      %4209 = vmatmul.mubr.bf16.gmra.mrb[0].mxu0 %v2866
      %v4210 = vpop.f32.mrb[0].mxu0
      %v4211 = vadd.f32 %v3666, %v4210
      %v4212 = vpop.f32.mrb[0].mxu0
      %v4213 = vpop.f32.mrb[0].mxu0
      %v4214 = vadd.f32 %v3669, %v4213
      %v4215 = vpop.f32.mrb[0].mxu0
      %4216 = vmatprep.mubr.bf16.mxu0 0
      %4217 = vmatmul.mubr.bf16.gmra.mrb[0].mxu0 %v2869
      %v4218 = vpop.f32.mrb[0].mxu0
      %v4219 = vadd.f32 %v3674, %v4218
      %v4220 = vpop.f32.mrb[0].mxu0
      %v4221 = vpop.f32.mrb[0].mxu0
      %v4222 = vadd.f32 %v3677, %v4221
      %v4223 = vpop.f32.mrb[0].mxu0
      %4224 = vmatprep.mubr.bf16.mxu0 0
      %4225 = vmatmul.mubr.bf16.gmra.mrb[0].mxu0 %v2872
      %v4226 = vpop.f32.mrb[0].mxu0
      %v4227 = vadd.f32 %v3682, %v4226
      %v4228 = vpop.f32.mrb[0].mxu0
      %v4229 = vpop.f32.mrb[0].mxu0
      %v4230 = vadd.f32 %v3685, %v4229
      %v4231 = vpop.f32.mrb[0].mxu0
      %4232 = vmatprep.mubr.bf16.mxu0 0
      %4233 = vmatmul.mubr.bf16.gmra.mrb[0].mxu0 %v2875
      %v4234 = vpop.f32.mrb[0].mxu0
      %v4235 = vadd.f32 %v3690, %v4234
      %v4236 = vpop.f32.mrb[0].mxu0
      %v4237 = vpop.f32.mrb[0].mxu0
      %v4238 = vadd.f32 %v3693, %v4237
      %v4239 = vpop.f32.mrb[0].mxu0
      %4240 = vmatprep.mubr.bf16.mxu0 0
      %4241 = vmatmul.mubr.bf16.gmra.mrb[0].mxu0 %v2878
      %v4242 = vpop.f32.mrb[0].mxu0
      %v4243 = vadd.f32 %v3698, %v4242
      %v4244 = vpop.f32.mrb[0].mxu0
      %v4245 = vpop.f32.mrb[0].mxu0
      %v4246 = vadd.f32 %v3701, %v4245
      %v4247 = vpop.f32.mrb[0].mxu0
      %4248 = vmatprep.mubr.bf16.mxu0 0
      %4249 = vmatmul.mubr.bf16.gmra.mrb[0].mxu0 %v2881
      %v4250 = vpop.f32.mrb[0].mxu0
      %v4251 = vadd.f32 %v3706, %v4250
      %v4252 = vpop.f32.mrb[0].mxu0
      %v4253 = vpop.f32.mrb[0].mxu0
      %v4254 = vadd.f32 %v3709, %v4253
      %v4255 = vpop.f32.mrb[0].mxu0
      %4256 = vmatprep.mubr.bf16.mxu0 0
      %4257 = vmatmul.mubr.bf16.gmra.mrb[0].mxu0 %v2884
      %v4258 = vpop.f32.mrb[0].mxu0
      %v4259 = vadd.f32 %v3714, %v4258
      %v4260 = vpop.f32.mrb[0].mxu0
      %v4261 = vpop.f32.mrb[0].mxu0
      %v4262 = vadd.f32 %v3717, %v4261
      %v4263 = vpop.f32.mrb[0].mxu0
      %4264 = vmatprep.mubr.bf16.mxu0 0
      %4265 = vmatmul.mubr.bf16.gmra.mrb[0].mxu0 %v2887
      %v4266 = vpop.f32.mrb[0].mxu0
      %v4267 = vadd.f32 %v3722, %v4266
      %v4268 = vpop.f32.mrb[0].mxu0
      %v4269 = vpop.f32.mrb[0].mxu0
      %v4270 = vadd.f32 %v3725, %v4269
      %v4271 = vpop.f32.mrb[0].mxu0
      %4272 = vmatprep.mubr.bf16.mxu0 0
      %4273 = vmatmul.mubr.bf16.gmra.mrb[0].mxu0 %v2890
      %v4274 = vpop.f32.mrb[0].mxu0
      %v4275 = vadd.f32 %v3730, %v4274
      %v4276 = vpop.f32.mrb[0].mxu0
      %v4277 = vpop.f32.mrb[0].mxu0
      %v4278 = vadd.f32 %v3733, %v4277
      %v4279 = vpop.f32.mrb[0].mxu0
      %4280 = vmatprep.mubr.bf16.mxu0 0
      %4281 = vmatmul.mubr.bf16.gmra.mrb[0].mxu0 %v2893
      %v4282 = vpop.f32.mrb[0].mxu0
      %v4283 = vadd.f32 %v3738, %v4282
      %v4284 = vpop.f32.mrb[0].mxu0
      %v4285 = vpop.f32.mrb[0].mxu0
      %v4286 = vadd.f32 %v3741, %v4285
      %v4287 = vpop.f32.mrb[0].mxu0
      %4288 = vmatprep.mubr.bf16.mxu0 0
      %4289 = vmatmul.mubr.bf16.gmra.mrb[0].mxu0 %v2896
      %v4290 = vpop.f32.mrb[0].mxu0
      %v4291 = vadd.f32 %v3746, %v4290
      %v4292 = vpop.f32.mrb[0].mxu0
      %v4293 = vpop.f32.mrb[0].mxu0
      %v4294 = vadd.f32 %v3749, %v4293
      %v4295 = vpop.f32.mrb[0].mxu0
      %4296 = vmatprep.mubr.bf16.mxu0 0
      %4297 = vmatmul.mubr.bf16.gmra.mrb[0].mxu0 %v2899
      %v4298 = vpop.f32.mrb[0].mxu0
      %v4299 = vadd.f32 %v3754, %v4298
      %v4300 = vpop.f32.mrb[0].mxu0
      %v4301 = vpop.f32.mrb[0].mxu0
      %v4302 = vadd.f32 %v3757, %v4301
      %v4303 = vpop.f32.mrb[0].mxu0
      %4304 = vmatprep.mubr.bf16.mxu0 0
      %4305 = vmatmul.mubr.bf16.gmra.mrb[0].mxu0 %v2902
      %v4306 = vpop.f32.mrb[0].mxu0
      %v4307 = vadd.f32 %v3762, %v4306
      %v4308 = vpop.f32.mrb[0].mxu0
      %v4309 = vpop.f32.mrb[0].mxu0
      %v4310 = vadd.f32 %v3765, %v4309
      %v4311 = vpop.f32.mrb[0].mxu0
      %4312 = vmatprep.mubr.bf16.mxu0 0
      %4313 = vmatmul.mubr.bf16.gmra.mrb[0].mxu0 %v2905
      %v4314 = vpop.f32.mrb[0].mxu0
      %v4315 = vadd.f32 %v3770, %v4314
      %v4316 = vpop.f32.mrb[0].mxu0
      %v4317 = vpop.f32.mrb[0].mxu0
      %v4318 = vadd.f32 %v3773, %v4317
      %v4319 = vpop.f32.mrb[0].mxu0
      %4320 = vmatprep.mubr.bf16.mxu0 0
      %4321 = vmatmul.mubr.bf16.gmra.mrb[0].mxu0 %v2908
      %v4322 = vpop.f32.mrb[0].mxu0
      %v4323 = vadd.f32 %v3778, %v4322
      %v4324 = vpop.f32.mrb[0].mxu0
      %v4325 = vpop.f32.mrb[0].mxu0
      %v4326 = vadd.f32 %v3781, %v4325
      %v4327 = vpop.f32.mrb[0].mxu0
      %4328 = vmatprep.mubr.bf16.mxu0 0
      %4329 = vmatmul.mubr.bf16.gmra.mrb[0].mxu0 %v2911
      %v4330 = vpop.f32.mrb[0].mxu0
      %v4331 = vadd.f32 %v3786, %v4330
      %v4332 = vpop.f32.mrb[0].mxu0
      %v4333 = vpop.f32.mrb[0].mxu0
      %v4334 = vadd.f32 %v3789, %v4333
      %v4335 = vpop.f32.mrb[0].mxu0
      %4336 = vmatprep.mubr.bf16.mxu0 0
      %4337 = vmatmul.mubr.bf16.gmra.mrb[0].mxu0 %v2914
      %v4338 = vpop.f32.mrb[0].mxu0
      %v4339 = vadd.f32 %v3794, %v4338
      %v4340 = vpop.f32.mrb[0].mxu0
      %v4341 = vpop.f32.mrb[0].mxu0
      %v4342 = vadd.f32 %v3797, %v4341
      %v4343 = vpop.f32.mrb[0].mxu0
      %4344 = vmatprep.mubr.bf16.mxu0 0
      %4345 = vmatmul.mubr.bf16.gmra.mrb[0].mxu0 %v2917
      %v4346 = vpop.f32.mrb[0].mxu0
      %v4347 = vadd.f32 %v3802, %v4346
      %v4348 = vpop.f32.mrb[0].mxu0
      %v4349 = vpop.f32.mrb[0].mxu0
      %v4350 = vadd.f32 %v3805, %v4349
      %v4351 = vpop.f32.mrb[0].mxu0
      %4352 = vmatprep.mubr.bf16.mxu0 0
      %4353 = vmatmul.mubr.bf16.gmra.mrb[0].mxu0 %v2920
      %v4354 = vpop.f32.mrb[0].mxu0
      %v4355 = vadd.f32 %v3810, %v4354
      %v4356 = vpop.f32.mrb[0].mxu0
      %v4357 = vpop.f32.mrb[0].mxu0
      %v4358 = vadd.f32 %v3813, %v4357
      %v4359 = vpop.f32.mrb[0].mxu0
      %4360 = vmatprep.mubr.bf16.mxu0 0
      %4361 = vmatmul.mubr.bf16.gmra.mrb[0].mxu0 %v2923
      %v4362 = vpop.f32.mrb[0].mxu0
      %v4363 = vadd.f32 %v3818, %v4362
      %v4364 = vpop.f32.mrb[0].mxu0
      %v4365 = vpop.f32.mrb[0].mxu0
      %v4366 = vadd.f32 %v3821, %v4365
      %v4367 = vpop.f32.mrb[0].mxu0
      %4368 = vmatprep.mubr.bf16.mxu0 0
      %4369 = vmatmul.mubr.bf16.gmra.mrb[0].mxu0 %v2926
      %v4370 = vpop.f32.mrb[0].mxu0
      %v4371 = vadd.f32 %v3826, %v4370
      %v4372 = vpop.f32.mrb[0].mxu0
      %v4373 = vpop.f32.mrb[0].mxu0
      %v4374 = vadd.f32 %v3829, %v4373
      %v4375 = vpop.f32.mrb[0].mxu0
      %4376 = vmatprep.mubr.bf16.mxu0 0
      %4377 = vmatmul.mubr.bf16.gmra.mrb[0].mxu0 %v2929
      %v4378 = vpop.f32.mrb[0].mxu0
      %v4379 = vadd.f32 %v3834, %v4378
      %v4380 = vpop.f32.mrb[0].mxu0
      %v4381 = vpop.f32.mrb[0].mxu0
      %v4382 = vadd.f32 %v3837, %v4381
      %v4383 = vpop.f32.mrb[0].mxu0
      %4384 = vmatprep.mubr.bf16.mxu0 0
      %4385 = vmatmul.mubr.bf16.gmra.mrb[0].mxu0 %v2932
      %v4386 = vpop.f32.mrb[0].mxu0
      %v4387 = vadd.f32 %v3842, %v4386
      %v4388 = vpop.f32.mrb[0].mxu0
      %v4389 = vpop.f32.mrb[0].mxu0
      %v4390 = vadd.f32 %v3845, %v4389
      %v4391 = vpop.f32.mrb[0].mxu0
      %4392 = vmatprep.mubr.bf16.mxu0 0
      %4393 = vmatmul.mubr.bf16.gmra.mrb[0].mxu0 %v2935
      %v4394 = vpop.f32.mrb[0].mxu0
      %v4395 = vadd.f32 %v3850, %v4394
      %v4396 = vpop.f32.mrb[0].mxu0
      %v4397 = vpop.f32.mrb[0].mxu0
      %v4398 = vadd.f32 %v3853, %v4397
      %v4399 = vpop.f32.mrb[0].mxu0
      %4400 = vmatprep.mubr.bf16.mxu0 0
      %4401 = vmatmul.mubr.bf16.gmra.mrb[0].mxu0 %v2938
      %v4402 = vpop.f32.mrb[0].mxu0
      %v4403 = vadd.f32 %v3858, %v4402
      %v4404 = vpop.f32.mrb[0].mxu0
      %v4405 = vpop.f32.mrb[0].mxu0
      %v4406 = vadd.f32 %v3861, %v4405
      %v4407 = vpop.f32.mrb[0].mxu0
      %4408 = vmatprep.mubr.bf16.mxu0 0
      %4409 = vmatmul.mubr.bf16.gmra.mrb[0].mxu0 %v2941
      %v4410 = vpop.f32.mrb[0].mxu0
      %v4411 = vadd.f32 %v3866, %v4410
      %v4412 = vpop.f32.mrb[0].mxu0
      %v4413 = vpop.f32.mrb[0].mxu0
      %v4414 = vadd.f32 %v3869, %v4413
      %v4415 = vpop.f32.mrb[0].mxu0
      %4416 = vmatprep.mubr.bf16.mxu0 0
      %4417 = vmatmul.mubr.bf16.gmra.mrb[0].mxu0 %v2944
      %v4418 = vpop.f32.mrb[0].mxu0
      %v4419 = vadd.f32 %v3874, %v4418
      %v4420 = vpop.f32.mrb[0].mxu0
      %v4421 = vpop.f32.mrb[0].mxu0
      %v4422 = vadd.f32 %v3877, %v4421
      %v4423 = vpop.f32.mrb[0].mxu0
      %4424 = vmatprep.mubr.bf16.mxu0 0
      %4425 = vmatmul.mubr.bf16.gmra.mrb[0].mxu0 %v2947
      %v4426 = vpop.f32.mrb[0].mxu0
      %v4427 = vadd.f32 %v3882, %v4426
      %v4428 = vpop.f32.mrb[0].mxu0
      %v4429 = vpop.f32.mrb[0].mxu0
      %v4430 = vadd.f32 %v3885, %v4429
      %v4431 = vpop.f32.mrb[0].mxu0
      %4432 = vmatprep.mubr.bf16.mxu0 0
      %4433 = vmatmul.mubr.bf16.gmra.mrb[0].mxu0 %v2950
      %v4434 = vpop.f32.mrb[0].mxu0
      %v4435 = vadd.f32 %v3890, %v4434
      %v4436 = vpop.f32.mrb[0].mxu0
      %v4437 = vpop.f32.mrb[0].mxu0
      %v4438 = vadd.f32 %v3893, %v4437
      %v4439 = vpop.f32.mrb[0].mxu0
      %4440 = vmatprep.mubr.bf16.mxu0 0
      %4441 = vmatmul.mubr.bf16.gmra.mrb[0].mxu0 %v2953
      %v4442 = vpop.f32.mrb[0].mxu0
      %v4443 = vadd.f32 %v3898, %v4442
      %v4444 = vpop.f32.mrb[0].mxu0
      %v4445 = vpop.f32.mrb[0].mxu0
      %v4446 = vadd.f32 %v3901, %v4445
      %v4447 = vpop.f32.mrb[0].mxu0
      %4448 = vmatprep.mubr.bf16.mxu0 0
      %4449 = vmatmul.mubr.bf16.gmra.mrb[0].mxu0 %v2956
      %v4450 = vpop.f32.mrb[0].mxu0
      %v4451 = vadd.f32 %v3906, %v4450
      %v4452 = vpop.f32.mrb[0].mxu0
      %v4453 = vpop.f32.mrb[0].mxu0
      %v4454 = vadd.f32 %v3909, %v4453
      %v4455 = vpop.f32.mrb[0].mxu0
      %4456 = vmatprep.mubr.bf16.mxu0 0
      %4457 = vmatmul.mubr.bf16.gmra.mrb[0].mxu0 %v2959
      %v4458 = vpop.f32.mrb[0].mxu0
      %v4459 = vadd.f32 %v3914, %v4458
      %v4460 = vpop.f32.mrb[0].mxu0
      %v4461 = vpop.f32.mrb[0].mxu0
      %v4462 = vadd.f32 %v3917, %v4461
      %v4463 = vpop.f32.mrb[0].mxu0
      %4464 = vmatprep.mubr.bf16.mxu0 0
      %4465 = vmatmul.mubr.bf16.gmra.mrb[0].mxu0 %v2962
      %v4466 = vpop.f32.mrb[0].mxu0
      %v4467 = vadd.f32 %v3922, %v4466
      %v4468 = vpop.f32.mrb[0].mxu0
      %v4469 = vpop.f32.mrb[0].mxu0
      %v4470 = vadd.f32 %v3925, %v4469
      %v4471 = vpop.f32.mrb[0].mxu0
      %4472 = vmatprep.mubr.bf16.mxu0 0
      %4473 = vmatmul.mubr.bf16.gmra.mrb[0].mxu0 %v2965
      %v4474 = vpop.f32.mrb[0].mxu0
      %v4475 = vadd.f32 %v3930, %v4474
      %v4476 = vpop.f32.mrb[0].mxu0
      %v4477 = vpop.f32.mrb[0].mxu0
      %v4478 = vadd.f32 %v3933, %v4477
      %v4479 = vpop.f32.mrb[0].mxu0
      %4480 = vmatprep.mubr.bf16.mxu0 0
      %4481 = vmatmul.mubr.bf16.gmra.mrb[0].mxu0 %v2968
      %v4482 = vpop.f32.mrb[0].mxu0
      %v4483 = vadd.f32 %v3938, %v4482
      %v4484 = vpop.f32.mrb[0].mxu0
      %v4485 = vpop.f32.mrb[0].mxu0
      %v4486 = vadd.f32 %v3941, %v4485
      %v4487 = vpop.f32.mrb[0].mxu0
      %4488 = vmatprep.mubr.bf16.mxu0 0
      %4489 = vmatmul.mubr.bf16.gmra.mrb[0].mxu0 %v2971
      %v4490 = vpop.f32.mrb[0].mxu0
      %v4491 = vadd.f32 %v3946, %v4490
      %v4492 = vpop.f32.mrb[0].mxu0
      %v4493 = vpop.f32.mrb[0].mxu0
      %v4494 = vadd.f32 %v3949, %v4493
      %v4495 = vpop.f32.mrb[0].mxu0
      %4496 = vmatprep.mubr.bf16.mxu0 0
      %4497 = vmatmul.mubr.bf16.gmra.mrb[0].mxu0 %v2974
      %v4498 = vpop.f32.mrb[0].mxu0
      %v4499 = vadd.f32 %v3954, %v4498
      %v4500 = vpop.f32.mrb[0].mxu0
      %v4501 = vpop.f32.mrb[0].mxu0
      %v4502 = vadd.f32 %v3957, %v4501
      %v4503 = vpop.f32.mrb[0].mxu0
      %4504 = vmatprep.mubr.bf16.mxu0 0
      %4505 = vmatmul.mubr.bf16.gmra.mrb[0].mxu0 %v2977
      %v4506 = vpop.f32.mrb[0].mxu0
      %v4507 = vadd.f32 %v3962, %v4506
      %v4508 = vpop.f32.mrb[0].mxu0
      %v4509 = vpop.f32.mrb[0].mxu0
      %v4510 = vadd.f32 %v3965, %v4509
      %v4511 = vpop.f32.mrb[0].mxu0
      %4512 = vmatprep.mubr.bf16.mxu0 0
      %4513 = vmatmul.mubr.bf16.gmra.mrb[0].mxu0 %v2980
      %v4514 = vpop.f32.mrb[0].mxu0
      %v4515 = vadd.f32 %v3970, %v4514
      %v4516 = vpop.f32.mrb[0].mxu0
      %v4517 = vpop.f32.mrb[0].mxu0
      %v4518 = vadd.f32 %v3973, %v4517
      %v4519 = vpop.f32.mrb[0].mxu0
      %4520 = vmatprep.mubr.bf16.mxu0 0
      %4521 = vmatmul.mubr.bf16.gmra.mrb[0].mxu0 %v2983
      %v4522 = vpop.f32.mrb[0].mxu0
      %v4523 = vadd.f32 %v3978, %v4522
      %v4524 = vpop.f32.mrb[0].mxu0
      %v4525 = vpop.f32.mrb[0].mxu0
      %v4526 = vadd.f32 %v3981, %v4525
      %v4527 = vpop.f32.mrb[0].mxu0
      %4528 = vmatprep.mubr.bf16.mxu0 0
      %4529 = vmatmul.mubr.bf16.gmra.mrb[0].mxu0 %v2986
      %v4530 = vpop.f32.mrb[0].mxu0
      %v4531 = vadd.f32 %v3986, %v4530
      %v4532 = vpop.f32.mrb[0].mxu0
      %v4533 = vpop.f32.mrb[0].mxu0
      %v4534 = vadd.f32 %v3989, %v4533
      %v4535 = vpop.f32.mrb[0].mxu0
      %4536 = vmatprep.mubr.bf16.mxu0 0
      %4537 = vmatmul.mubr.bf16.gmra.mrb[0].mxu0 %v2989
      %v4538 = vpop.f32.mrb[0].mxu0
      %v4539 = vadd.f32 %v3994, %v4538
      %v4540 = vpop.f32.mrb[0].mxu0
      %v4541 = vpop.f32.mrb[0].mxu0
      %v4542 = vadd.f32 %v3997, %v4541
      %v4543 = vpop.f32.mrb[0].mxu0
      %4544 = vmatprep.mubr.bf16.mxu0 0
      %4545 = vmatmul.mubr.bf16.gmra.mrb[0].mxu0 %v2992
      %v4546 = vpop.f32.mrb[0].mxu0
      %v4547 = vadd.f32 %v4002, %v4546
      %v4548 = vpop.f32.mrb[0].mxu0
      %v4549 = vpop.f32.mrb[0].mxu0
      %v4550 = vadd.f32 %v4005, %v4549
      %v4551 = vpop.f32.mrb[0].mxu0
      %4552 = vmatprep.mubr.bf16.mxu0 0
      %4553 = vmatmul.mubr.bf16.gmra.mrb[0].mxu0 %v2995
      %v4554 = vpop.f32.mrb[0].mxu0
      %v4555 = vadd.f32 %v4010, %v4554
      %v4556 = vpop.f32.mrb[0].mxu0
      %v4557 = vpop.f32.mrb[0].mxu0
      %v4558 = vadd.f32 %v4013, %v4557
      %v4559 = vpop.f32.mrb[0].mxu0
      %4560 = vmatprep.mubr.bf16.mxu0 0
      %4561 = vmatmul.mubr.bf16.gmra.mrb[0].mxu0 %v2998
      %v4562 = vpop.f32.mrb[0].mxu0
      %v4563 = vadd.f32 %v4018, %v4562
      %v4564 = vpop.f32.mrb[0].mxu0
      %v4565 = vpop.f32.mrb[0].mxu0
      %v4566 = vadd.f32 %v4021, %v4565
      %v4567 = vpop.f32.mrb[0].mxu0
      %4568 = vmatprep.mubr.bf16.mxu0 0
      %4569 = vmatmul.mubr.bf16.gmra.mrb[0].mxu0 %v3001
      %v4570 = vpop.f32.mrb[0].mxu0
      %v4571 = vadd.f32 %v4026, %v4570
      %v4572 = vpop.f32.mrb[0].mxu0
      %v4573 = vpop.f32.mrb[0].mxu0
      %v4574 = vadd.f32 %v4029, %v4573
      %v4575 = vpop.f32.mrb[0].mxu0
      %4576 = vmatprep.mubr.bf16.mxu0 0
      %4577 = vmatmul.mubr.bf16.gmra.mrb[0].mxu0 %v3004
      %v4578 = vpop.f32.mrb[0].mxu0
      %v4579 = vadd.f32 %v4034, %v4578
      %v4580 = vpop.f32.mrb[0].mxu0
      %v4581 = vpop.f32.mrb[0].mxu0
      %v4582 = vadd.f32 %v4037, %v4581
      %v4583 = vpop.f32.mrb[0].mxu0
      %4584 = vmatprep.mubr.bf16.mxu0 0
      %4585 = vmatmul.mubr.bf16.gmra.mrb[0].mxu0 %v3007
      %v4586 = vpop.f32.mrb[0].mxu0
      %v4587 = vadd.f32 %v4042, %v4586
      %v4588 = vpop.f32.mrb[0].mxu0
      %v4589 = vpop.f32.mrb[0].mxu0
      %v4590 = vadd.f32 %v4045, %v4589
      %v4591 = vpop.f32.mrb[0].mxu0
      %4592 = vmatprep.mubr.bf16.mxu0 0
      %4593 = vmatmul.mubr.bf16.gmra.mrb[0].mxu0 %v3010
      %v4594 = vpop.f32.mrb[0].mxu0
      %v4595 = vadd.f32 %v4050, %v4594
      %v4596 = vpop.f32.mrb[0].mxu0
      %v4597 = vpop.f32.mrb[0].mxu0
      %v4598 = vadd.f32 %v4053, %v4597
      %v4599 = vpop.f32.mrb[0].mxu0
      %4600 = vmatprep.mubr.bf16.mxu0 0
      %4601 = vmatmul.mubr.bf16.gmra.mrb[0].mxu0 %v3013
      %v4602 = vpop.f32.mrb[0].mxu0
      %v4603 = vadd.f32 %v4058, %v4602
      %v4604 = vpop.f32.mrb[0].mxu0
      %v4605 = vpop.f32.mrb[0].mxu0
      %v4606 = vadd.f32 %v4061, %v4605
      %v4607 = vpop.f32.mrb[0].mxu0
      %4608 = vmatprep.mubr.bf16.mxu0 0
      %4609 = vmatmul.mubr.bf16.gmra.mrb[0].mxu0 %v3016
      %v4610 = vpop.f32.mrb[0].mxu0
      %v4611 = vadd.f32 %v4066, %v4610
      %v4612 = vpop.f32.mrb[0].mxu0
      %v4613 = vpop.f32.mrb[0].mxu0
      %v4614 = vadd.f32 %v4069, %v4613
      %v4615 = vpop.f32.mrb[0].mxu0
      %4616 = vmatprep.mubr.bf16.mxu0 0
      %4617 = vmatmul.mubr.bf16.gmra.mrb[0].mxu0 %v3019
      %v4618 = vpop.f32.mrb[0].mxu0
      %v4619 = vadd.f32 %v4074, %v4618
      %v4620 = vpop.f32.mrb[0].mxu0
      %v4621 = vpop.f32.mrb[0].mxu0
      %v4622 = vadd.f32 %v4077, %v4621
      %v4623 = vpop.f32.mrb[0].mxu0
      %4624 = vmatprep.mubr.bf16.mxu0 0
      %4625 = vmatmul.mubr.bf16.gmra.mrb[0].mxu0 %v3022
      %v4626 = vpop.f32.mrb[0].mxu0
      %v4627 = vadd.f32 %v4082, %v4626
      %v4628 = vpop.f32.mrb[0].mxu0
      %v4629 = vpop.f32.mrb[0].mxu0
      %v4630 = vadd.f32 %v4085, %v4629
      %v4631 = vpop.f32.mrb[0].mxu0
      %4632 = vmatprep.mubr.bf16.mxu0 0
      %4633 = vmatmul.mubr.bf16.gmra.mrb[0].mxu0 %v3025
      %v4634 = vpop.f32.mrb[0].mxu0
      %v4635 = vadd.f32 %v4090, %v4634
      %v4636 = vpop.f32.mrb[0].mxu0
      %v4637 = vpop.f32.mrb[0].mxu0
      %v4638 = vadd.f32 %v4093, %v4637
      %v4639 = vpop.f32.mrb[0].mxu0
      %4640 = vmatprep.mubr.bf16.mxu0 0
      %4641 = vmatmul.mubr.bf16.gmra.mrb[0].mxu0 %v3028
      %v4642 = vpop.f32.mrb[0].mxu0
      %v4643 = vadd.f32 %v4098, %v4642
      %v4644 = vpop.f32.mrb[0].mxu0
      %v4645 = vpop.f32.mrb[0].mxu0
      %v4646 = vadd.f32 %v4101, %v4645
      %v4647 = vpop.f32.mrb[0].mxu0
      %4648 = vmatprep.mubr.bf16.mxu0 0
      %4649 = vmatmul.mubr.bf16.gmra.mrb[0].mxu0 %v3031
      %v4650 = vpop.f32.mrb[0].mxu0
      %v4651 = vadd.f32 %v4106, %v4650
      %v4652 = vpop.f32.mrb[0].mxu0
      %v4653 = vpop.f32.mrb[0].mxu0
      %v4654 = vadd.f32 %v4109, %v4653
      %v4655 = vpop.f32.mrb[0].mxu0
      %4656 = vmatprep.mubr.bf16.mxu0 0
      %4657 = vmatmul.mubr.bf16.gmra.mrb[0].mxu0 %v3034
      %v4658 = vpop.f32.mrb[0].mxu0
      %v4659 = vadd.f32 %v4114, %v4658
      %v4660 = vpop.f32.mrb[0].mxu0
      %v4661 = vpop.f32.mrb[0].mxu0
      %v4662 = vadd.f32 %v4117, %v4661
      %v4663 = vpop.f32.mrb[0].mxu0
      %4664 = vmatprep.mubr.bf16.mxu0 0
      %4665 = vmatmul.mubr.bf16.gmra.mrb[0].mxu0 %v3037
      %v4666 = vpop.f32.mrb[0].mxu0
      %v4667 = vadd.f32 %v4122, %v4666
      %v4668 = vpop.f32.mrb[0].mxu0
      %v4669 = vpop.f32.mrb[0].mxu0
      %v4670 = vadd.f32 %v4125, %v4669
      %v4671 = vpop.f32.mrb[0].mxu0
      %4672 = vmatprep.mubr.bf16.mxu0 0
      %4673 = vmatmul.mubr.bf16.gmra.mrb[0].mxu0 %v3040
      %v4674 = vpop.f32.mrb[0].mxu0
      %v4675 = vadd.f32 %v4130, %v4674
      %v4676 = vpop.f32.mrb[0].mxu0
      %v4677 = vpop.f32.mrb[0].mxu0
      %v4678 = vadd.f32 %v4133, %v4677
      %v4679 = vpop.f32.mrb[0].mxu0
      %4680 = vdwg.mxu0
      %v4681 = vadd.f32 %v442, %v4171
      %v4682 = vadd.f32 %v443, %v4174
      %v4683 = vadd.f32 %v444, %v4179
      %v4684 = vadd.f32 %v445, %v4182
      %v4685 = vadd.f32 %v446, %v4187
      %v4686 = vadd.f32 %v447, %v4190
      %v4687 = vadd.f32 %v448, %v4195
      %v4688 = vadd.f32 %v449, %v4198
      %v4689 = vadd.f32 %v450, %v4203
      %v4690 = vadd.f32 %v451, %v4206
      %v4691 = vadd.f32 %v452, %v4211
      %v4692 = vadd.f32 %v453, %v4214
      %v4693 = vadd.f32 %v454, %v4219
      %v4694 = vadd.f32 %v455, %v4222
      %v4695 = vadd.f32 %v456, %v4227
      %v4696 = vadd.f32 %v457, %v4230
      %v4697 = vadd.f32 %v458, %v4235
      %v4698 = vadd.f32 %v459, %v4238
      %v4699 = vadd.f32 %v460, %v4243
      %v4700 = vadd.f32 %v461, %v4246
      %v4701 = vadd.f32 %v462, %v4251
      %v4702 = vadd.f32 %v463, %v4254
      %v4703 = vadd.f32 %v464, %v4259
      %v4704 = vadd.f32 %v465, %v4262
      %v4705 = vadd.f32 %v466, %v4267
      %v4706 = vadd.f32 %v467, %v4270
      %v4707 = vadd.f32 %v468, %v4275
      %v4708 = vadd.f32 %v469, %v4278
      %v4709 = vadd.f32 %v470, %v4283
      %v4710 = vadd.f32 %v471, %v4286
      %v4711 = vadd.f32 %v472, %v4291
      %v4712 = vadd.f32 %v473, %v4294
      %v4713 = vadd.f32 %v474, %v4299
      %v4714 = vadd.f32 %v475, %v4302
      %v4715 = vadd.f32 %v476, %v4307
      %v4716 = vadd.f32 %v477, %v4310
      %v4717 = vadd.f32 %v478, %v4315
      %v4718 = vadd.f32 %v479, %v4318
      %v4719 = vadd.f32 %v480, %v4323
      %v4720 = vadd.f32 %v481, %v4326
      %v4721 = vadd.f32 %v482, %v4331
      %v4722 = vadd.f32 %v483, %v4334
      %v4723 = vadd.f32 %v484, %v4339
      %v4724 = vadd.f32 %v485, %v4342
      %v4725 = vadd.f32 %v486, %v4347
      %v4726 = vadd.f32 %v487, %v4350
      %v4727 = vadd.f32 %v488, %v4355
      %v4728 = vadd.f32 %v489, %v4358
      %v4729 = vadd.f32 %v490, %v4363
      %v4730 = vadd.f32 %v491, %v4366
      %v4731 = vadd.f32 %v492, %v4371
      %v4732 = vadd.f32 %v493, %v4374
      %v4733 = vadd.f32 %v494, %v4379
      %v4734 = vadd.f32 %v495, %v4382
      %v4735 = vadd.f32 %v496, %v4387
      %v4736 = vadd.f32 %v497, %v4390
      %v4737 = vadd.f32 %v498, %v4395
      %v4738 = vadd.f32 %v499, %v4398
      %v4739 = vadd.f32 %v500, %v4403
      %v4740 = vadd.f32 %v501, %v4406
      %v4741 = vadd.f32 %v502, %v4411
      %v4742 = vadd.f32 %v503, %v4414
      %v4743 = vadd.f32 %v504, %v4419
      %v4744 = vadd.f32 %v505, %v4422
      %v4745 = vadd.f32 %v506, %v4427
      %v4746 = vadd.f32 %v507, %v4430
      %v4747 = vadd.f32 %v508, %v4435
      %v4748 = vadd.f32 %v509, %v4438
      %v4749 = vadd.f32 %v510, %v4443
      %v4750 = vadd.f32 %v511, %v4446
      %v4751 = vadd.f32 %v512, %v4451
      %v4752 = vadd.f32 %v513, %v4454
      %v4753 = vadd.f32 %v514, %v4459
      %v4754 = vadd.f32 %v515, %v4462
      %v4755 = vadd.f32 %v516, %v4467
      %v4756 = vadd.f32 %v517, %v4470
      %v4757 = vadd.f32 %v518, %v4475
      %v4758 = vadd.f32 %v519, %v4478
      %v4759 = vadd.f32 %v520, %v4483
      %v4760 = vadd.f32 %v521, %v4486
      %v4761 = vadd.f32 %v522, %v4491
      %v4762 = vadd.f32 %v523, %v4494
      %v4763 = vadd.f32 %v524, %v4499
      %v4764 = vadd.f32 %v525, %v4502
      %v4765 = vadd.f32 %v526, %v4507
      %v4766 = vadd.f32 %v527, %v4510
      %v4767 = vadd.f32 %v528, %v4515
      %v4768 = vadd.f32 %v529, %v4518
      %v4769 = vadd.f32 %v530, %v4523
      %v4770 = vadd.f32 %v531, %v4526
      %v4771 = vadd.f32 %v532, %v4531
      %v4772 = vadd.f32 %v533, %v4534
      %v4773 = vadd.f32 %v534, %v4539
      %v4774 = vadd.f32 %v535, %v4542
      %v4775 = vadd.f32 %v536, %v4547
      %v4776 = vadd.f32 %v537, %v4550
      %v4777 = vadd.f32 %v538, %v4555
      %v4778 = vadd.f32 %v539, %v4558
      %v4779 = vadd.f32 %v540, %v4563
      %v4780 = vadd.f32 %v541, %v4566
      %v4781 = vadd.f32 %v542, %v4571
      %v4782 = vadd.f32 %v543, %v4574
      %v4783 = vadd.f32 %v544, %v4579
      %v4784 = vadd.f32 %v545, %v4582
      %v4785 = vadd.f32 %v546, %v4587
      %v4786 = vadd.f32 %v547, %v4590
      %v4787 = vadd.f32 %v548, %v4595
      %v4788 = vadd.f32 %v549, %v4598
      %v4789 = vadd.f32 %v550, %v4603
      %v4790 = vadd.f32 %v551, %v4606
      %v4791 = vadd.f32 %v552, %v4611
      %v4792 = vadd.f32 %v553, %v4614
      %v4793 = vadd.f32 %v554, %v4619
      %v4794 = vadd.f32 %v555, %v4622
      %v4795 = vadd.f32 %v556, %v4627
      %v4796 = vadd.f32 %v557, %v4630
      %v4797 = vadd.f32 %v558, %v4635
      %v4798 = vadd.f32 %v559, %v4638
      %v4799 = vadd.f32 %v560, %v4643
      %v4800 = vadd.f32 %v561, %v4646
      %v4801 = vadd.f32 %v562, %v4651
      %v4802 = vadd.f32 %v563, %v4654
      %v4803 = vadd.f32 %v564, %v4659
      %v4804 = vadd.f32 %v565, %v4662
      %v4805 = vadd.f32 %v566, %v4667
      %v4806 = vadd.f32 %v567, %v4670
      %v4807 = vadd.f32 %v568, %v4675
      %v4808 = vadd.f32 %v569, %v4678
      %vm4809 = vcmask 523264
      %4810 = vst.msk [vmem:[#allocation2] sm:$0xff] %vm4809, %v4681
      %4811 = vst.msk [vmem:[#allocation2 + $0x8] sm:$0xff] %vm4809, %v4682
      %4812 = vst.msk [vmem:[#allocation2 + $0x10] sm:$0xff] %vm4809, %v4683
      %4813 = vst.msk [vmem:[#allocation2 + $0x18] sm:$0xff] %vm4809, %v4684
      %4814 = vst.msk [vmem:[#allocation2 + $0x20] sm:$0xff] %vm4809, %v4685
      %4815 = vst.msk [vmem:[#allocation2 + $0x28] sm:$0xff] %vm4809, %v4686
      %4816 = vst.msk [vmem:[#allocation2 + $0x30] sm:$0xff] %vm4809, %v4687
      %4817 = vst.msk [vmem:[#allocation2 + $0x38] sm:$0xff] %vm4809, %v4688
      %4818 = vst.msk [vmem:[#allocation2 + $0x40] sm:$0xff] %vm4809, %v4689
      %4819 = vst.msk [vmem:[#allocation2 + $0x48] sm:$0xff] %vm4809, %v4690
      %4820 = vst.msk [vmem:[#allocation2 + $0x50] sm:$0xff] %vm4809, %v4691
      %4821 = vst.msk [vmem:[#allocation2 + $0x58] sm:$0xff] %vm4809, %v4692
      %4822 = vst.msk [vmem:[#allocation2 + $0x60] sm:$0xff] %vm4809, %v4693
      %4823 = vst.msk [vmem:[#allocation2 + $0x68] sm:$0xff] %vm4809, %v4694
      %4824 = vst.msk [vmem:[#allocation2 + $0x70] sm:$0xff] %vm4809, %v4695
      %4825 = vst.msk [vmem:[#allocation2 + $0x78] sm:$0xff] %vm4809, %v4696
      %4826 = vst.msk [vmem:[#allocation2 + $0x80] sm:$0xff] %vm4809, %v4697
      %4827 = vst.msk [vmem:[#allocation2 + $0x88] sm:$0xff] %vm4809, %v4698
      %4828 = vst.msk [vmem:[#allocation2 + $0x90] sm:$0xff] %vm4809, %v4699
      %4829 = vst.msk [vmem:[#allocation2 + $0x98] sm:$0xff] %vm4809, %v4700
      %4830 = vst.msk [vmem:[#allocation2 + $0xa0] sm:$0xff] %vm4809, %v4701
      %4831 = vst.msk [vmem:[#allocation2 + $0xa8] sm:$0xff] %vm4809, %v4702
      %4832 = vst.msk [vmem:[#allocation2 + $0xb0] sm:$0xff] %vm4809, %v4703
      %4833 = vst.msk [vmem:[#allocation2 + $0xb8] sm:$0xff] %vm4809, %v4704
      %4834 = vst.msk [vmem:[#allocation2 + $0xc0] sm:$0xff] %vm4809, %v4705
      %4835 = vst.msk [vmem:[#allocation2 + $0xc8] sm:$0xff] %vm4809, %v4706
      %4836 = vst.msk [vmem:[#allocation2 + $0xd0] sm:$0xff] %vm4809, %v4707
      %4837 = vst.msk [vmem:[#allocation2 + $0xd8] sm:$0xff] %vm4809, %v4708
      %4838 = vst.msk [vmem:[#allocation2 + $0xe0] sm:$0xff] %vm4809, %v4709
      %4839 = vst.msk [vmem:[#allocation2 + $0xe8] sm:$0xff] %vm4809, %v4710
      %4840 = vst.msk [vmem:[#allocation2 + $0xf0] sm:$0xff] %vm4809, %v4711
      %4841 = vst.msk [vmem:[#allocation2 + $0xf8] sm:$0xff] %vm4809, %v4712
      %4842 = vst.msk [vmem:[#allocation2 + $0x100] sm:$0xff] %vm4809, %v4713
      %4843 = vst.msk [vmem:[#allocation2 + $0x108] sm:$0xff] %vm4809, %v4714
      %4844 = vst.msk [vmem:[#allocation2 + $0x110] sm:$0xff] %vm4809, %v4715
      %4845 = vst.msk [vmem:[#allocation2 + $0x118] sm:$0xff] %vm4809, %v4716
      %4846 = vst.msk [vmem:[#allocation2 + $0x120] sm:$0xff] %vm4809, %v4717
      %4847 = vst.msk [vmem:[#allocation2 + $0x128] sm:$0xff] %vm4809, %v4718
      %4848 = vst.msk [vmem:[#allocation2 + $0x130] sm:$0xff] %vm4809, %v4719
      %4849 = vst.msk [vmem:[#allocation2 + $0x138] sm:$0xff] %vm4809, %v4720
      %4850 = vst.msk [vmem:[#allocation2 + $0x140] sm:$0xff] %vm4809, %v4721
      %4851 = vst.msk [vmem:[#allocation2 + $0x148] sm:$0xff] %vm4809, %v4722
      %4852 = vst.msk [vmem:[#allocation2 + $0x150] sm:$0xff] %vm4809, %v4723
      %4853 = vst.msk [vmem:[#allocation2 + $0x158] sm:$0xff] %vm4809, %v4724
      %4854 = vst.msk [vmem:[#allocation2 + $0x160] sm:$0xff] %vm4809, %v4725
      %4855 = vst.msk [vmem:[#allocation2 + $0x168] sm:$0xff] %vm4809, %v4726
      %4856 = vst.msk [vmem:[#allocation2 + $0x170] sm:$0xff] %vm4809, %v4727
      %4857 = vst.msk [vmem:[#allocation2 + $0x178] sm:$0xff] %vm4809, %v4728
      %4858 = vst.msk [vmem:[#allocation2 + $0x180] sm:$0xff] %vm4809, %v4729
      %4859 = vst.msk [vmem:[#allocation2 + $0x188] sm:$0xff] %vm4809, %v4730
      %4860 = vst.msk [vmem:[#allocation2 + $0x190] sm:$0xff] %vm4809, %v4731
      %4861 = vst.msk [vmem:[#allocation2 + $0x198] sm:$0xff] %vm4809, %v4732
      %4862 = vst.msk [vmem:[#allocation2 + $0x1a0] sm:$0xff] %vm4809, %v4733
      %4863 = vst.msk [vmem:[#allocation2 + $0x1a8] sm:$0xff] %vm4809, %v4734
      %4864 = vst.msk [vmem:[#allocation2 + $0x1b0] sm:$0xff] %vm4809, %v4735
      %4865 = vst.msk [vmem:[#allocation2 + $0x1b8] sm:$0xff] %vm4809, %v4736
      %4866 = vst.msk [vmem:[#allocation2 + $0x1c0] sm:$0xff] %vm4809, %v4737
      %4867 = vst.msk [vmem:[#allocation2 + $0x1c8] sm:$0xff] %vm4809, %v4738
      %4868 = vst.msk [vmem:[#allocation2 + $0x1d0] sm:$0xff] %vm4809, %v4739
      %4869 = vst.msk [vmem:[#allocation2 + $0x1d8] sm:$0xff] %vm4809, %v4740
      %4870 = vst.msk [vmem:[#allocation2 + $0x1e0] sm:$0xff] %vm4809, %v4741
      %4871 = vst.msk [vmem:[#allocation2 + $0x1e8] sm:$0xff] %vm4809, %v4742
      %4872 = vst.msk [vmem:[#allocation2 + $0x1f0] sm:$0xff] %vm4809, %v4743
      %4873 = vst.msk [vmem:[#allocation2 + $0x1f8] sm:$0xff] %vm4809, %v4744
      %4874 = vst.msk [vmem:[#allocation2 + $0x200] sm:$0xff] %vm4809, %v4745
      %4875 = vst.msk [vmem:[#allocation2 + $0x208] sm:$0xff] %vm4809, %v4746
      %4876 = vst.msk [vmem:[#allocation2 + $0x210] sm:$0xff] %vm4809, %v4747
      %4877 = vst.msk [vmem:[#allocation2 + $0x218] sm:$0xff] %vm4809, %v4748
      %4878 = vst.msk [vmem:[#allocation2 + $0x220] sm:$0xff] %vm4809, %v4749
      %4879 = vst.msk [vmem:[#allocation2 + $0x228] sm:$0xff] %vm4809, %v4750
      %4880 = vst.msk [vmem:[#allocation2 + $0x230] sm:$0xff] %vm4809, %v4751
      %4881 = vst.msk [vmem:[#allocation2 + $0x238] sm:$0xff] %vm4809, %v4752
      %4882 = vst.msk [vmem:[#allocation2 + $0x240] sm:$0xff] %vm4809, %v4753
      %4883 = vst.msk [vmem:[#allocation2 + $0x248] sm:$0xff] %vm4809, %v4754
      %4884 = vst.msk [vmem:[#allocation2 + $0x250] sm:$0xff] %vm4809, %v4755
      %4885 = vst.msk [vmem:[#allocation2 + $0x258] sm:$0xff] %vm4809, %v4756
      %4886 = vst.msk [vmem:[#allocation2 + $0x260] sm:$0xff] %vm4809, %v4757
      %4887 = vst.msk [vmem:[#allocation2 + $0x268] sm:$0xff] %vm4809, %v4758
      %4888 = vst.msk [vmem:[#allocation2 + $0x270] sm:$0xff] %vm4809, %v4759
      %4889 = vst.msk [vmem:[#allocation2 + $0x278] sm:$0xff] %vm4809, %v4760
      %4890 = vst.msk [vmem:[#allocation2 + $0x280] sm:$0xff] %vm4809, %v4761
      %4891 = vst.msk [vmem:[#allocation2 + $0x288] sm:$0xff] %vm4809, %v4762
      %4892 = vst.msk [vmem:[#allocation2 + $0x290] sm:$0xff] %vm4809, %v4763
      %4893 = vst.msk [vmem:[#allocation2 + $0x298] sm:$0xff] %vm4809, %v4764
      %4894 = vst.msk [vmem:[#allocation2 + $0x2a0] sm:$0xff] %vm4809, %v4765
      %4895 = vst.msk [vmem:[#allocation2 + $0x2a8] sm:$0xff] %vm4809, %v4766
      %4896 = vst.msk [vmem:[#allocation2 + $0x2b0] sm:$0xff] %vm4809, %v4767
      %4897 = vst.msk [vmem:[#allocation2 + $0x2b8] sm:$0xff] %vm4809, %v4768
      %4898 = vst.msk [vmem:[#allocation2 + $0x2c0] sm:$0xff] %vm4809, %v4769
      %4899 = vst.msk [vmem:[#allocation2 + $0x2c8] sm:$0xff] %vm4809, %v4770
      %4900 = vst.msk [vmem:[#allocation2 + $0x2d0] sm:$0xff] %vm4809, %v4771
      %4901 = vst.msk [vmem:[#allocation2 + $0x2d8] sm:$0xff] %vm4809, %v4772
      %4902 = vst.msk [vmem:[#allocation2 + $0x2e0] sm:$0xff] %vm4809, %v4773
      %4903 = vst.msk [vmem:[#allocation2 + $0x2e8] sm:$0xff] %vm4809, %v4774
      %4904 = vst.msk [vmem:[#allocation2 + $0x2f0] sm:$0xff] %vm4809, %v4775
      %4905 = vst.msk [vmem:[#allocation2 + $0x2f8] sm:$0xff] %vm4809, %v4776
      %4906 = vst.msk [vmem:[#allocation2 + $0x300] sm:$0xff] %vm4809, %v4777
      %4907 = vst.msk [vmem:[#allocation2 + $0x308] sm:$0xff] %vm4809, %v4778
      %4908 = vst.msk [vmem:[#allocation2 + $0x310] sm:$0xff] %vm4809, %v4779
      %4909 = vst.msk [vmem:[#allocation2 + $0x318] sm:$0xff] %vm4809, %v4780
      %4910 = vst.msk [vmem:[#allocation2 + $0x320] sm:$0xff] %vm4809, %v4781
      %4911 = vst.msk [vmem:[#allocation2 + $0x328] sm:$0xff] %vm4809, %v4782
      %4912 = vst.msk [vmem:[#allocation2 + $0x330] sm:$0xff] %vm4809, %v4783
      %4913 = vst.msk [vmem:[#allocation2 + $0x338] sm:$0xff] %vm4809, %v4784
      %4914 = vst.msk [vmem:[#allocation2 + $0x340] sm:$0xff] %vm4809, %v4785
      %4915 = vst.msk [vmem:[#allocation2 + $0x348] sm:$0xff] %vm4809, %v4786
      %4916 = vst.msk [vmem:[#allocation2 + $0x350] sm:$0xff] %vm4809, %v4787
      %4917 = vst.msk [vmem:[#allocation2 + $0x358] sm:$0xff] %vm4809, %v4788
      %4918 = vst.msk [vmem:[#allocation2 + $0x360] sm:$0xff] %vm4809, %v4789
      %4919 = vst.msk [vmem:[#allocation2 + $0x368] sm:$0xff] %vm4809, %v4790
      %4920 = vst.msk [vmem:[#allocation2 + $0x370] sm:$0xff] %vm4809, %v4791
      %4921 = vst.msk [vmem:[#allocation2 + $0x378] sm:$0xff] %vm4809, %v4792
      %4922 = vst.msk [vmem:[#allocation2 + $0x380] sm:$0xff] %vm4809, %v4793
      %4923 = vst.msk [vmem:[#allocation2 + $0x388] sm:$0xff] %vm4809, %v4794
      %4924 = vst.msk [vmem:[#allocation2 + $0x390] sm:$0xff] %vm4809, %v4795
      %4925 = vst.msk [vmem:[#allocation2 + $0x398] sm:$0xff] %vm4809, %v4796
      %4926 = vst.msk [vmem:[#allocation2 + $0x3a0] sm:$0xff] %vm4809, %v4797
      %4927 = vst.msk [vmem:[#allocation2 + $0x3a8] sm:$0xff] %vm4809, %v4798
      %4928 = vst.msk [vmem:[#allocation2 + $0x3b0] sm:$0xff] %vm4809, %v4799
      %4929 = vst.msk [vmem:[#allocation2 + $0x3b8] sm:$0xff] %vm4809, %v4800
      %4930 = vst.msk [vmem:[#allocation2 + $0x3c0] sm:$0xff] %vm4809, %v4801
      %4931 = vst.msk [vmem:[#allocation2 + $0x3c8] sm:$0xff] %vm4809, %v4802
      %4932 = vst.msk [vmem:[#allocation2 + $0x3d0] sm:$0xff] %vm4809, %v4803
      %4933 = vst.msk [vmem:[#allocation2 + $0x3d8] sm:$0xff] %vm4809, %v4804
      %4934 = vst.msk [vmem:[#allocation2 + $0x3e0] sm:$0xff] %vm4809, %v4805
      %4935 = vst.msk [vmem:[#allocation2 + $0x3e8] sm:$0xff] %vm4809, %v4806
      %4936 = vst.msk [vmem:[#allocation2 + $0x3f0] sm:$0xff] %vm4809, %v4807
      %4937 = vst.msk [vmem:[#allocation2 + $0x3f8] sm:$0xff] %vm4809, %v4808
      // Predicated region
      $region41: #{tpu_custom_call.1} parent=35 // pred_check
        %p4938 = pneg %p309
      $region42: #{tpu_custom_call.1} parent=35 // pred_check_branch
        %4940 = sbr.rel (%p4938) target = $region44
      $region43: #{tpu_custom_call.1} parent=35 // pred_region
        %v4941 = vld [vmem:[#allocation2] sm:$0xff]
        %v4942 = vld [vmem:[#allocation2 + $0x8] sm:$0xff]
        %v4943 = vld [vmem:[#allocation2 + $0x10] sm:$0xff]
        %v4944 = vld [vmem:[#allocation2 + $0x18] sm:$0xff]
        %v4945 = vld [vmem:[#allocation2 + $0x20] sm:$0xff]
        %v4946 = vld [vmem:[#allocation2 + $0x28] sm:$0xff]
        %v4947 = vld [vmem:[#allocation2 + $0x30] sm:$0xff]
        %v4948 = vld [vmem:[#allocation2 + $0x38] sm:$0xff]
        %v4949 = vld [vmem:[#allocation2 + $0x40] sm:$0xff]
        %v4950 = vld [vmem:[#allocation2 + $0x48] sm:$0xff]
        %v4951 = vld [vmem:[#allocation2 + $0x50] sm:$0xff]
        %v4952 = vld [vmem:[#allocation2 + $0x58] sm:$0xff]
        %v4953 = vld [vmem:[#allocation2 + $0x60] sm:$0xff]
        %v4954 = vld [vmem:[#allocation2 + $0x68] sm:$0xff]
        %v4955 = vld [vmem:[#allocation2 + $0x70] sm:$0xff]
        %v4956 = vld [vmem:[#allocation2 + $0x78] sm:$0xff]
        %v4957 = vld [vmem:[#allocation2 + $0x80] sm:$0xff]
        %v4958 = vld [vmem:[#allocation2 + $0x88] sm:$0xff]
        %v4959 = vld [vmem:[#allocation2 + $0x90] sm:$0xff]
        %v4960 = vld [vmem:[#allocation2 + $0x98] sm:$0xff]
        %v4961 = vld [vmem:[#allocation2 + $0xa0] sm:$0xff]
        %v4962 = vld [vmem:[#allocation2 + $0xa8] sm:$0xff]
        %v4963 = vld [vmem:[#allocation2 + $0xb0] sm:$0xff]
        %v4964 = vld [vmem:[#allocation2 + $0xb8] sm:$0xff]
        %v4965 = vld [vmem:[#allocation2 + $0xc0] sm:$0xff]
        %v4966 = vld [vmem:[#allocation2 + $0xc8] sm:$0xff]
        %v4967 = vld [vmem:[#allocation2 + $0xd0] sm:$0xff]
        %v4968 = vld [vmem:[#allocation2 + $0xd8] sm:$0xff]
        %v4969 = vld [vmem:[#allocation2 + $0xe0] sm:$0xff]
        %v4970 = vld [vmem:[#allocation2 + $0xe8] sm:$0xff]
        %v4971 = vld [vmem:[#allocation2 + $0xf0] sm:$0xff]
        %v4972 = vld [vmem:[#allocation2 + $0xf8] sm:$0xff]
        %v4973 = vld [vmem:[#allocation2 + $0x100] sm:$0xff]
        %v4974 = vld [vmem:[#allocation2 + $0x108] sm:$0xff]
        %v4975 = vld [vmem:[#allocation2 + $0x110] sm:$0xff]
        %v4976 = vld [vmem:[#allocation2 + $0x118] sm:$0xff]
        %v4977 = vld [vmem:[#allocation2 + $0x120] sm:$0xff]
        %v4978 = vld [vmem:[#allocation2 + $0x128] sm:$0xff]
        %v4979 = vld [vmem:[#allocation2 + $0x130] sm:$0xff]
        %v4980 = vld [vmem:[#allocation2 + $0x138] sm:$0xff]
        %v4981 = vld [vmem:[#allocation2 + $0x140] sm:$0xff]
        %v4982 = vld [vmem:[#allocation2 + $0x148] sm:$0xff]
        %v4983 = vld [vmem:[#allocation2 + $0x150] sm:$0xff]
        %v4984 = vld [vmem:[#allocation2 + $0x158] sm:$0xff]
        %v4985 = vld [vmem:[#allocation2 + $0x160] sm:$0xff]
        %v4986 = vld [vmem:[#allocation2 + $0x168] sm:$0xff]
        %v4987 = vld [vmem:[#allocation2 + $0x170] sm:$0xff]
        %v4988 = vld [vmem:[#allocation2 + $0x178] sm:$0xff]
        %v4989 = vld [vmem:[#allocation2 + $0x180] sm:$0xff]
        %v4990 = vld [vmem:[#allocation2 + $0x188] sm:$0xff]
        %v4991 = vld [vmem:[#allocation2 + $0x190] sm:$0xff]
        %v4992 = vld [vmem:[#allocation2 + $0x198] sm:$0xff]
        %v4993 = vld [vmem:[#allocation2 + $0x1a0] sm:$0xff]
        %v4994 = vld [vmem:[#allocation2 + $0x1a8] sm:$0xff]
        %v4995 = vld [vmem:[#allocation2 + $0x1b0] sm:$0xff]
        %v4996 = vld [vmem:[#allocation2 + $0x1b8] sm:$0xff]
        %v4997 = vld [vmem:[#allocation2 + $0x1c0] sm:$0xff]
        %v4998 = vld [vmem:[#allocation2 + $0x1c8] sm:$0xff]
        %v4999 = vld [vmem:[#allocation2 + $0x1d0] sm:$0xff]
        %v5000 = vld [vmem:[#allocation2 + $0x1d8] sm:$0xff]
        %v5001 = vld [vmem:[#allocation2 + $0x1e0] sm:$0xff]
        %v5002 = vld [vmem:[#allocation2 + $0x1e8] sm:$0xff]
        %v5003 = vld [vmem:[#allocation2 + $0x1f0] sm:$0xff]
        %v5004 = vld [vmem:[#allocation2 + $0x1f8] sm:$0xff]
        %v5005 = vld [vmem:[#allocation2 + $0x200] sm:$0xff]
        %v5006 = vld [vmem:[#allocation2 + $0x208] sm:$0xff]
        %v5007 = vld [vmem:[#allocation2 + $0x210] sm:$0xff]
        %v5008 = vld [vmem:[#allocation2 + $0x218] sm:$0xff]
        %v5009 = vld [vmem:[#allocation2 + $0x220] sm:$0xff]
        %v5010 = vld [vmem:[#allocation2 + $0x228] sm:$0xff]
        %v5011 = vld [vmem:[#allocation2 + $0x230] sm:$0xff]
        %v5012 = vld [vmem:[#allocation2 + $0x238] sm:$0xff]
        %v5013 = vld [vmem:[#allocation2 + $0x240] sm:$0xff]
        %v5014 = vld [vmem:[#allocation2 + $0x248] sm:$0xff]
        %v5015 = vld [vmem:[#allocation2 + $0x250] sm:$0xff]
        %v5016 = vld [vmem:[#allocation2 + $0x258] sm:$0xff]
        %v5017 = vld [vmem:[#allocation2 + $0x260] sm:$0xff]
        %v5018 = vld [vmem:[#allocation2 + $0x268] sm:$0xff]
        %v5019 = vld [vmem:[#allocation2 + $0x270] sm:$0xff]
        %v5020 = vld [vmem:[#allocation2 + $0x278] sm:$0xff]
        %v5021 = vld [vmem:[#allocation2 + $0x280] sm:$0xff]
        %v5022 = vld [vmem:[#allocation2 + $0x288] sm:$0xff]
        %v5023 = vld [vmem:[#allocation2 + $0x290] sm:$0xff]
        %v5024 = vld [vmem:[#allocation2 + $0x298] sm:$0xff]
        %v5025 = vld [vmem:[#allocation2 + $0x2a0] sm:$0xff]
        %v5026 = vld [vmem:[#allocation2 + $0x2a8] sm:$0xff]
        %v5027 = vld [vmem:[#allocation2 + $0x2b0] sm:$0xff]
        %v5028 = vld [vmem:[#allocation2 + $0x2b8] sm:$0xff]
        %v5029 = vld [vmem:[#allocation2 + $0x2c0] sm:$0xff]
        %v5030 = vld [vmem:[#allocation2 + $0x2c8] sm:$0xff]
        %v5031 = vld [vmem:[#allocation2 + $0x2d0] sm:$0xff]
        %v5032 = vld [vmem:[#allocation2 + $0x2d8] sm:$0xff]
        %v5033 = vld [vmem:[#allocation2 + $0x2e0] sm:$0xff]
        %v5034 = vld [vmem:[#allocation2 + $0x2e8] sm:$0xff]
        %v5035 = vld [vmem:[#allocation2 + $0x2f0] sm:$0xff]
        %v5036 = vld [vmem:[#allocation2 + $0x2f8] sm:$0xff]
        %v5037 = vld [vmem:[#allocation2 + $0x300] sm:$0xff]
        %v5038 = vld [vmem:[#allocation2 + $0x308] sm:$0xff]
        %v5039 = vld [vmem:[#allocation2 + $0x310] sm:$0xff]
        %v5040 = vld [vmem:[#allocation2 + $0x318] sm:$0xff]
        %v5041 = vld [vmem:[#allocation2 + $0x320] sm:$0xff]
        %v5042 = vld [vmem:[#allocation2 + $0x328] sm:$0xff]
        %v5043 = vld [vmem:[#allocation2 + $0x330] sm:$0xff]
        %v5044 = vld [vmem:[#allocation2 + $0x338] sm:$0xff]
        %v5045 = vld [vmem:[#allocation2 + $0x340] sm:$0xff]
        %v5046 = vld [vmem:[#allocation2 + $0x348] sm:$0xff]
        %v5047 = vld [vmem:[#allocation2 + $0x350] sm:$0xff]
        %v5048 = vld [vmem:[#allocation2 + $0x358] sm:$0xff]
        %v5049 = vld [vmem:[#allocation2 + $0x360] sm:$0xff]
        %v5050 = vld [vmem:[#allocation2 + $0x368] sm:$0xff]
        %v5051 = vld [vmem:[#allocation2 + $0x370] sm:$0xff]
        %v5052 = vld [vmem:[#allocation2 + $0x378] sm:$0xff]
        %v5053 = vld [vmem:[#allocation2 + $0x380] sm:$0xff]
        %v5054 = vld [vmem:[#allocation2 + $0x388] sm:$0xff]
        %v5055 = vld [vmem:[#allocation2 + $0x390] sm:$0xff]
        %v5056 = vld [vmem:[#allocation2 + $0x398] sm:$0xff]
        %v5057 = vld [vmem:[#allocation2 + $0x3a0] sm:$0xff]
        %v5058 = vld [vmem:[#allocation2 + $0x3a8] sm:$0xff]
        %v5059 = vld [vmem:[#allocation2 + $0x3b0] sm:$0xff]
        %v5060 = vld [vmem:[#allocation2 + $0x3b8] sm:$0xff]
        %v5061 = vld [vmem:[#allocation2 + $0x3c0] sm:$0xff]
        %v5062 = vld [vmem:[#allocation2 + $0x3c8] sm:$0xff]
        %v5063 = vld [vmem:[#allocation2 + $0x3d0] sm:$0xff]
        %v5064 = vld [vmem:[#allocation2 + $0x3d8] sm:$0xff]
        %v5065 = vld [vmem:[#allocation2 + $0x3e0] sm:$0xff]
        %v5066 = vld [vmem:[#allocation2 + $0x3e8] sm:$0xff]
        %v5067 = vld [vmem:[#allocation2 + $0x3f0] sm:$0xff]
        %v5068 = vld [vmem:[#allocation2 + $0x3f8] sm:$0xff]
        %v5069 = vld [vmem:[%s295] sm:$0x1]
        %v5071 = vlaneseq
        %v5072 = vshrl.u32 %v5071, 7
        %v5073 = vsub.s32 0, %v5072
        %v5074 = vrot.slane %v5069, %v5073
        %v5076 = vmul.f32 %v4941, %v5074
        %v5077 = vmul.f32 %v4942, %v5074
        %v5078 = vmul.f32 %v4943, %v5074
        %v5079 = vmul.f32 %v4944, %v5074
        %v5080 = vmul.f32 %v4945, %v5074
        %v5081 = vmul.f32 %v4946, %v5074
        %v5082 = vmul.f32 %v4947, %v5074
        %v5083 = vmul.f32 %v4948, %v5074
        %v5084 = vmul.f32 %v4949, %v5074
        %v5085 = vmul.f32 %v4950, %v5074
        %v5086 = vmul.f32 %v4951, %v5074
        %v5087 = vmul.f32 %v4952, %v5074
        %v5088 = vmul.f32 %v4953, %v5074
        %v5089 = vmul.f32 %v4954, %v5074
        %v5090 = vmul.f32 %v4955, %v5074
        %v5091 = vmul.f32 %v4956, %v5074
        %v5092 = vmul.f32 %v4957, %v5074
        %v5093 = vmul.f32 %v4958, %v5074
        %v5094 = vmul.f32 %v4959, %v5074
        %v5095 = vmul.f32 %v4960, %v5074
        %v5096 = vmul.f32 %v4961, %v5074
        %v5097 = vmul.f32 %v4962, %v5074
        %v5098 = vmul.f32 %v4963, %v5074
        %v5099 = vmul.f32 %v4964, %v5074
        %v5100 = vmul.f32 %v4965, %v5074
        %v5101 = vmul.f32 %v4966, %v5074
        %v5102 = vmul.f32 %v4967, %v5074
        %v5103 = vmul.f32 %v4968, %v5074
        %v5104 = vmul.f32 %v4969, %v5074
        %v5105 = vmul.f32 %v4970, %v5074
        %v5106 = vmul.f32 %v4971, %v5074
        %v5107 = vmul.f32 %v4972, %v5074
        %v5108 = vmul.f32 %v4973, %v5074
        %v5109 = vmul.f32 %v4974, %v5074
        %v5110 = vmul.f32 %v4975, %v5074
        %v5111 = vmul.f32 %v4976, %v5074
        %v5112 = vmul.f32 %v4977, %v5074
        %v5113 = vmul.f32 %v4978, %v5074
        %v5114 = vmul.f32 %v4979, %v5074
        %v5115 = vmul.f32 %v4980, %v5074
        %v5116 = vmul.f32 %v4981, %v5074
        %v5117 = vmul.f32 %v4982, %v5074
        %v5118 = vmul.f32 %v4983, %v5074
        %v5119 = vmul.f32 %v4984, %v5074
        %v5120 = vmul.f32 %v4985, %v5074
        %v5121 = vmul.f32 %v4986, %v5074
        %v5122 = vmul.f32 %v4987, %v5074
        %v5123 = vmul.f32 %v4988, %v5074
        %v5124 = vmul.f32 %v4989, %v5074
        %v5125 = vmul.f32 %v4990, %v5074
        %v5126 = vmul.f32 %v4991, %v5074
        %v5127 = vmul.f32 %v4992, %v5074
        %v5128 = vmul.f32 %v4993, %v5074
        %v5129 = vmul.f32 %v4994, %v5074
        %v5130 = vmul.f32 %v4995, %v5074
        %v5131 = vmul.f32 %v4996, %v5074
        %v5132 = vmul.f32 %v4997, %v5074
        %v5133 = vmul.f32 %v4998, %v5074
        %v5134 = vmul.f32 %v4999, %v5074
        %v5135 = vmul.f32 %v5000, %v5074
        %v5136 = vmul.f32 %v5001, %v5074
        %v5137 = vmul.f32 %v5002, %v5074
        %v5138 = vmul.f32 %v5003, %v5074
        %v5139 = vmul.f32 %v5004, %v5074
        %v5140 = vmul.f32 %v5005, %v5074
        %v5141 = vmul.f32 %v5006, %v5074
        %v5142 = vmul.f32 %v5007, %v5074
        %v5143 = vmul.f32 %v5008, %v5074
        %v5144 = vmul.f32 %v5009, %v5074
        %v5145 = vmul.f32 %v5010, %v5074
        %v5146 = vmul.f32 %v5011, %v5074
        %v5147 = vmul.f32 %v5012, %v5074
        %v5148 = vmul.f32 %v5013, %v5074
        %v5149 = vmul.f32 %v5014, %v5074
        %v5150 = vmul.f32 %v5015, %v5074
        %v5151 = vmul.f32 %v5016, %v5074
        %v5152 = vmul.f32 %v5017, %v5074
        %v5153 = vmul.f32 %v5018, %v5074
        %v5154 = vmul.f32 %v5019, %v5074
        %v5155 = vmul.f32 %v5020, %v5074
        %v5156 = vmul.f32 %v5021, %v5074
        %v5157 = vmul.f32 %v5022, %v5074
        %v5158 = vmul.f32 %v5023, %v5074
        %v5159 = vmul.f32 %v5024, %v5074
        %v5160 = vmul.f32 %v5025, %v5074
        %v5161 = vmul.f32 %v5026, %v5074
        %v5162 = vmul.f32 %v5027, %v5074
        %v5163 = vmul.f32 %v5028, %v5074
        %v5164 = vmul.f32 %v5029, %v5074
        %v5165 = vmul.f32 %v5030, %v5074
        %v5166 = vmul.f32 %v5031, %v5074
        %v5167 = vmul.f32 %v5032, %v5074
        %v5168 = vmul.f32 %v5033, %v5074
        %v5169 = vmul.f32 %v5034, %v5074
        %v5170 = vmul.f32 %v5035, %v5074
        %v5171 = vmul.f32 %v5036, %v5074
        %v5172 = vmul.f32 %v5037, %v5074
        %v5173 = vmul.f32 %v5038, %v5074
        %v5174 = vmul.f32 %v5039, %v5074
        %v5175 = vmul.f32 %v5040, %v5074
        %v5176 = vmul.f32 %v5041, %v5074
        %v5177 = vmul.f32 %v5042, %v5074
        %v5178 = vmul.f32 %v5043, %v5074
        %v5179 = vmul.f32 %v5044, %v5074
        %v5180 = vmul.f32 %v5045, %v5074
        %v5181 = vmul.f32 %v5046, %v5074
        %v5182 = vmul.f32 %v5047, %v5074
        %v5183 = vmul.f32 %v5048, %v5074
        %v5184 = vmul.f32 %v5049, %v5074
        %v5185 = vmul.f32 %v5050, %v5074
        %v5186 = vmul.f32 %v5051, %v5074
        %v5187 = vmul.f32 %v5052, %v5074
        %v5188 = vmul.f32 %v5053, %v5074
        %v5189 = vmul.f32 %v5054, %v5074
        %v5190 = vmul.f32 %v5055, %v5074
        %v5191 = vmul.f32 %v5056, %v5074
        %v5192 = vmul.f32 %v5057, %v5074
        %v5193 = vmul.f32 %v5058, %v5074
        %v5194 = vmul.f32 %v5059, %v5074
        %v5195 = vmul.f32 %v5060, %v5074
        %v5196 = vmul.f32 %v5061, %v5074
        %v5197 = vmul.f32 %v5062, %v5074
        %v5198 = vmul.f32 %v5063, %v5074
        %v5199 = vmul.f32 %v5064, %v5074
        %v5200 = vmul.f32 %v5065, %v5074
        %v5201 = vmul.f32 %v5066, %v5074
        %v5202 = vmul.f32 %v5067, %v5074
        %v5203 = vmul.f32 %v5068, %v5074
        %v5204 = vld [vmem:[%s298] sm:$0x1]
        %v5206 = vlaneseq
        %v5207 = vshrl.u32 %v5206, 7
        %v5208 = vsub.s32 0, %v5207
        %v5209 = vrot.slane %v5204, %v5208
        %v5211 = vadd.f32 %v5076, %v5209
        %v5212 = vadd.f32 %v5077, %v5209
        %v5213 = vadd.f32 %v5078, %v5209
        %v5214 = vadd.f32 %v5079, %v5209
        %v5215 = vadd.f32 %v5080, %v5209
        %v5216 = vadd.f32 %v5081, %v5209
        %v5217 = vadd.f32 %v5082, %v5209
        %v5218 = vadd.f32 %v5083, %v5209
        %v5219 = vadd.f32 %v5084, %v5209
        %v5220 = vadd.f32 %v5085, %v5209
        %v5221 = vadd.f32 %v5086, %v5209
        %v5222 = vadd.f32 %v5087, %v5209
        %v5223 = vadd.f32 %v5088, %v5209
        %v5224 = vadd.f32 %v5089, %v5209
        %v5225 = vadd.f32 %v5090, %v5209
        %v5226 = vadd.f32 %v5091, %v5209
        %v5227 = vadd.f32 %v5092, %v5209
        %v5228 = vadd.f32 %v5093, %v5209
        %v5229 = vadd.f32 %v5094, %v5209
        %v5230 = vadd.f32 %v5095, %v5209
        %v5231 = vadd.f32 %v5096, %v5209
        %v5232 = vadd.f32 %v5097, %v5209
        %v5233 = vadd.f32 %v5098, %v5209
        %v5234 = vadd.f32 %v5099, %v5209
        %v5235 = vadd.f32 %v5100, %v5209
        %v5236 = vadd.f32 %v5101, %v5209
        %v5237 = vadd.f32 %v5102, %v5209
        %v5238 = vadd.f32 %v5103, %v5209
        %v5239 = vadd.f32 %v5104, %v5209
        %v5240 = vadd.f32 %v5105, %v5209
        %v5241 = vadd.f32 %v5106, %v5209
        %v5242 = vadd.f32 %v5107, %v5209
        %v5243 = vadd.f32 %v5108, %v5209
        %v5244 = vadd.f32 %v5109, %v5209
        %v5245 = vadd.f32 %v5110, %v5209
        %v5246 = vadd.f32 %v5111, %v5209
        %v5247 = vadd.f32 %v5112, %v5209
        %v5248 = vadd.f32 %v5113, %v5209
        %v5249 = vadd.f32 %v5114, %v5209
        %v5250 = vadd.f32 %v5115, %v5209
        %v5251 = vadd.f32 %v5116, %v5209
        %v5252 = vadd.f32 %v5117, %v5209
        %v5253 = vadd.f32 %v5118, %v5209
        %v5254 = vadd.f32 %v5119, %v5209
        %v5255 = vadd.f32 %v5120, %v5209
        %v5256 = vadd.f32 %v5121, %v5209
        %v5257 = vadd.f32 %v5122, %v5209
        %v5258 = vadd.f32 %v5123, %v5209
        %v5259 = vadd.f32 %v5124, %v5209
        %v5260 = vadd.f32 %v5125, %v5209
        %v5261 = vadd.f32 %v5126, %v5209
        %v5262 = vadd.f32 %v5127, %v5209
        %v5263 = vadd.f32 %v5128, %v5209
        %v5264 = vadd.f32 %v5129, %v5209
        %v5265 = vadd.f32 %v5130, %v5209
        %v5266 = vadd.f32 %v5131, %v5209
        %v5267 = vadd.f32 %v5132, %v5209
        %v5268 = vadd.f32 %v5133, %v5209
        %v5269 = vadd.f32 %v5134, %v5209
        %v5270 = vadd.f32 %v5135, %v5209
        %v5271 = vadd.f32 %v5136, %v5209
        %v5272 = vadd.f32 %v5137, %v5209
        %v5273 = vadd.f32 %v5138, %v5209
        %v5274 = vadd.f32 %v5139, %v5209
        %v5275 = vadd.f32 %v5140, %v5209
        %v5276 = vadd.f32 %v5141, %v5209
        %v5277 = vadd.f32 %v5142, %v5209
        %v5278 = vadd.f32 %v5143, %v5209
        %v5279 = vadd.f32 %v5144, %v5209
        %v5280 = vadd.f32 %v5145, %v5209
        %v5281 = vadd.f32 %v5146, %v5209
        %v5282 = vadd.f32 %v5147, %v5209
        %v5283 = vadd.f32 %v5148, %v5209
        %v5284 = vadd.f32 %v5149, %v5209
        %v5285 = vadd.f32 %v5150, %v5209
        %v5286 = vadd.f32 %v5151, %v5209
        %v5287 = vadd.f32 %v5152, %v5209
        %v5288 = vadd.f32 %v5153, %v5209
        %v5289 = vadd.f32 %v5154, %v5209
        %v5290 = vadd.f32 %v5155, %v5209
        %v5291 = vadd.f32 %v5156, %v5209
        %v5292 = vadd.f32 %v5157, %v5209
        %v5293 = vadd.f32 %v5158, %v5209
        %v5294 = vadd.f32 %v5159, %v5209
        %v5295 = vadd.f32 %v5160, %v5209
        %v5296 = vadd.f32 %v5161, %v5209
        %v5297 = vadd.f32 %v5162, %v5209
        %v5298 = vadd.f32 %v5163, %v5209
        %v5299 = vadd.f32 %v5164, %v5209
        %v5300 = vadd.f32 %v5165, %v5209
        %v5301 = vadd.f32 %v5166, %v5209
        %v5302 = vadd.f32 %v5167, %v5209
        %v5303 = vadd.f32 %v5168, %v5209
        %v5304 = vadd.f32 %v5169, %v5209
        %v5305 = vadd.f32 %v5170, %v5209
        %v5306 = vadd.f32 %v5171, %v5209
        %v5307 = vadd.f32 %v5172, %v5209
        %v5308 = vadd.f32 %v5173, %v5209
        %v5309 = vadd.f32 %v5174, %v5209
        %v5310 = vadd.f32 %v5175, %v5209
        %v5311 = vadd.f32 %v5176, %v5209
        %v5312 = vadd.f32 %v5177, %v5209
        %v5313 = vadd.f32 %v5178, %v5209
        %v5314 = vadd.f32 %v5179, %v5209
        %v5315 = vadd.f32 %v5180, %v5209
        %v5316 = vadd.f32 %v5181, %v5209
        %v5317 = vadd.f32 %v5182, %v5209
        %v5318 = vadd.f32 %v5183, %v5209
        %v5319 = vadd.f32 %v5184, %v5209
        %v5320 = vadd.f32 %v5185, %v5209
        %v5321 = vadd.f32 %v5186, %v5209
        %v5322 = vadd.f32 %v5187, %v5209
        %v5323 = vadd.f32 %v5188, %v5209
        %v5324 = vadd.f32 %v5189, %v5209
        %v5325 = vadd.f32 %v5190, %v5209
        %v5326 = vadd.f32 %v5191, %v5209
        %v5327 = vadd.f32 %v5192, %v5209
        %v5328 = vadd.f32 %v5193, %v5209
        %v5329 = vadd.f32 %v5194, %v5209
        %v5330 = vadd.f32 %v5195, %v5209
        %v5331 = vadd.f32 %v5196, %v5209
        %v5332 = vadd.f32 %v5197, %v5209
        %v5333 = vadd.f32 %v5198, %v5209
        %v5334 = vadd.f32 %v5199, %v5209
        %v5335 = vadd.f32 %v5200, %v5209
        %v5336 = vadd.f32 %v5201, %v5209
        %v5337 = vadd.f32 %v5202, %v5209
        %v5338 = vadd.f32 %v5203, %v5209
        %v5339 = vmax.f32 %v5211, 0.0
        %v5340 = vmax.f32 %v5212, 0.0
        %v5341 = vmax.f32 %v5213, 0.0
        %v5342 = vmax.f32 %v5214, 0.0
        %v5343 = vmax.f32 %v5215, 0.0
        %v5344 = vmax.f32 %v5216, 0.0
        %v5345 = vmax.f32 %v5217, 0.0
        %v5346 = vmax.f32 %v5218, 0.0
        %v5347 = vmax.f32 %v5219, 0.0
        %v5348 = vmax.f32 %v5220, 0.0
        %v5349 = vmax.f32 %v5221, 0.0
        %v5350 = vmax.f32 %v5222, 0.0
        %v5351 = vmax.f32 %v5223, 0.0
        %v5352 = vmax.f32 %v5224, 0.0
        %v5353 = vmax.f32 %v5225, 0.0
        %v5354 = vmax.f32 %v5226, 0.0
        %v5355 = vmax.f32 %v5227, 0.0
        %v5356 = vmax.f32 %v5228, 0.0
        %v5357 = vmax.f32 %v5229, 0.0
        %v5358 = vmax.f32 %v5230, 0.0
        %v5359 = vmax.f32 %v5231, 0.0
        %v5360 = vmax.f32 %v5232, 0.0
        %v5361 = vmax.f32 %v5233, 0.0
        %v5362 = vmax.f32 %v5234, 0.0
        %v5363 = vmax.f32 %v5235, 0.0
        %v5364 = vmax.f32 %v5236, 0.0
        %v5365 = vmax.f32 %v5237, 0.0
        %v5366 = vmax.f32 %v5238, 0.0
        %v5367 = vmax.f32 %v5239, 0.0
        %v5368 = vmax.f32 %v5240, 0.0
        %v5369 = vmax.f32 %v5241, 0.0
        %v5370 = vmax.f32 %v5242, 0.0
        %v5371 = vmax.f32 %v5243, 0.0
        %v5372 = vmax.f32 %v5244, 0.0
        %v5373 = vmax.f32 %v5245, 0.0
        %v5374 = vmax.f32 %v5246, 0.0
        %v5375 = vmax.f32 %v5247, 0.0
        %v5376 = vmax.f32 %v5248, 0.0
        %v5377 = vmax.f32 %v5249, 0.0
        %v5378 = vmax.f32 %v5250, 0.0
        %v5379 = vmax.f32 %v5251, 0.0
        %v5380 = vmax.f32 %v5252, 0.0
        %v5381 = vmax.f32 %v5253, 0.0
        %v5382 = vmax.f32 %v5254, 0.0
        %v5383 = vmax.f32 %v5255, 0.0
        %v5384 = vmax.f32 %v5256, 0.0
        %v5385 = vmax.f32 %v5257, 0.0
        %v5386 = vmax.f32 %v5258, 0.0
        %v5387 = vmax.f32 %v5259, 0.0
        %v5388 = vmax.f32 %v5260, 0.0
        %v5389 = vmax.f32 %v5261, 0.0
        %v5390 = vmax.f32 %v5262, 0.0
        %v5391 = vmax.f32 %v5263, 0.0
        %v5392 = vmax.f32 %v5264, 0.0
        %v5393 = vmax.f32 %v5265, 0.0
        %v5394 = vmax.f32 %v5266, 0.0
        %v5395 = vmax.f32 %v5267, 0.0
        %v5396 = vmax.f32 %v5268, 0.0
        %v5397 = vmax.f32 %v5269, 0.0
        %v5398 = vmax.f32 %v5270, 0.0
        %v5399 = vmax.f32 %v5271, 0.0
        %v5400 = vmax.f32 %v5272, 0.0
        %v5401 = vmax.f32 %v5273, 0.0
        %v5402 = vmax.f32 %v5274, 0.0
        %v5403 = vmax.f32 %v5275, 0.0
        %v5404 = vmax.f32 %v5276, 0.0
        %v5405 = vmax.f32 %v5277, 0.0
        %v5406 = vmax.f32 %v5278, 0.0
        %v5407 = vmax.f32 %v5279, 0.0
        %v5408 = vmax.f32 %v5280, 0.0
        %v5409 = vmax.f32 %v5281, 0.0
        %v5410 = vmax.f32 %v5282, 0.0
        %v5411 = vmax.f32 %v5283, 0.0
        %v5412 = vmax.f32 %v5284, 0.0
        %v5413 = vmax.f32 %v5285, 0.0
        %v5414 = vmax.f32 %v5286, 0.0
        %v5415 = vmax.f32 %v5287, 0.0
        %v5416 = vmax.f32 %v5288, 0.0
        %v5417 = vmax.f32 %v5289, 0.0
        %v5418 = vmax.f32 %v5290, 0.0
        %v5419 = vmax.f32 %v5291, 0.0
        %v5420 = vmax.f32 %v5292, 0.0
        %v5421 = vmax.f32 %v5293, 0.0
        %v5422 = vmax.f32 %v5294, 0.0
        %v5423 = vmax.f32 %v5295, 0.0
        %v5424 = vmax.f32 %v5296, 0.0
        %v5425 = vmax.f32 %v5297, 0.0
        %v5426 = vmax.f32 %v5298, 0.0
        %v5427 = vmax.f32 %v5299, 0.0
        %v5428 = vmax.f32 %v5300, 0.0
        %v5429 = vmax.f32 %v5301, 0.0
        %v5430 = vmax.f32 %v5302, 0.0
        %v5431 = vmax.f32 %v5303, 0.0
        %v5432 = vmax.f32 %v5304, 0.0
        %v5433 = vmax.f32 %v5305, 0.0
        %v5434 = vmax.f32 %v5306, 0.0
        %v5435 = vmax.f32 %v5307, 0.0
        %v5436 = vmax.f32 %v5308, 0.0
        %v5437 = vmax.f32 %v5309, 0.0
        %v5438 = vmax.f32 %v5310, 0.0
        %v5439 = vmax.f32 %v5311, 0.0
        %v5440 = vmax.f32 %v5312, 0.0
        %v5441 = vmax.f32 %v5313, 0.0
        %v5442 = vmax.f32 %v5314, 0.0
        %v5443 = vmax.f32 %v5315, 0.0
        %v5444 = vmax.f32 %v5316, 0.0
        %v5445 = vmax.f32 %v5317, 0.0
        %v5446 = vmax.f32 %v5318, 0.0
        %v5447 = vmax.f32 %v5319, 0.0
        %v5448 = vmax.f32 %v5320, 0.0
        %v5449 = vmax.f32 %v5321, 0.0
        %v5450 = vmax.f32 %v5322, 0.0
        %v5451 = vmax.f32 %v5323, 0.0
        %v5452 = vmax.f32 %v5324, 0.0
        %v5453 = vmax.f32 %v5325, 0.0
        %v5454 = vmax.f32 %v5326, 0.0
        %v5455 = vmax.f32 %v5327, 0.0
        %v5456 = vmax.f32 %v5328, 0.0
        %v5457 = vmax.f32 %v5329, 0.0
        %v5458 = vmax.f32 %v5330, 0.0
        %v5459 = vmax.f32 %v5331, 0.0
        %v5460 = vmax.f32 %v5332, 0.0
        %v5461 = vmax.f32 %v5333, 0.0
        %v5462 = vmax.f32 %v5334, 0.0
        %v5463 = vmax.f32 %v5335, 0.0
        %v5464 = vmax.f32 %v5336, 0.0
        %v5465 = vmax.f32 %v5337, 0.0
        %v5466 = vmax.f32 %v5338, 0.0
        %v5467 = vpack.c.bf16 %v5340, %v5339
        %v5468 = vpack.c.bf16 %v5342, %v5341
        %v5469 = vpack.c.bf16 %v5344, %v5343
        %v5470 = vpack.c.bf16 %v5346, %v5345
        %v5471 = vpack.c.bf16 %v5348, %v5347
        %v5472 = vpack.c.bf16 %v5350, %v5349
        %v5473 = vpack.c.bf16 %v5352, %v5351
        %v5474 = vpack.c.bf16 %v5354, %v5353
        %v5475 = vpack.c.bf16 %v5356, %v5355
        %v5476 = vpack.c.bf16 %v5358, %v5357
        %v5477 = vpack.c.bf16 %v5360, %v5359
        %v5478 = vpack.c.bf16 %v5362, %v5361
        %v5479 = vpack.c.bf16 %v5364, %v5363
        %v5480 = vpack.c.bf16 %v5366, %v5365
        %v5481 = vpack.c.bf16 %v5368, %v5367
        %v5482 = vpack.c.bf16 %v5370, %v5369
        %v5483 = vpack.c.bf16 %v5372, %v5371
        %v5484 = vpack.c.bf16 %v5374, %v5373
        %v5485 = vpack.c.bf16 %v5376, %v5375
        %v5486 = vpack.c.bf16 %v5378, %v5377
        %v5487 = vpack.c.bf16 %v5380, %v5379
        %v5488 = vpack.c.bf16 %v5382, %v5381
        %v5489 = vpack.c.bf16 %v5384, %v5383
        %v5490 = vpack.c.bf16 %v5386, %v5385
        %v5491 = vpack.c.bf16 %v5388, %v5387
        %v5492 = vpack.c.bf16 %v5390, %v5389
        %v5493 = vpack.c.bf16 %v5392, %v5391
        %v5494 = vpack.c.bf16 %v5394, %v5393
        %v5495 = vpack.c.bf16 %v5396, %v5395
        %v5496 = vpack.c.bf16 %v5398, %v5397
        %v5497 = vpack.c.bf16 %v5400, %v5399
        %v5498 = vpack.c.bf16 %v5402, %v5401
        %v5499 = vpack.c.bf16 %v5404, %v5403
        %v5500 = vpack.c.bf16 %v5406, %v5405
        %v5501 = vpack.c.bf16 %v5408, %v5407
        %v5502 = vpack.c.bf16 %v5410, %v5409
        %v5503 = vpack.c.bf16 %v5412, %v5411
        %v5504 = vpack.c.bf16 %v5414, %v5413
        %v5505 = vpack.c.bf16 %v5416, %v5415
        %v5506 = vpack.c.bf16 %v5418, %v5417
        %v5507 = vpack.c.bf16 %v5420, %v5419
        %v5508 = vpack.c.bf16 %v5422, %v5421
        %v5509 = vpack.c.bf16 %v5424, %v5423
        %v5510 = vpack.c.bf16 %v5426, %v5425
        %v5511 = vpack.c.bf16 %v5428, %v5427
        %v5512 = vpack.c.bf16 %v5430, %v5429
        %v5513 = vpack.c.bf16 %v5432, %v5431
        %v5514 = vpack.c.bf16 %v5434, %v5433
        %v5515 = vpack.c.bf16 %v5436, %v5435
        %v5516 = vpack.c.bf16 %v5438, %v5437
        %v5517 = vpack.c.bf16 %v5440, %v5439
        %v5518 = vpack.c.bf16 %v5442, %v5441
        %v5519 = vpack.c.bf16 %v5444, %v5443
        %v5520 = vpack.c.bf16 %v5446, %v5445
        %v5521 = vpack.c.bf16 %v5448, %v5447
        %v5522 = vpack.c.bf16 %v5450, %v5449
        %v5523 = vpack.c.bf16 %v5452, %v5451
        %v5524 = vpack.c.bf16 %v5454, %v5453
        %v5525 = vpack.c.bf16 %v5456, %v5455
        %v5526 = vpack.c.bf16 %v5458, %v5457
        %v5527 = vpack.c.bf16 %v5460, %v5459
        %v5528 = vpack.c.bf16 %v5462, %v5461
        %v5529 = vpack.c.bf16 %v5464, %v5463
        %v5530 = vpack.c.bf16 %v5466, %v5465
        %v5595 = vunpack.c.l.b16 %v5467
        %v5596 = vunpack.c.h.b16 %v5467
        %v5597 = vunpack.c.l.b16 %v5468
        %v5598 = vunpack.c.h.b16 %v5468
        %v5599 = vunpack.c.l.b16 %v5469
        %v5600 = vunpack.c.h.b16 %v5469
        %v5601 = vunpack.c.l.b16 %v5470
        %v5602 = vunpack.c.h.b16 %v5470
        %v5603 = vunpack.c.l.b16 %v5471
        %v5604 = vunpack.c.h.b16 %v5471
        %v5605 = vunpack.c.l.b16 %v5472
        %v5606 = vunpack.c.h.b16 %v5472
        %v5607 = vunpack.c.l.b16 %v5473
        %v5608 = vunpack.c.h.b16 %v5473
        %v5609 = vunpack.c.l.b16 %v5474
        %v5610 = vunpack.c.h.b16 %v5474
        %v5611 = vunpack.c.l.b16 %v5475
        %v5612 = vunpack.c.h.b16 %v5475
        %v5613 = vunpack.c.l.b16 %v5476
        %v5614 = vunpack.c.h.b16 %v5476
        %v5615 = vunpack.c.l.b16 %v5477
        %v5616 = vunpack.c.h.b16 %v5477
        %v5617 = vunpack.c.l.b16 %v5478
        %v5618 = vunpack.c.h.b16 %v5478
        %v5619 = vunpack.c.l.b16 %v5479
        %v5620 = vunpack.c.h.b16 %v5479
        %v5621 = vunpack.c.l.b16 %v5480
        %v5622 = vunpack.c.h.b16 %v5480
        %v5623 = vunpack.c.l.b16 %v5481
        %v5624 = vunpack.c.h.b16 %v5481
        %v5625 = vunpack.c.l.b16 %v5482
        %v5626 = vunpack.c.h.b16 %v5482
        %v5627 = vunpack.c.l.b16 %v5483
        %v5628 = vunpack.c.h.b16 %v5483
        %v5629 = vunpack.c.l.b16 %v5484
        %v5630 = vunpack.c.h.b16 %v5484
        %v5631 = vunpack.c.l.b16 %v5485
        %v5632 = vunpack.c.h.b16 %v5485
        %v5633 = vunpack.c.l.b16 %v5486
        %v5634 = vunpack.c.h.b16 %v5486
        %v5635 = vunpack.c.l.b16 %v5487
        %v5636 = vunpack.c.h.b16 %v5487
        %v5637 = vunpack.c.l.b16 %v5488
        %v5638 = vunpack.c.h.b16 %v5488
        %v5639 = vunpack.c.l.b16 %v5489
        %v5640 = vunpack.c.h.b16 %v5489
        %v5641 = vunpack.c.l.b16 %v5490
        %v5642 = vunpack.c.h.b16 %v5490
        %v5643 = vunpack.c.l.b16 %v5491
        %v5644 = vunpack.c.h.b16 %v5491
        %v5645 = vunpack.c.l.b16 %v5492
        %v5646 = vunpack.c.h.b16 %v5492
        %v5647 = vunpack.c.l.b16 %v5493
        %v5648 = vunpack.c.h.b16 %v5493
        %v5649 = vunpack.c.l.b16 %v5494
        %v5650 = vunpack.c.h.b16 %v5494
        %v5651 = vunpack.c.l.b16 %v5495
        %v5652 = vunpack.c.h.b16 %v5495
        %v5653 = vunpack.c.l.b16 %v5496
        %v5654 = vunpack.c.h.b16 %v5496
        %v5655 = vunpack.c.l.b16 %v5497
        %v5656 = vunpack.c.h.b16 %v5497
        %v5657 = vunpack.c.l.b16 %v5498
        %v5658 = vunpack.c.h.b16 %v5498
        %v5659 = vunpack.c.l.b16 %v5499
        %v5660 = vunpack.c.h.b16 %v5499
        %v5661 = vunpack.c.l.b16 %v5500
        %v5662 = vunpack.c.h.b16 %v5500
        %v5663 = vunpack.c.l.b16 %v5501
        %v5664 = vunpack.c.h.b16 %v5501
        %v5665 = vunpack.c.l.b16 %v5502
        %v5666 = vunpack.c.h.b16 %v5502
        %v5667 = vunpack.c.l.b16 %v5503
        %v5668 = vunpack.c.h.b16 %v5503
        %v5669 = vunpack.c.l.b16 %v5504
        %v5670 = vunpack.c.h.b16 %v5504
        %v5671 = vunpack.c.l.b16 %v5505
        %v5672 = vunpack.c.h.b16 %v5505
        %v5673 = vunpack.c.l.b16 %v5506
        %v5674 = vunpack.c.h.b16 %v5506
        %v5675 = vunpack.c.l.b16 %v5507
        %v5676 = vunpack.c.h.b16 %v5507
        %v5677 = vunpack.c.l.b16 %v5508
        %v5678 = vunpack.c.h.b16 %v5508
        %v5679 = vunpack.c.l.b16 %v5509
        %v5680 = vunpack.c.h.b16 %v5509
        %v5681 = vunpack.c.l.b16 %v5510
        %v5682 = vunpack.c.h.b16 %v5510
        %v5683 = vunpack.c.l.b16 %v5511
        %v5684 = vunpack.c.h.b16 %v5511
        %v5685 = vunpack.c.l.b16 %v5512
        %v5686 = vunpack.c.h.b16 %v5512
        %v5687 = vunpack.c.l.b16 %v5513
        %v5688 = vunpack.c.h.b16 %v5513
        %v5689 = vunpack.c.l.b16 %v5514
        %v5690 = vunpack.c.h.b16 %v5514
        %v5691 = vunpack.c.l.b16 %v5515
        %v5692 = vunpack.c.h.b16 %v5515
        %v5693 = vunpack.c.l.b16 %v5516
        %v5694 = vunpack.c.h.b16 %v5516
        %v5695 = vunpack.c.l.b16 %v5517
        %v5696 = vunpack.c.h.b16 %v5517
        %v5697 = vunpack.c.l.b16 %v5518
        %v5698 = vunpack.c.h.b16 %v5518
        %v5699 = vunpack.c.l.b16 %v5519
        %v5700 = vunpack.c.h.b16 %v5519
        %v5701 = vunpack.c.l.b16 %v5520
        %v5702 = vunpack.c.h.b16 %v5520
        %v5703 = vunpack.c.l.b16 %v5521
        %v5704 = vunpack.c.h.b16 %v5521
        %v5705 = vunpack.c.l.b16 %v5522
        %v5706 = vunpack.c.h.b16 %v5522
        %v5707 = vunpack.c.l.b16 %v5523
        %v5708 = vunpack.c.h.b16 %v5523
        %v5709 = vunpack.c.l.b16 %v5524
        %v5710 = vunpack.c.h.b16 %v5524
        %v5711 = vunpack.c.l.b16 %v5525
        %v5712 = vunpack.c.h.b16 %v5525
        %v5713 = vunpack.c.l.b16 %v5526
        %v5714 = vunpack.c.h.b16 %v5526
        %v5715 = vunpack.c.l.b16 %v5527
        %v5716 = vunpack.c.h.b16 %v5527
        %v5717 = vunpack.c.l.b16 %v5528
        %v5718 = vunpack.c.h.b16 %v5528
        %v5719 = vunpack.c.l.b16 %v5529
        %v5720 = vunpack.c.h.b16 %v5529
        %v5721 = vunpack.c.l.b16 %v5530
        %v5722 = vunpack.c.h.b16 %v5530
        %v5723 = vpack.c.b16 %v5595, %v5595
        %v5724 = vpack.c.b16 %v5596, %v5596
        %v5725 = vpack.c.b16 %v5597, %v5597
        %v5726 = vpack.c.b16 %v5598, %v5598
        %v5727 = vpack.c.b16 %v5599, %v5599
        %v5728 = vpack.c.b16 %v5600, %v5600
        %v5729 = vpack.c.b16 %v5601, %v5601
        %v5730 = vpack.c.b16 %v5602, %v5602
        %v5731 = vpack.c.b16 %v5603, %v5603
        %v5732 = vpack.c.b16 %v5604, %v5604
        %v5733 = vpack.c.b16 %v5605, %v5605
        %v5734 = vpack.c.b16 %v5606, %v5606
        %v5735 = vpack.c.b16 %v5607, %v5607
        %v5736 = vpack.c.b16 %v5608, %v5608
        %v5737 = vpack.c.b16 %v5609, %v5609
        %v5738 = vpack.c.b16 %v5610, %v5610
        %v5739 = vpack.c.b16 %v5611, %v5611
        %v5740 = vpack.c.b16 %v5612, %v5612
        %v5741 = vpack.c.b16 %v5613, %v5613
        %v5742 = vpack.c.b16 %v5614, %v5614
        %v5743 = vpack.c.b16 %v5615, %v5615
        %v5744 = vpack.c.b16 %v5616, %v5616
        %v5745 = vpack.c.b16 %v5617, %v5617
        %v5746 = vpack.c.b16 %v5618, %v5618
        %v5747 = vpack.c.b16 %v5619, %v5619
        %v5748 = vpack.c.b16 %v5620, %v5620
        %v5749 = vpack.c.b16 %v5621, %v5621
        %v5750 = vpack.c.b16 %v5622, %v5622
        %v5751 = vpack.c.b16 %v5623, %v5623
        %v5752 = vpack.c.b16 %v5624, %v5624
        %v5753 = vpack.c.b16 %v5625, %v5625
        %v5754 = vpack.c.b16 %v5626, %v5626
        %v5755 = vpack.c.b16 %v5627, %v5627
        %v5756 = vpack.c.b16 %v5628, %v5628
        %v5757 = vpack.c.b16 %v5629, %v5629
        %v5758 = vpack.c.b16 %v5630, %v5630
        %v5759 = vpack.c.b16 %v5631, %v5631
        %v5760 = vpack.c.b16 %v5632, %v5632
        %v5761 = vpack.c.b16 %v5633, %v5633
        %v5762 = vpack.c.b16 %v5634, %v5634
        %v5763 = vpack.c.b16 %v5635, %v5635
        %v5764 = vpack.c.b16 %v5636, %v5636
        %v5765 = vpack.c.b16 %v5637, %v5637
        %v5766 = vpack.c.b16 %v5638, %v5638
        %v5767 = vpack.c.b16 %v5639, %v5639
        %v5768 = vpack.c.b16 %v5640, %v5640
        %v5769 = vpack.c.b16 %v5641, %v5641
        %v5770 = vpack.c.b16 %v5642, %v5642
        %v5771 = vpack.c.b16 %v5643, %v5643
        %v5772 = vpack.c.b16 %v5644, %v5644
        %v5773 = vpack.c.b16 %v5645, %v5645
        %v5774 = vpack.c.b16 %v5646, %v5646
        %v5775 = vpack.c.b16 %v5647, %v5647
        %v5776 = vpack.c.b16 %v5648, %v5648
        %v5777 = vpack.c.b16 %v5649, %v5649
        %v5778 = vpack.c.b16 %v5650, %v5650
        %v5779 = vpack.c.b16 %v5651, %v5651
        %v5780 = vpack.c.b16 %v5652, %v5652
        %v5781 = vpack.c.b16 %v5653, %v5653
        %v5782 = vpack.c.b16 %v5654, %v5654
        %v5783 = vpack.c.b16 %v5655, %v5655
        %v5784 = vpack.c.b16 %v5656, %v5656
        %v5785 = vpack.c.b16 %v5657, %v5657
        %v5786 = vpack.c.b16 %v5658, %v5658
        %v5787 = vpack.c.b16 %v5659, %v5659
        %v5788 = vpack.c.b16 %v5660, %v5660
        %v5789 = vpack.c.b16 %v5661, %v5661
        %v5790 = vpack.c.b16 %v5662, %v5662
        %v5791 = vpack.c.b16 %v5663, %v5663
        %v5792 = vpack.c.b16 %v5664, %v5664
        %v5793 = vpack.c.b16 %v5665, %v5665
        %v5794 = vpack.c.b16 %v5666, %v5666
        %v5795 = vpack.c.b16 %v5667, %v5667
        %v5796 = vpack.c.b16 %v5668, %v5668
        %v5797 = vpack.c.b16 %v5669, %v5669
        %v5798 = vpack.c.b16 %v5670, %v5670
        %v5799 = vpack.c.b16 %v5671, %v5671
        %v5800 = vpack.c.b16 %v5672, %v5672
        %v5801 = vpack.c.b16 %v5673, %v5673
        %v5802 = vpack.c.b16 %v5674, %v5674
        %v5803 = vpack.c.b16 %v5675, %v5675
        %v5804 = vpack.c.b16 %v5676, %v5676
        %v5805 = vpack.c.b16 %v5677, %v5677
        %v5806 = vpack.c.b16 %v5678, %v5678
        %v5807 = vpack.c.b16 %v5679, %v5679
        %v5808 = vpack.c.b16 %v5680, %v5680
        %v5809 = vpack.c.b16 %v5681, %v5681
        %v5810 = vpack.c.b16 %v5682, %v5682
        %v5811 = vpack.c.b16 %v5683, %v5683
        %v5812 = vpack.c.b16 %v5684, %v5684
        %v5813 = vpack.c.b16 %v5685, %v5685
        %v5814 = vpack.c.b16 %v5686, %v5686
        %v5815 = vpack.c.b16 %v5687, %v5687
        %v5816 = vpack.c.b16 %v5688, %v5688
        %v5817 = vpack.c.b16 %v5689, %v5689
        %v5818 = vpack.c.b16 %v5690, %v5690
        %v5819 = vpack.c.b16 %v5691, %v5691
        %v5820 = vpack.c.b16 %v5692, %v5692
        %v5821 = vpack.c.b16 %v5693, %v5693
        %v5822 = vpack.c.b16 %v5694, %v5694
        %v5823 = vpack.c.b16 %v5695, %v5695
        %v5824 = vpack.c.b16 %v5696, %v5696
        %v5825 = vpack.c.b16 %v5697, %v5697
        %v5826 = vpack.c.b16 %v5698, %v5698
        %v5827 = vpack.c.b16 %v5699, %v5699
        %v5828 = vpack.c.b16 %v5700, %v5700
        %v5829 = vpack.c.b16 %v5701, %v5701
        %v5830 = vpack.c.b16 %v5702, %v5702
        %v5831 = vpack.c.b16 %v5703, %v5703
        %v5832 = vpack.c.b16 %v5704, %v5704
        %v5833 = vpack.c.b16 %v5705, %v5705
        %v5834 = vpack.c.b16 %v5706, %v5706
        %v5835 = vpack.c.b16 %v5707, %v5707
        %v5836 = vpack.c.b16 %v5708, %v5708
        %v5837 = vpack.c.b16 %v5709, %v5709
        %v5838 = vpack.c.b16 %v5710, %v5710
        %v5839 = vpack.c.b16 %v5711, %v5711
        %v5840 = vpack.c.b16 %v5712, %v5712
        %v5841 = vpack.c.b16 %v5713, %v5713
        %v5842 = vpack.c.b16 %v5714, %v5714
        %v5843 = vpack.c.b16 %v5715, %v5715
        %v5844 = vpack.c.b16 %v5716, %v5716
        %v5845 = vpack.c.b16 %v5717, %v5717
        %v5846 = vpack.c.b16 %v5718, %v5718
        %v5847 = vpack.c.b16 %v5719, %v5719
        %v5848 = vpack.c.b16 %v5720, %v5720
        %v5849 = vpack.c.b16 %v5721, %v5721
        %v5850 = vpack.c.b16 %v5722, %v5722
        %vm5979 = vcmask 519168
        %5980 = vst.msk [vmem:[%s306] sm:$0xf] %vm5979, %v5723
        %5981 = vst.msk [vmem:[%s306 + $0x4] sm:$0xf] %vm5979, %v5724
        %5982 = vst.msk [vmem:[%s306 + $0x8] sm:$0xf] %vm5979, %v5725
        %5983 = vst.msk [vmem:[%s306 + $0xc] sm:$0xf] %vm5979, %v5726
        %5984 = vst.msk [vmem:[%s306 + $0x10] sm:$0xf] %vm5979, %v5727
        %5985 = vst.msk [vmem:[%s306 + $0x14] sm:$0xf] %vm5979, %v5728
        %5986 = vst.msk [vmem:[%s306 + $0x18] sm:$0xf] %vm5979, %v5729
        %5987 = vst.msk [vmem:[%s306 + $0x1c] sm:$0xf] %vm5979, %v5730
        %5988 = vst.msk [vmem:[%s306 + $0x20] sm:$0xf] %vm5979, %v5731
        %5989 = vst.msk [vmem:[%s306 + $0x24] sm:$0xf] %vm5979, %v5732
        %5990 = vst.msk [vmem:[%s306 + $0x28] sm:$0xf] %vm5979, %v5733
        %5991 = vst.msk [vmem:[%s306 + $0x2c] sm:$0xf] %vm5979, %v5734
        %5992 = vst.msk [vmem:[%s306 + $0x30] sm:$0xf] %vm5979, %v5735
        %5993 = vst.msk [vmem:[%s306 + $0x34] sm:$0xf] %vm5979, %v5736
        %5994 = vst.msk [vmem:[%s306 + $0x38] sm:$0xf] %vm5979, %v5737
        %5995 = vst.msk [vmem:[%s306 + $0x3c] sm:$0xf] %vm5979, %v5738
        %5996 = vst.msk [vmem:[%s306 + $0x40] sm:$0xf] %vm5979, %v5739
        %5997 = vst.msk [vmem:[%s306 + $0x44] sm:$0xf] %vm5979, %v5740
        %5998 = vst.msk [vmem:[%s306 + $0x48] sm:$0xf] %vm5979, %v5741
        %5999 = vst.msk [vmem:[%s306 + $0x4c] sm:$0xf] %vm5979, %v5742
        %6000 = vst.msk [vmem:[%s306 + $0x50] sm:$0xf] %vm5979, %v5743
        %6001 = vst.msk [vmem:[%s306 + $0x54] sm:$0xf] %vm5979, %v5744
        %6002 = vst.msk [vmem:[%s306 + $0x58] sm:$0xf] %vm5979, %v5745
        %6003 = vst.msk [vmem:[%s306 + $0x5c] sm:$0xf] %vm5979, %v5746
        %6004 = vst.msk [vmem:[%s306 + $0x60] sm:$0xf] %vm5979, %v5747
        %6005 = vst.msk [vmem:[%s306 + $0x64] sm:$0xf] %vm5979, %v5748
        %6006 = vst.msk [vmem:[%s306 + $0x68] sm:$0xf] %vm5979, %v5749
        %6007 = vst.msk [vmem:[%s306 + $0x6c] sm:$0xf] %vm5979, %v5750
        %6008 = vst.msk [vmem:[%s306 + $0x70] sm:$0xf] %vm5979, %v5751
        %6009 = vst.msk [vmem:[%s306 + $0x74] sm:$0xf] %vm5979, %v5752
        %6010 = vst.msk [vmem:[%s306 + $0x78] sm:$0xf] %vm5979, %v5753
        %6011 = vst.msk [vmem:[%s306 + $0x7c] sm:$0xf] %vm5979, %v5754
        %6012 = vst.msk [vmem:[%s306 + $0x80] sm:$0xf] %vm5979, %v5755
        %6013 = vst.msk [vmem:[%s306 + $0x84] sm:$0xf] %vm5979, %v5756
        %6014 = vst.msk [vmem:[%s306 + $0x88] sm:$0xf] %vm5979, %v5757
        %6015 = vst.msk [vmem:[%s306 + $0x8c] sm:$0xf] %vm5979, %v5758
        %6016 = vst.msk [vmem:[%s306 + $0x90] sm:$0xf] %vm5979, %v5759
        %6017 = vst.msk [vmem:[%s306 + $0x94] sm:$0xf] %vm5979, %v5760
        %6018 = vst.msk [vmem:[%s306 + $0x98] sm:$0xf] %vm5979, %v5761
        %6019 = vst.msk [vmem:[%s306 + $0x9c] sm:$0xf] %vm5979, %v5762
        %6020 = vst.msk [vmem:[%s306 + $0xa0] sm:$0xf] %vm5979, %v5763
        %6021 = vst.msk [vmem:[%s306 + $0xa4] sm:$0xf] %vm5979, %v5764
        %6022 = vst.msk [vmem:[%s306 + $0xa8] sm:$0xf] %vm5979, %v5765
        %6023 = vst.msk [vmem:[%s306 + $0xac] sm:$0xf] %vm5979, %v5766
        %6024 = vst.msk [vmem:[%s306 + $0xb0] sm:$0xf] %vm5979, %v5767
        %6025 = vst.msk [vmem:[%s306 + $0xb4] sm:$0xf] %vm5979, %v5768
        %6026 = vst.msk [vmem:[%s306 + $0xb8] sm:$0xf] %vm5979, %v5769
        %6027 = vst.msk [vmem:[%s306 + $0xbc] sm:$0xf] %vm5979, %v5770
        %6028 = vst.msk [vmem:[%s306 + $0xc0] sm:$0xf] %vm5979, %v5771
        %6029 = vst.msk [vmem:[%s306 + $0xc4] sm:$0xf] %vm5979, %v5772
        %6030 = vst.msk [vmem:[%s306 + $0xc8] sm:$0xf] %vm5979, %v5773
        %6031 = vst.msk [vmem:[%s306 + $0xcc] sm:$0xf] %vm5979, %v5774
        %6032 = vst.msk [vmem:[%s306 + $0xd0] sm:$0xf] %vm5979, %v5775
        %6033 = vst.msk [vmem:[%s306 + $0xd4] sm:$0xf] %vm5979, %v5776
        %6034 = vst.msk [vmem:[%s306 + $0xd8] sm:$0xf] %vm5979, %v5777
        %6035 = vst.msk [vmem:[%s306 + $0xdc] sm:$0xf] %vm5979, %v5778
        %6036 = vst.msk [vmem:[%s306 + $0xe0] sm:$0xf] %vm5979, %v5779
        %6037 = vst.msk [vmem:[%s306 + $0xe4] sm:$0xf] %vm5979, %v5780
        %6038 = vst.msk [vmem:[%s306 + $0xe8] sm:$0xf] %vm5979, %v5781
        %6039 = vst.msk [vmem:[%s306 + $0xec] sm:$0xf] %vm5979, %v5782
        %6040 = vst.msk [vmem:[%s306 + $0xf0] sm:$0xf] %vm5979, %v5783
        %6041 = vst.msk [vmem:[%s306 + $0xf4] sm:$0xf] %vm5979, %v5784
        %6042 = vst.msk [vmem:[%s306 + $0xf8] sm:$0xf] %vm5979, %v5785
        %6043 = vst.msk [vmem:[%s306 + $0xfc] sm:$0xf] %vm5979, %v5786
        %6044 = vst.msk [vmem:[%s306 + $0x100] sm:$0xf] %vm5979, %v5787
        %6045 = vst.msk [vmem:[%s306 + $0x104] sm:$0xf] %vm5979, %v5788
        %6046 = vst.msk [vmem:[%s306 + $0x108] sm:$0xf] %vm5979, %v5789
        %6047 = vst.msk [vmem:[%s306 + $0x10c] sm:$0xf] %vm5979, %v5790
        %6048 = vst.msk [vmem:[%s306 + $0x110] sm:$0xf] %vm5979, %v5791
        %6049 = vst.msk [vmem:[%s306 + $0x114] sm:$0xf] %vm5979, %v5792
        %6050 = vst.msk [vmem:[%s306 + $0x118] sm:$0xf] %vm5979, %v5793
        %6051 = vst.msk [vmem:[%s306 + $0x11c] sm:$0xf] %vm5979, %v5794
        %6052 = vst.msk [vmem:[%s306 + $0x120] sm:$0xf] %vm5979, %v5795
        %6053 = vst.msk [vmem:[%s306 + $0x124] sm:$0xf] %vm5979, %v5796
        %6054 = vst.msk [vmem:[%s306 + $0x128] sm:$0xf] %vm5979, %v5797
        %6055 = vst.msk [vmem:[%s306 + $0x12c] sm:$0xf] %vm5979, %v5798
        %6056 = vst.msk [vmem:[%s306 + $0x130] sm:$0xf] %vm5979, %v5799
        %6057 = vst.msk [vmem:[%s306 + $0x134] sm:$0xf] %vm5979, %v5800
        %6058 = vst.msk [vmem:[%s306 + $0x138] sm:$0xf] %vm5979, %v5801
        %6059 = vst.msk [vmem:[%s306 + $0x13c] sm:$0xf] %vm5979, %v5802
        %6060 = vst.msk [vmem:[%s306 + $0x140] sm:$0xf] %vm5979, %v5803
        %6061 = vst.msk [vmem:[%s306 + $0x144] sm:$0xf] %vm5979, %v5804
        %6062 = vst.msk [vmem:[%s306 + $0x148] sm:$0xf] %vm5979, %v5805
        %6063 = vst.msk [vmem:[%s306 + $0x14c] sm:$0xf] %vm5979, %v5806
        %6064 = vst.msk [vmem:[%s306 + $0x150] sm:$0xf] %vm5979, %v5807
        %6065 = vst.msk [vmem:[%s306 + $0x154] sm:$0xf] %vm5979, %v5808
        %6066 = vst.msk [vmem:[%s306 + $0x158] sm:$0xf] %vm5979, %v5809
        %6067 = vst.msk [vmem:[%s306 + $0x15c] sm:$0xf] %vm5979, %v5810
        %6068 = vst.msk [vmem:[%s306 + $0x160] sm:$0xf] %vm5979, %v5811
        %6069 = vst.msk [vmem:[%s306 + $0x164] sm:$0xf] %vm5979, %v5812
        %6070 = vst.msk [vmem:[%s306 + $0x168] sm:$0xf] %vm5979, %v5813
        %6071 = vst.msk [vmem:[%s306 + $0x16c] sm:$0xf] %vm5979, %v5814
        %6072 = vst.msk [vmem:[%s306 + $0x170] sm:$0xf] %vm5979, %v5815
        %6073 = vst.msk [vmem:[%s306 + $0x174] sm:$0xf] %vm5979, %v5816
        %6074 = vst.msk [vmem:[%s306 + $0x178] sm:$0xf] %vm5979, %v5817
        %6075 = vst.msk [vmem:[%s306 + $0x17c] sm:$0xf] %vm5979, %v5818
        %6076 = vst.msk [vmem:[%s306 + $0x180] sm:$0xf] %vm5979, %v5819
        %6077 = vst.msk [vmem:[%s306 + $0x184] sm:$0xf] %vm5979, %v5820
        %6078 = vst.msk [vmem:[%s306 + $0x188] sm:$0xf] %vm5979, %v5821
        %6079 = vst.msk [vmem:[%s306 + $0x18c] sm:$0xf] %vm5979, %v5822
        %6080 = vst.msk [vmem:[%s306 + $0x190] sm:$0xf] %vm5979, %v5823
        %6081 = vst.msk [vmem:[%s306 + $0x194] sm:$0xf] %vm5979, %v5824
        %6082 = vst.msk [vmem:[%s306 + $0x198] sm:$0xf] %vm5979, %v5825
        %6083 = vst.msk [vmem:[%s306 + $0x19c] sm:$0xf] %vm5979, %v5826
        %6084 = vst.msk [vmem:[%s306 + $0x1a0] sm:$0xf] %vm5979, %v5827
        %6085 = vst.msk [vmem:[%s306 + $0x1a4] sm:$0xf] %vm5979, %v5828
        %6086 = vst.msk [vmem:[%s306 + $0x1a8] sm:$0xf] %vm5979, %v5829
        %6087 = vst.msk [vmem:[%s306 + $0x1ac] sm:$0xf] %vm5979, %v5830
        %6088 = vst.msk [vmem:[%s306 + $0x1b0] sm:$0xf] %vm5979, %v5831
        %6089 = vst.msk [vmem:[%s306 + $0x1b4] sm:$0xf] %vm5979, %v5832
        %6090 = vst.msk [vmem:[%s306 + $0x1b8] sm:$0xf] %vm5979, %v5833
        %6091 = vst.msk [vmem:[%s306 + $0x1bc] sm:$0xf] %vm5979, %v5834
        %6092 = vst.msk [vmem:[%s306 + $0x1c0] sm:$0xf] %vm5979, %v5835
        %6093 = vst.msk [vmem:[%s306 + $0x1c4] sm:$0xf] %vm5979, %v5836
        %6094 = vst.msk [vmem:[%s306 + $0x1c8] sm:$0xf] %vm5979, %v5837
        %6095 = vst.msk [vmem:[%s306 + $0x1cc] sm:$0xf] %vm5979, %v5838
        %6096 = vst.msk [vmem:[%s306 + $0x1d0] sm:$0xf] %vm5979, %v5839
        %6097 = vst.msk [vmem:[%s306 + $0x1d4] sm:$0xf] %vm5979, %v5840
        %6098 = vst.msk [vmem:[%s306 + $0x1d8] sm:$0xf] %vm5979, %v5841
        %6099 = vst.msk [vmem:[%s306 + $0x1dc] sm:$0xf] %vm5979, %v5842
        %6100 = vst.msk [vmem:[%s306 + $0x1e0] sm:$0xf] %vm5979, %v5843
        %6101 = vst.msk [vmem:[%s306 + $0x1e4] sm:$0xf] %vm5979, %v5844
        %6102 = vst.msk [vmem:[%s306 + $0x1e8] sm:$0xf] %vm5979, %v5845
        %6103 = vst.msk [vmem:[%s306 + $0x1ec] sm:$0xf] %vm5979, %v5846
        %6104 = vst.msk [vmem:[%s306 + $0x1f0] sm:$0xf] %vm5979, %v5847
        %6105 = vst.msk [vmem:[%s306 + $0x1f4] sm:$0xf] %vm5979, %v5848
        %6106 = vst.msk [vmem:[%s306 + $0x1f8] sm:$0xf] %vm5979, %v5849
        %6107 = vst.msk [vmem:[%s306 + $0x1fc] sm:$0xf] %vm5979, %v5850
      $region44: #{tpu_custom_call.1} parent=35 // pred_fallthru
        _
      %s6108 = smul.u32 128, %s20
      %p6109 = scmp.lt.s32.totalorder %s6108, 383
      %s6110 = scalar_select %p6109, %s6108, 383
      %p6111 = scmp.lt.s32.totalorder %s21, 0
      %s6112 = scalar_select %p6111, %s21, 0
      %s6113 = sadd.s32 %s6112, %s6110
      %s6114 = smul.addr %s6113, 4
      %s6115 = scalar_lea.vmem %s4, %s6114
      // Predicated region
      $region45: #{tpu_custom_call.1} parent=35 // pred_check
        %p6116 = pneg %p162
      $region46: #{tpu_custom_call.1} parent=35 // pred_check_branch
        %6118 = sbr.rel (%p6116) target = $region48
      $region47: #{tpu_custom_call.1} parent=35 // pred_region
        %s6119 = smul.u32 128, %s20
      $region48: #{tpu_custom_call.1} parent=35 // pred_fallthru
        _
    $region36: #{tpu_custom_call.1} parent=5 // pred_fallthru
      _
    %p6120 = scmp.le.s32.totalorder 2, %s10
    // Predicated region
    $region49: #{tpu_custom_call.1} parent=5 // pred_check
      %p6121 = pneg %p6120
    $region50: #{tpu_custom_call.1} parent=5 // pred_check_branch
      %6123 = sbr.rel (%p6121) target = $region52
    $region51: #{tpu_custom_call.1} parent=5 // pred_region
      %s6124 = ssub.s32 %s10, 2
      // Predicated region
      $region53: #{tpu_custom_call.1} parent=51 // pred_check
        %p6125 = pneg %p168
      $region54: #{tpu_custom_call.1} parent=51 // pred_check_branch
        %6127 = sbr.rel (%p6125) target = $region56
      $region55: #{tpu_custom_call.1} parent=51 // pred_region
        %s6128 = smul.u32 128, %s23
        %p6129 = scmp.lt.s32.totalorder %s6128, 383
        %s6130 = scalar_select %p6129, %s6128, 383
        %p6131 = scmp.lt.s32.totalorder %s24, 0
        %s6132 = scalar_select %p6131, %s24, 0
        %s6133 = sadd.s32 %s6132, %s6130
        %s6134 = smul.addr %s6133, 4
        %s6135 = scalar_lea.vmem %s4, %s6134
      $region56: #{tpu_custom_call.1} parent=51 // pred_fallthru
        _
    $region52: #{tpu_custom_call.1} parent=5 // pred_fallthru
      _
  $region6: #{tpu_custom_call.1} parent=0 // loop_footer
    %s14 = sadd.s32 1, %s10
  $region7: #{tpu_custom_call.1} parent=0 // loop_footer_branch
    %9 = sbr.rel target = $region3
  $region8: #{tpu_custom_call.1} parent=0 // loop_exit
    _

</llo_original>
